<compile_context>
chip_gen: v7x
topology: tpu7x:2x2x1
jax: 0.10.0
libtpu: 0.0.40
codegen_flags: <defaults>
</compile_context>

<pallas_src>
import functools

import jax
import jax.numpy as jnp
import numpy as np
from jax.experimental import pallas as pl
from jax.experimental.pallas import tpu as pltpu


# ------------------------------------------------------------------ helpers
def _mish(x):
    # mish(x) = x * tanh(softplus(x)); exact algebraic form with ONE exp:
    #   tanh(log(1 + e^x)) = ((1+e^x)^2 - 1) / ((1+e^x)^2 + 1)
    e = jnp.exp(jnp.minimum(x, 20.0))
    n = (1.0 + e) * (1.0 + e)
    return x * (1.0 - 2.0 / (n + 1.0))


def _layernorm(x, gamma, beta, eps=1e-5):
    mean = jnp.mean(x, axis=-1, keepdims=True)
    var = jnp.mean((x - mean) ** 2, axis=-1, keepdims=True)
    return (x - mean) * jax.lax.rsqrt(var + eps) * gamma + beta


def _round_up(v, m):
    return (v + m - 1) // m * m


def _vmem_limit_bytes():
    # 75% of physical VMEM: ~96 MiB on v5e/v6e (128 MiB), ~48 MiB on v7x (64 MiB).
    try:
        cap = pltpu.get_tpu_info().vmem_capacity_bytes
    except Exception:
        cap = 64 * 1024 * 1024
    return int(cap * 3 // 4)


# ------------------------------------------------------------------ kernel A: encoder (Lin1 K-tiled)
def _encoder_kernel(
    x_ref,
    w1_ref, b1_ref, g1_ref, be1_ref,
    w2_ref, b2_ref, g2_ref, be2_ref,
    w3_ref, b3_ref,
    latent_ref, acc_ref,
):
    k = pl.program_id(1)

    @pl.when(k == 0)
    def _zero():
        acc_ref[...] = jnp.zeros_like(acc_ref)

    # Lin1 partial product for this gene K-slice (bf16 operands, f32 accumulate).
    acc_ref[...] += jnp.dot(x_ref[...], w1_ref[...],
                            preferred_element_type=jnp.float32)

    @pl.when(k == pl.num_programs(1) - 1)
    def _finish():
        h = acc_ref[...] + b1_ref[...]
        h = _layernorm(h, g1_ref[...], be1_ref[...])
        h = _mish(h)

        h = jnp.dot(h.astype(jnp.bfloat16), w2_ref[...],
                    preferred_element_type=jnp.float32) + b2_ref[...]
        h = _layernorm(h, g2_ref[...], be2_ref[...])
        h = _mish(h)

        latent = jnp.dot(h.astype(jnp.bfloat16), w3_ref[...],
                         preferred_element_type=jnp.float32) + b3_ref[...]
        latent_ref[...] = latent


# ------------------------------------------------------------------ kernel B: mask predictor (streaming)
def _mask_kernel(latent_ref, wm_ref, bm_ref, mask_ref):
    lat_bf = latent_ref[...].astype(jnp.bfloat16)
    mask_ref[...] = (
        jnp.dot(lat_bf, wm_ref[...], preferred_element_type=jnp.float32)
        + bm_ref[...]
    )


# ------------------------------------------------------------------ kernel C: decoder (mask recomputed in-kernel)
def _decoder_kernel(latent_ref, wm_ref, bm_ref, wdl_ref, wdm_ref, bd_ref,
                    recon_ref, acc_ref):
    k = pl.program_id(2)
    lat_bf = latent_ref[...].astype(jnp.bfloat16)

    @pl.when(k == 0)
    def _seed():
        acc_ref[...] = (
            jnp.dot(lat_bf, wdl_ref[...], preferred_element_type=jnp.float32)
            + bd_ref[...]
        )

    # Recompute this mask K-slice from the VMEM-resident latent instead of
    # reading the mask back from HBM (kills the nj-fold mask re-read).
    m = (jnp.dot(lat_bf, wm_ref[...], preferred_element_type=jnp.float32)
         + bm_ref[...])
    acc_ref[...] += jnp.dot(m.astype(jnp.bfloat16), wdm_ref[...],
                            preferred_element_type=jnp.float32)

    @pl.when(k == pl.num_programs(2) - 1)
    def _write():
        recon_ref[...] = acc_ref[...]


# ------------------------------------------------------------------ wrapper
@functools.partial(jax.jit, static_argnames=("tb", "tg"))
def autoencoder_forward(x, params, *, tb=256, tg=1024):
    """x: (B, num_genes) float32.  params: dict (see init_params).

    tb: batch tile (multiple of 16 for bf16 sublane packing; 256 default so the
        HBM-bound decoder sits at/above the compute-bound threshold).
    tg: gene tile used for the decoder's N (output columns) and K (reduction)
        axes and the encoder's Lin1 K axis (multiple of 128).
    Both tiles are clamped to the padded problem size.
    """
    B, G = x.shape
    H = params["w3"].shape[1]
    E1 = params["w1"].shape[1]          # 256 in the module

    assert tb % 16 == 0 and tg % 128 == 0
    assert H % 128 == 0, "hidden_size must be a multiple of 128 (module default 128)"
    assert E1 % 128 == 0

    tb = min(tb, _round_up(B, 16))
    tg = min(tg, _round_up(G, 128))
    Bp = _round_up(B, tb)
    Gp = _round_up(G, tg)
    nb, nj, nk = Bp // tb, Gp // tg, Gp // tg

    # Mask-predictor kernel uses its own (larger) column tile: its k loop is
    # per-step-overhead bound, so take the largest multiple of tg that divides
    # Gp and is <= max(tg, 2048).
    max_tgm = max(tg, 2048)
    m = Gp // tg
    while m > 1 and ((Gp // tg) % m != 0 or m * tg > max_tgm):
        m -= 1
    tgm = m * tg
    nm = Gp // tgm

    f32, bf16 = jnp.float32, jnp.bfloat16

    def pad2(a, r, c, dtype):
        a = a.astype(dtype)
        pr, pc = r - a.shape[0], c - a.shape[1]
        if pr or pc:
            a = jnp.pad(a, ((0, pr), (0, pc)))
        return a

    # Matmul operands -> bf16 in the wrapper; LN / bias params stay f32.
    xp = pad2(x, Bp, Gp, bf16)
    w1 = pad2(params["w1"], Gp, E1, bf16)
    b1 = params["b1"].astype(f32)
    g1 = params["ln1_g"].astype(f32)
    be1 = params["ln1_b"].astype(f32)
    w2 = params["w2"].astype(bf16)
    b2 = params["b2"].astype(f32)
    g2 = params["ln2_g"].astype(f32)
    be2 = params["ln2_b"].astype(f32)
    w3 = params["w3"].astype(bf16)
    b3 = params["b3"].astype(f32)
    wm = pad2(params["wm"], H, Gp, bf16)
    bm = pad2(params["bm"], 1, Gp, f32)
    wd_lat = pad2(params["wd_lat"], H, Gp, bf16)
    wd_mask = pad2(params["wd_mask"], Gp, Gp, bf16)
    bd = pad2(params["bd"], 1, Gp, f32)

    const_e = lambda i, k: (0, 0)
    vmem_limit = _vmem_limit_bytes()

    # ---------------- kernel A: encoder, grid (nb, nk) ---------------------
    enc_cost = pl.CostEstimate(
        flops=int(2 * Bp * (Gp * E1 + E1 * H + H * H)),
        transcendentals=int(Bp * (E1 + H)),
        bytes_accessed=int(Bp * Gp * 2 + nb * Gp * E1 * 2
                           + E1 * H * 2 + H * H * 2 + Bp * H * 4),
    )
    latent_p = pl.pallas_call(
        _encoder_kernel,
        out_shape=jax.ShapeDtypeStruct((Bp, H), f32),
        grid_spec=pltpu.PrefetchScalarGridSpec(
            num_scalar_prefetch=0,
            grid=(nb, nk),
            in_specs=[
                pl.BlockSpec((tb, tg), lambda i, k: (i, k)),    # x gene K-slice
                pl.BlockSpec((tg, E1), lambda i, k: (k, 0)),    # w1 K-slice (streamed)
                pl.BlockSpec((1, E1), const_e),                 # b1
                pl.BlockSpec((1, E1), const_e),                 # ln1 gamma
                pl.BlockSpec((1, E1), const_e),                 # ln1 beta
                pl.BlockSpec((E1, H), const_e),                 # w2
                pl.BlockSpec((1, H), const_e),                  # b2
                pl.BlockSpec((1, H), const_e),                  # ln2 gamma
                pl.BlockSpec((1, H), const_e),                  # ln2 beta
                pl.BlockSpec((H, H), const_e),                  # w3
                pl.BlockSpec((1, H), const_e),                  # b3
            ],
            out_specs=pl.BlockSpec((tb, H), lambda i, k: (i, 0)),   # latent (resident in k)
            scratch_shapes=[pltpu.VMEM((tb, E1), jnp.float32)],     # Lin1 f32 accumulator
        ),
        compiler_params=pltpu.CompilerParams(
            dimension_semantics=("parallel", "arbitrary"),
            vmem_limit_bytes=vmem_limit,
        ),
        cost_estimate=enc_cost,
    )(xp, w1, b1, g1, be1, w2, b2, g2, be2, w3, b3)

    # ---------------- kernel B: mask predictor, grid (nb, nm) --------------
    mask_cost = pl.CostEstimate(
        flops=int(2 * Bp * H * Gp),
        transcendentals=0,
        bytes_accessed=int(Bp * H * 4 + nb * H * Gp * 2 + nb * Gp * 4 + Bp * Gp * 4),
    )
    mask_p = pl.pallas_call(
        _mask_kernel,
        out_shape=jax.ShapeDtypeStruct((Bp, Gp), f32),
        grid_spec=pltpu.PrefetchScalarGridSpec(
            num_scalar_prefetch=0,
            grid=(nb, nm),
            in_specs=[
                pl.BlockSpec((tb, H), lambda i, k: (i, 0)),      # latent
                pl.BlockSpec((H, tgm), lambda i, k: (0, k)),     # wm column tile
                pl.BlockSpec((1, tgm), lambda i, k: (0, k)),     # bm
            ],
            out_specs=pl.BlockSpec((tb, tgm), lambda i, k: (i, k)),
        ),
        compiler_params=pltpu.CompilerParams(
            dimension_semantics=("parallel", "parallel"),
            vmem_limit_bytes=vmem_limit,
        ),
        cost_estimate=mask_cost,
    )(latent_p, wm, bm)

    # ---------------- kernel C: decoder, grid (nb, nj, nk) -----------------
    dec_cost = pl.CostEstimate(
        flops=int(2 * Bp * Gp * Gp + 2 * Bp * H * Gp * (1 + nj)),
        transcendentals=0,
        bytes_accessed=int(nb * Gp * Gp * 2           # wd_mask re-streamed per batch tile
                           + nb * nj * H * Gp * 2     # wm re-read per (i, j)
                           + nb * H * Gp * 2          # wd_lat per batch tile
                           + Bp * H * 4               # latent
                           + Bp * Gp * 4              # recon write
                           + nb * nj * Gp * 8),       # bm + bd
    )
    recon_p = pl.pallas_call(
        _decoder_kernel,
        out_shape=jax.ShapeDtypeStruct((Bp, Gp), f32),
        grid_spec=pltpu.PrefetchScalarGridSpec(
            num_scalar_prefetch=0,
            grid=(nb, nj, nk),
            in_specs=[
                pl.BlockSpec((tb, H), lambda i, j, k: (i, 0)),    # latent (resident)
                pl.BlockSpec((H, tg), lambda i, j, k: (0, k)),    # wm K-slice (mask recompute)
                pl.BlockSpec((1, tg), lambda i, j, k: (0, k)),    # bm K-slice
                pl.BlockSpec((H, tg), lambda i, j, k: (0, j)),    # wd_lat N-slice
                pl.BlockSpec((tg, tg), lambda i, j, k: (k, j)),   # wd_mask tile (dominant stream)
                pl.BlockSpec((1, tg), lambda i, j, k: (0, j)),    # bd N-slice
            ],
            out_specs=pl.BlockSpec((tb, tg), lambda i, j, k: (i, j)),
            scratch_shapes=[pltpu.VMEM((tb, tg), jnp.float32)],   # f32 accumulator
        ),
        compiler_params=pltpu.CompilerParams(
            dimension_semantics=("parallel", "parallel", "arbitrary"),
            vmem_limit_bytes=vmem_limit,
        ),
        cost_estimate=dec_cost,
    )(latent_p, wm, bm, wd_lat, wd_mask, bd)

    # Strip batch/gene padding.
    return latent_p[:B, :], mask_p[:B, :G], recon_p[:B, :G]


# ------------------------------------------------------------------ params
def init_params(key, num_genes, hidden_size=128, enc1=256):
    """Deterministic synthetic parameters.  Weights stored as (in, out)."""
    ks = jax.random.split(key, 12)
    s = 0.05
    w = lambda k, shape: jax.random.normal(k, shape, jnp.float32) * s

    return {
        # encoder Linear(num_genes, 256) + LayerNorm(256)
        "w1": w(ks[0], (num_genes, enc1)),
        "b1": w(ks[1], (1, enc1)),
        "ln1_g": 1.0 + 0.1 * jax.random.normal(ks[8], (1, enc1), jnp.float32),
        "ln1_b": 0.1 * jax.random.normal(ks[9], (1, enc1), jnp.float32),
        # encoder Linear(256, hidden) + LayerNorm(hidden)
        "w2": w(ks[2], (enc1, hidden_size)),
        "b2": w(ks[3], (1, hidden_size)),
        "ln2_g": 1.0 + 0.1 * jax.random.normal(ks[10], (1, hidden_size), jnp.float32),
        "ln2_b": 0.1 * jax.random.normal(ks[11], (1, hidden_size), jnp.float32),
        # encoder Linear(hidden, hidden)
        "w3": w(ks[4], (hidden_size, hidden_size)),
        "b3": jnp.zeros((1, hidden_size), jnp.float32),
        # mask_predictor Linear(hidden, num_genes)
        "wm": w(ks[5], (hidden_size, num_genes)),
        "bm": jnp.zeros((1, num_genes), jnp.float32),
        # decoder Linear(hidden + num_genes, num_genes), split along the input dim
        "wd_lat": w(ks[6], (hidden_size, num_genes)),
        "wd_mask": w(ks[7], (num_genes, num_genes)),
        "bd": jnp.zeros((1, num_genes), jnp.float32),
    }


# ------------------------------------------------------------------ reference
def reference_forward(x, p):
    """Plain-JAX reference with the same bf16-operand / f32-accumulate scheme."""
    bf = lambda a: a.astype(jnp.bfloat16)
    dot = lambda a, b: jnp.dot(bf(a), bf(b), preferred_element_type=jnp.float32)

    h = dot(x, p["w1"]) + p["b1"]
    h = _layernorm(h, p["ln1_g"], p["ln1_b"])
    h = _mish(h)
    h = dot(h, p["w2"]) + p["b2"]
    h = _layernorm(h, p["ln2_g"], p["ln2_b"])
    h = _mish(h)
    latent = dot(h, p["w3"]) + p["b3"]
    mask = dot(latent, p["wm"]) + p["bm"]
    recon = dot(latent, p["wd_lat"]) + dot(mask, p["wd_mask"]) + p["bd"]
    return latent, mask, recon


# ------------------------------------------------------------------ main
if __name__ == "__main__":
    B = 24            # padded to 32 -> 2 batch tiles of 16
    NUM_GENES = 500   # padded to 512 -> 4 gene tiles of 128 (exercises padding)
    HIDDEN = 128      # module default; lane-dense latent

    key = jax.random.PRNGKey(0)
    kx, kp = jax.random.split(key)
    x = jax.random.normal(kx, (B, NUM_GENES), jnp.float32)
    params = init_params(kp, NUM_GENES, hidden_size=HIDDEN)

    # small tiles so the test exercises real multi-tile grids on all axes
    latent, pred_mask, recon = autoencoder_forward(x, params, tb=16, tg=128)
    jax.block_until_ready((latent, pred_mask, recon))

    ref_latent, ref_mask, ref_recon = reference_forward(x, params)
    np.testing.assert_allclose(np.asarray(latent), np.asarray(ref_latent),
                               atol=1e-2, rtol=1e-2)
    np.testing.assert_allclose(np.asarray(pred_mask), np.asarray(ref_mask),
                               atol=1e-2, rtol=1e-2)
    np.testing.assert_allclose(np.asarray(recon), np.asarray(ref_recon),
                               atol=1e-2, rtol=1e-2)

    assert latent.shape == (B, HIDDEN)
    assert pred_mask.shape == (B, NUM_GENES)
    assert recon.shape == (B, NUM_GENES)

    print("KERNEL_OK")
</pallas_src>

<mosaic_0001>
module attributes {stable_mosaic.version = 11 : i64} {
  func.func @_encoder_kernel(%arg0: i32, %arg1: i32, %arg2: memref<16x128xbf16, #tpu.memory_space<vmem>>, %arg3: memref<128x256xbf16, #tpu.memory_space<vmem>>, %arg4: memref<1x256xf32, #tpu.memory_space<vmem>>, %arg5: memref<1x256xf32, #tpu.memory_space<vmem>>, %arg6: memref<1x256xf32, #tpu.memory_space<vmem>>, %arg7: memref<256x128xbf16, #tpu.memory_space<vmem>>, %arg8: memref<1x128xf32, #tpu.memory_space<vmem>>, %arg9: memref<1x128xf32, #tpu.memory_space<vmem>>, %arg10: memref<1x128xf32, #tpu.memory_space<vmem>>, %arg11: memref<128x128xbf16, #tpu.memory_space<vmem>>, %arg12: memref<1x128xf32, #tpu.memory_space<vmem>>, %arg13: memref<16x128xf32, #tpu.memory_space<vmem>>, %arg14: memref<16x256xf32, #tpu.memory_space<vmem>>) attributes {dimension_semantics = [#tpu.dimension_semantics<parallel>, #tpu.dimension_semantics<arbitrary>], iteration_bounds = array<i64: 2, 4>, scalar_prefetch = 0 : i64, scratch_operands = 1 : i64, tpu.core_type = #tpu.core_type<tc>, window_params = [{transform_indices = @transform_0, window_bounds = array<i64: 16, 128>}, {transform_indices = @transform_1, window_bounds = array<i64: 128, 256>}, {pipeline_mode = #tpu.pipeline_mode<synchronous>, transform_indices = @transform_2, window_bounds = array<i64: 1, 256>}, {pipeline_mode = #tpu.pipeline_mode<synchronous>, transform_indices = @transform_3, window_bounds = array<i64: 1, 256>}, {pipeline_mode = #tpu.pipeline_mode<synchronous>, transform_indices = @transform_4, window_bounds = array<i64: 1, 256>}, {pipeline_mode = #tpu.pipeline_mode<synchronous>, transform_indices = @transform_5, window_bounds = array<i64: 256, 128>}, {pipeline_mode = #tpu.pipeline_mode<synchronous>, transform_indices = @transform_6, window_bounds = array<i64: 1, 128>}, {pipeline_mode = #tpu.pipeline_mode<synchronous>, transform_indices = @transform_7, window_bounds = array<i64: 1, 128>}, {pipeline_mode = #tpu.pipeline_mode<synchronous>, transform_indices = @transform_8, window_bounds = array<i64: 1, 128>}, {pipeline_mode = #tpu.pipeline_mode<synchronous>, transform_indices = @transform_9, window_bounds = array<i64: 128, 128>}, {pipeline_mode = #tpu.pipeline_mode<synchronous>, transform_indices = @transform_10, window_bounds = array<i64: 1, 128>}, {transform_indices = @transform_11, window_bounds = array<i64: 16, 128>}]} {
    %c0_i32 = arith.constant 0 : i32
    %0 = arith.cmpi eq, %arg1, %c0_i32 : i32
    %1 = arith.extui %0 : i1 to i32
    %c0_i32_0 = arith.constant 0 : i32
    %2 = arith.cmpi ne, %1, %c0_i32_0 : i32
    scf.if %2 {
      %cst_9 = arith.constant 0.000000e+00 : f32
      %12 = vector.broadcast %cst_9 : f32 to vector<16x256xf32>
      %c0_10 = arith.constant 0 : index
      %c0_11 = arith.constant 0 : index
      %13 = vector.load %arg14[%c0_10, %c0_11] : memref<16x256xf32, #tpu.memory_space<vmem>>, vector<16x256xf32>
      tpu.vector_store %arg14[%c0_10, %c0_11], %12 {strides = array<i32>} : memref<16x256xf32, #tpu.memory_space<vmem>>, vector<16x256xf32>,
    } else {
    }
    %c0 = arith.constant 0 : index
    %c0_1 = arith.constant 0 : index
    %3 = vector.load %arg14[%c0, %c0_1] : memref<16x256xf32, #tpu.memory_space<vmem>>, vector<16x256xf32>
    %c0_2 = arith.constant 0 : index
    %c0_3 = arith.constant 0 : index
    %4 = vector.load %arg2[%c0_2, %c0_3] : memref<16x128xbf16, #tpu.memory_space<vmem>>, vector<16x128xbf16>
    %c0_4 = arith.constant 0 : index
    %c0_5 = arith.constant 0 : index
    %5 = vector.load %arg3[%c0_4, %c0_5] : memref<128x256xbf16, #tpu.memory_space<vmem>>, vector<128x256xbf16>
    %cst = arith.constant dense<0.000000e+00> : vector<16x256xf32>
    %6 = tpu.matmul %4, %5, %cst {dimension_numbers = #tpu.dot_dimension_numbers<[1], [0], [0], [1], [0, 0, 1, 1], [], []>} : vector<16x128xbf16>, vector<128x256xbf16>, vector<16x256xf32> -> vector<16x256xf32>
    %7 = arith.addf %3, %6 : vector<16x256xf32>
    %c0_6 = arith.constant 0 : index
    %c0_7 = arith.constant 0 : index
    %8 = vector.load %arg14[%c0_6, %c0_7] : memref<16x256xf32, #tpu.memory_space<vmem>>, vector<16x256xf32>
    tpu.vector_store %arg14[%c0_6, %c0_7], %7 {strides = array<i32>} : memref<16x256xf32, #tpu.memory_space<vmem>>, vector<16x256xf32>,
    %c3_i32 = arith.constant 3 : i32
    %9 = arith.cmpi eq, %arg1, %c3_i32 : i32
    %10 = arith.extui %9 : i1 to i32
    %c0_i32_8 = arith.constant 0 : i32
    %11 = arith.cmpi ne, %10, %c0_i32_8 : i32
    scf.if %11 {
      %c0_9 = arith.constant 0 : index
      %c0_10 = arith.constant 0 : index
      %12 = vector.load %arg14[%c0_9, %c0_10] : memref<16x256xf32, #tpu.memory_space<vmem>>, vector<16x256xf32>
      %c0_11 = arith.constant 0 : index
      %c0_12 = arith.constant 0 : index
      %13 = vector.load %arg4[%c0_11, %c0_12] : memref<1x256xf32, #tpu.memory_space<vmem>>, vector<1x256xf32>
      %14 = vector.broadcast %13 : vector<1x256xf32> to vector<16x256xf32>
      %15 = arith.addf %12, %14 : vector<16x256xf32>
      %c0_13 = arith.constant 0 : index
      %c0_14 = arith.constant 0 : index
      %16 = vector.load %arg5[%c0_13, %c0_14] : memref<1x256xf32, #tpu.memory_space<vmem>>, vector<1x256xf32>
      %c0_15 = arith.constant 0 : index
      %c0_16 = arith.constant 0 : index
      %17 = vector.load %arg6[%c0_15, %c0_16] : memref<1x256xf32, #tpu.memory_space<vmem>>, vector<1x256xf32>
      %cst_17 = arith.constant dense<0.000000e+00> : vector<16xf32>
      %18 = vector.multi_reduction <add>, %15, %cst_17 [1] : vector<16x256xf32> to vector<16xf32>
      %19 = vector.shape_cast %18 : vector<16xf32> to vector<16x1xf32>
      %cst_18 = arith.constant 2.560000e+02 : f32
      %20 = vector.broadcast %cst_18 : f32 to vector<16x1xf32>
      %21 = arith.divf %19, %20 : vector<16x1xf32>
      %22 = vector.broadcast %21 : vector<16x1xf32> to vector<16x256xf32>
      %23 = arith.subf %15, %22 : vector<16x256xf32>
      %24 = arith.mulf %23, %23 : vector<16x256xf32>
      %cst_19 = arith.constant dense<0.000000e+00> : vector<16xf32>
      %25 = vector.multi_reduction <add>, %24, %cst_19 [1] : vector<16x256xf32> to vector<16xf32>
      %26 = vector.shape_cast %25 : vector<16xf32> to vector<16x1xf32>
      %cst_20 = arith.constant 2.560000e+02 : f32
      %27 = vector.broadcast %cst_20 : f32 to vector<16x1xf32>
      %28 = arith.divf %26, %27 : vector<16x1xf32>
      %29 = vector.broadcast %21 : vector<16x1xf32> to vector<16x256xf32>
      %30 = arith.subf %15, %29 : vector<16x256xf32>
      %cst_21 = arith.constant 9.99999974E-6 : f32
      %31 = vector.broadcast %cst_21 : f32 to vector<16x1xf32>
      %32 = arith.addf %28, %31 : vector<16x1xf32>
      %33 = math.rsqrt %32 : vector<16x1xf32>
      %34 = vector.broadcast %33 : vector<16x1xf32> to vector<16x256xf32>
      %35 = arith.mulf %30, %34 : vector<16x256xf32>
      %36 = vector.broadcast %16 : vector<1x256xf32> to vector<16x256xf32>
      %37 = arith.mulf %35, %36 : vector<16x256xf32>
      %38 = vector.broadcast %17 : vector<1x256xf32> to vector<16x256xf32>
      %39 = arith.addf %37, %38 : vector<16x256xf32>
      %cst_22 = arith.constant 2.000000e+01 : f32
      %40 = vector.broadcast %cst_22 : f32 to vector<16x256xf32>
      %41 = arith.minimumf %39, %40 : vector<16x256xf32>
      %42 = math.exp %41 : vector<16x256xf32>
      %cst_23 = arith.constant 1.000000e+00 : f32
      %43 = vector.broadcast %cst_23 : f32 to vector<16x256xf32>
      %44 = arith.addf %43, %42 : vector<16x256xf32>
      %cst_24 = arith.constant 1.000000e+00 : f32
      %45 = vector.broadcast %cst_24 : f32 to vector<16x256xf32>
      %46 = arith.addf %45, %42 : vector<16x256xf32>
      %47 = arith.mulf %44, %46 : vector<16x256xf32>
      %cst_25 = arith.constant 1.000000e+00 : f32
      %48 = vector.broadcast %cst_25 : f32 to vector<16x256xf32>
      %49 = arith.addf %47, %48 : vector<16x256xf32>
      %cst_26 = arith.constant 2.000000e+00 : f32
      %50 = vector.broadcast %cst_26 : f32 to vector<16x256xf32>
      %51 = arith.divf %50, %49 : vector<16x256xf32>
      %cst_27 = arith.constant 1.000000e+00 : f32
      %52 = vector.broadcast %cst_27 : f32 to vector<16x256xf32>
      %53 = arith.subf %52, %51 : vector<16x256xf32>
      %54 = arith.mulf %39, %53 : vector<16x256xf32>
      %55 = arith.truncf %54 : vector<16x256xf32> to vector<16x256xbf16>
      %c0_28 = arith.constant 0 : index
      %c0_29 = arith.constant 0 : index
      %56 = vector.load %arg7[%c0_28, %c0_29] : memref<256x128xbf16, #tpu.memory_space<vmem>>, vector<256x128xbf16>
      %cst_30 = arith.constant dense<0.000000e+00> : vector<16x128xf32>
      %57 = tpu.matmul %55, %56, %cst_30 {dimension_numbers = #tpu.dot_dimension_numbers<[1], [0], [0], [1], [0, 0, 1, 1], [], []>} : vector<16x256xbf16>, vector<256x128xbf16>, vector<16x128xf32> -> vector<16x128xf32>
      %c0_31 = arith.constant 0 : index
      %c0_32 = arith.constant 0 : index
      %58 = vector.load %arg8[%c0_31, %c0_32] : memref<1x128xf32, #tpu.memory_space<vmem>>, vector<1x128xf32>
      %59 = vector.broadcast %58 : vector<1x128xf32> to vector<16x128xf32>
      %60 = arith.addf %57, %59 : vector<16x128xf32>
      %c0_33 = arith.constant 0 : index
      %c0_34 = arith.constant 0 : index
      %61 = vector.load %arg9[%c0_33, %c0_34] : memref<1x128xf32, #tpu.memory_space<vmem>>, vector<1x128xf32>
      %c0_35 = arith.constant 0 : index
      %c0_36 = arith.constant 0 : index
      %62 = vector.load %arg10[%c0_35, %c0_36] : memref<1x128xf32, #tpu.memory_space<vmem>>, vector<1x128xf32>
      %cst_37 = arith.constant dense<0.000000e+00> : vector<16xf32>
      %63 = vector.multi_reduction <add>, %60, %cst_37 [1] : vector<16x128xf32> to vector<16xf32>
      %64 = vector.shape_cast %63 : vector<16xf32> to vector<16x1xf32>
      %cst_38 = arith.constant 1.280000e+02 : f32
      %65 = vector.broadcast %cst_38 : f32 to vector<16x1xf32>
      %66 = arith.divf %64, %65 : vector<16x1xf32>
      %67 = vector.broadcast %66 : vector<16x1xf32> to vector<16x128xf32>
      %68 = arith.subf %60, %67 : vector<16x128xf32>
      %69 = arith.mulf %68, %68 : vector<16x128xf32>
      %cst_39 = arith.constant dense<0.000000e+00> : vector<16xf32>
      %70 = vector.multi_reduction <add>, %69, %cst_39 [1] : vector<16x128xf32> to vector<16xf32>
      %71 = vector.shape_cast %70 : vector<16xf32> to vector<16x1xf32>
      %cst_40 = arith.constant 1.280000e+02 : f32
      %72 = vector.broadcast %cst_40 : f32 to vector<16x1xf32>
      %73 = arith.divf %71, %72 : vector<16x1xf32>
      %74 = vector.broadcast %66 : vector<16x1xf32> to vector<16x128xf32>
      %75 = arith.subf %60, %74 : vector<16x128xf32>
      %cst_41 = arith.constant 9.99999974E-6 : f32
      %76 = vector.broadcast %cst_41 : f32 to vector<16x1xf32>
      %77 = arith.addf %73, %76 : vector<16x1xf32>
      %78 = math.rsqrt %77 : vector<16x1xf32>
      %79 = vector.broadcast %78 : vector<16x1xf32> to vector<16x128xf32>
      %80 = arith.mulf %75, %79 : vector<16x128xf32>
      %81 = vector.broadcast %61 : vector<1x128xf32> to vector<16x128xf32>
      %82 = arith.mulf %80, %81 : vector<16x128xf32>
      %83 = vector.broadcast %62 : vector<1x128xf32> to vector<16x128xf32>
      %84 = arith.addf %82, %83 : vector<16x128xf32>
      %cst_42 = arith.constant 2.000000e+01 : f32
      %85 = vector.broadcast %cst_42 : f32 to vector<16x128xf32>
      %86 = arith.minimumf %84, %85 : vector<16x128xf32>
      %87 = math.exp %86 : vector<16x128xf32>
      %cst_43 = arith.constant 1.000000e+00 : f32
      %88 = vector.broadcast %cst_43 : f32 to vector<16x128xf32>
      %89 = arith.addf %88, %87 : vector<16x128xf32>
      %cst_44 = arith.constant 1.000000e+00 : f32
      %90 = vector.broadcast %cst_44 : f32 to vector<16x128xf32>
      %91 = arith.addf %90, %87 : vector<16x128xf32>
      %92 = arith.mulf %89, %91 : vector<16x128xf32>
      %cst_45 = arith.constant 1.000000e+00 : f32
      %93 = vector.broadcast %cst_45 : f32 to vector<16x128xf32>
      %94 = arith.addf %92, %93 : vector<16x128xf32>
      %cst_46 = arith.constant 2.000000e+00 : f32
      %95 = vector.broadcast %cst_46 : f32 to vector<16x128xf32>
      %96 = arith.divf %95, %94 : vector<16x128xf32>
      %cst_47 = arith.constant 1.000000e+00 : f32
      %97 = vector.broadcast %cst_47 : f32 to vector<16x128xf32>
      %98 = arith.subf %97, %96 : vector<16x128xf32>
      %99 = arith.mulf %84, %98 : vector<16x128xf32>
      %100 = arith.truncf %99 : vector<16x128xf32> to vector<16x128xbf16>
      %c0_48 = arith.constant 0 : index
      %c0_49 = arith.constant 0 : index
      %101 = vector.load %arg11[%c0_48, %c0_49] : memref<128x128xbf16, #tpu.memory_space<vmem>>, vector<128x128xbf16>
      %cst_50 = arith.constant dense<0.000000e+00> : vector<16x128xf32>
      %102 = tpu.matmul %100, %101, %cst_50 {dimension_numbers = #tpu.dot_dimension_numbers<[1], [0], [0], [1], [0, 0, 1, 1], [], []>} : vector<16x128xbf16>, vector<128x128xbf16>, vector<16x128xf32> -> vector<16x128xf32>
      %c0_51 = arith.constant 0 : index
      %c0_52 = arith.constant 0 : index
      %103 = vector.load %arg12[%c0_51, %c0_52] : memref<1x128xf32, #tpu.memory_space<vmem>>, vector<1x128xf32>
      %104 = vector.broadcast %103 : vector<1x128xf32> to vector<16x128xf32>
      %105 = arith.addf %102, %104 : vector<16x128xf32>
      %c0_53 = arith.constant 0 : index
      %c0_54 = arith.constant 0 : index
      %106 = vector.load %arg13[%c0_53, %c0_54] : memref<16x128xf32, #tpu.memory_space<vmem>>, vector<16x128xf32>
      tpu.vector_store %arg13[%c0_53, %c0_54], %105 {strides = array<i32>} : memref<16x128xf32, #tpu.memory_space<vmem>>, vector<16x128xf32>,
    } else {
    }
    return
  }
  func.func @transform_0(%arg0: i32, %arg1: i32) -> (i32, i32) {
    %c0_i32 = arith.constant 0 : i32
    return %arg0, %arg1 : i32, i32
  }
  func.func @transform_1(%arg0: i32, %arg1: i32) -> (i32, i32) {
    %c0_i32 = arith.constant 0 : i32
    %c0_i32_0 = arith.constant 0 : i32
    return %arg1, %c0_i32 : i32, i32
  }
  func.func @transform_2(%arg0: i32, %arg1: i32) -> (i32, i32) {
    %c0_i32 = arith.constant 0 : i32
    %c0_i32_0 = arith.constant 0 : i32
    %c0_i32_1 = arith.constant 0 : i32
    return %c0_i32, %c0_i32_0 : i32, i32
  }
  func.func @transform_3(%arg0: i32, %arg1: i32) -> (i32, i32) {
    %c0_i32 = arith.constant 0 : i32
    %c0_i32_0 = arith.constant 0 : i32
    %c0_i32_1 = arith.constant 0 : i32
    return %c0_i32, %c0_i32_0 : i32, i32
  }
  func.func @transform_4(%arg0: i32, %arg1: i32) -> (i32, i32) {
    %c0_i32 = arith.constant 0 : i32
    %c0_i32_0 = arith.constant 0 : i32
    %c0_i32_1 = arith.constant 0 : i32
    return %c0_i32, %c0_i32_0 : i32, i32
  }
  func.func @transform_5(%arg0: i32, %arg1: i32) -> (i32, i32) {
    %c0_i32 = arith.constant 0 : i32
    %c0_i32_0 = arith.constant 0 : i32
    %c0_i32_1 = arith.constant 0 : i32
    return %c0_i32, %c0_i32_0 : i32, i32
  }
  func.func @transform_6(%arg0: i32, %arg1: i32) -> (i32, i32) {
    %c0_i32 = arith.constant 0 : i32
    %c0_i32_0 = arith.constant 0 : i32
    %c0_i32_1 = arith.constant 0 : i32
    return %c0_i32, %c0_i32_0 : i32, i32
  }
  func.func @transform_7(%arg0: i32, %arg1: i32) -> (i32, i32) {
    %c0_i32 = arith.constant 0 : i32
    %c0_i32_0 = arith.constant 0 : i32
    %c0_i32_1 = arith.constant 0 : i32
    return %c0_i32, %c0_i32_0 : i32, i32
  }
  func.func @transform_8(%arg0: i32, %arg1: i32) -> (i32, i32) {
    %c0_i32 = arith.constant 0 : i32
    %c0_i32_0 = arith.constant 0 : i32
    %c0_i32_1 = arith.constant 0 : i32
    return %c0_i32, %c0_i32_0 : i32, i32
  }
  func.func @transform_9(%arg0: i32, %arg1: i32) -> (i32, i32) {
    %c0_i32 = arith.constant 0 : i32
    %c0_i32_0 = arith.constant 0 : i32
    %c0_i32_1 = arith.constant 0 : i32
    return %c0_i32, %c0_i32_0 : i32, i32
  }
  func.func @transform_10(%arg0: i32, %arg1: i32) -> (i32, i32) {
    %c0_i32 = arith.constant 0 : i32
    %c0_i32_0 = arith.constant 0 : i32
    %c0_i32_1 = arith.constant 0 : i32
    return %c0_i32, %c0_i32_0 : i32, i32
  }
  func.func @transform_11(%arg0: i32, %arg1: i32) -> (i32, i32) {
    %c0_i32 = arith.constant 0 : i32
    %c0_i32_0 = arith.constant 0 : i32
    return %arg0, %c0_i32 : i32, i32
  }
}

module attributes {stable_mosaic.version = 11 : i64} {
  func.func @_decoder_kernel(%arg0: i32, %arg1: i32, %arg2: i32, %arg3: memref<16x128xf32, #tpu.memory_space<vmem>>, %arg4: memref<128x128xbf16, #tpu.memory_space<vmem>>, %arg5: memref<1x128xf32, #tpu.memory_space<vmem>>, %arg6: memref<128x128xbf16, #tpu.memory_space<vmem>>, %arg7: memref<128x128xbf16, #tpu.memory_space<vmem>>, %arg8: memref<1x128xf32, #tpu.memory_space<vmem>>, %arg9: memref<16x128xf32, #tpu.memory_space<vmem>>, %arg10: memref<16x128xf32, #tpu.memory_space<vmem>>) attributes {dimension_semantics = [#tpu.dimension_semantics<parallel>, #tpu.dimension_semantics<parallel>, #tpu.dimension_semantics<arbitrary>], iteration_bounds = array<i64: 2, 4, 4>, scalar_prefetch = 0 : i64, scratch_operands = 1 : i64, tpu.core_type = #tpu.core_type<tc>, window_params = [{transform_indices = @transform_0, window_bounds = array<i64: 16, 128>}, {transform_indices = @transform_1, window_bounds = array<i64: 128, 128>}, {transform_indices = @transform_2, window_bounds = array<i64: 1, 128>}, {transform_indices = @transform_3, window_bounds = array<i64: 128, 128>}, {transform_indices = @transform_4, window_bounds = array<i64: 128, 128>}, {transform_indices = @transform_5, window_bounds = array<i64: 1, 128>}, {transform_indices = @transform_6, window_bounds = array<i64: 16, 128>}]} {
    %c0 = arith.constant 0 : index
    %c0_0 = arith.constant 0 : index
    %0 = vector.load %arg3[%c0, %c0_0] : memref<16x128xf32, #tpu.memory_space<vmem>>, vector<16x128xf32>
    %1 = arith.truncf %0 : vector<16x128xf32> to vector<16x128xbf16>
    %c0_i32 = arith.constant 0 : i32
    %2 = arith.cmpi eq, %arg2, %c0_i32 : i32
    %3 = arith.extui %2 : i1 to i32
    %c0_i32_1 = arith.constant 0 : i32
    %4 = arith.cmpi ne, %3, %c0_i32_1 : i32
    scf.if %4 {
      %c0_14 = arith.constant 0 : index
      %c0_15 = arith.constant 0 : index
      %19 = vector.load %arg6[%c0_14, %c0_15] : memref<128x128xbf16, #tpu.memory_space<vmem>>, vector<128x128xbf16>
      %cst_16 = arith.constant dense<0.000000e+00> : vector<16x128xf32>
      %20 = tpu.matmul %1, %19, %cst_16 {dimension_numbers = #tpu.dot_dimension_numbers<[1], [0], [0], [1], [0, 0, 1, 1], [], []>} : vector<16x128xbf16>, vector<128x128xbf16>, vector<16x128xf32> -> vector<16x128xf32>
      %c0_17 = arith.constant 0 : index
      %c0_18 = arith.constant 0 : index
      %21 = vector.load %arg8[%c0_17, %c0_18] : memref<1x128xf32, #tpu.memory_space<vmem>>, vector<1x128xf32>
      %22 = vector.broadcast %21 : vector<1x128xf32> to vector<16x128xf32>
      %23 = arith.addf %20, %22 : vector<16x128xf32>
      %c0_19 = arith.constant 0 : index
      %c0_20 = arith.constant 0 : index
      %24 = vector.load %arg10[%c0_19, %c0_20] : memref<16x128xf32, #tpu.memory_space<vmem>>, vector<16x128xf32>
      tpu.vector_store %arg10[%c0_19, %c0_20], %23 {strides = array<i32>} : memref<16x128xf32, #tpu.memory_space<vmem>>, vector<16x128xf32>,
    } else {
    }
    %c0_2 = arith.constant 0 : index
    %c0_3 = arith.constant 0 : index
    %5 = vector.load %arg4[%c0_2, %c0_3] : memref<128x128xbf16, #tpu.memory_space<vmem>>, vector<128x128xbf16>
    %cst = arith.constant dense<0.000000e+00> : vector<16x128xf32>
    %6 = tpu.matmul %1, %5, %cst {dimension_numbers = #tpu.dot_dimension_numbers<[1], [0], [0], [1], [0, 0, 1, 1], [], []>} : vector<16x128xbf16>, vector<128x128xbf16>, vector<16x128xf32> -> vector<16x128xf32>
    %c0_4 = arith.constant 0 : index
    %c0_5 = arith.constant 0 : index
    %7 = vector.load %arg5[%c0_4, %c0_5] : memref<1x128xf32, #tpu.memory_space<vmem>>, vector<1x128xf32>
    %8 = vector.broadcast %7 : vector<1x128xf32> to vector<16x128xf32>
    %9 = arith.addf %6, %8 : vector<16x128xf32>
    %c0_6 = arith.constant 0 : index
    %c0_7 = arith.constant 0 : index
    %10 = vector.load %arg10[%c0_6, %c0_7] : memref<16x128xf32, #tpu.memory_space<vmem>>, vector<16x128xf32>
    %11 = arith.truncf %9 : vector<16x128xf32> to vector<16x128xbf16>
    %c0_8 = arith.constant 0 : index
    %c0_9 = arith.constant 0 : index
    %12 = vector.load %arg7[%c0_8, %c0_9] : memref<128x128xbf16, #tpu.memory_space<vmem>>, vector<128x128xbf16>
    %cst_10 = arith.constant dense<0.000000e+00> : vector<16x128xf32>
    %13 = tpu.matmul %11, %12, %cst_10 {dimension_numbers = #tpu.dot_dimension_numbers<[1], [0], [0], [1], [0, 0, 1, 1], [], []>} : vector<16x128xbf16>, vector<128x128xbf16>, vector<16x128xf32> -> vector<16x128xf32>
    %14 = arith.addf %10, %13 : vector<16x128xf32>
    %c0_11 = arith.constant 0 : index
    %c0_12 = arith.constant 0 : index
    %15 = vector.load %arg10[%c0_11, %c0_12] : memref<16x128xf32, #tpu.memory_space<vmem>>, vector<16x128xf32>
    tpu.vector_store %arg10[%c0_11, %c0_12], %14 {strides = array<i32>} : memref<16x128xf32, #tpu.memory_space<vmem>>, vector<16x128xf32>,
    %c3_i32 = arith.constant 3 : i32
    %16 = arith.cmpi eq, %arg2, %c3_i32 : i32
    %17 = arith.extui %16 : i1 to i32
    %c0_i32_13 = arith.constant 0 : i32
    %18 = arith.cmpi ne, %17, %c0_i32_13 : i32
    scf.if %18 {
      %c0_14 = arith.constant 0 : index
      %c0_15 = arith.constant 0 : index
      %19 = vector.load %arg10[%c0_14, %c0_15] : memref<16x128xf32, #tpu.memory_space<vmem>>, vector<16x128xf32>
      %c0_16 = arith.constant 0 : index
      %c0_17 = arith.constant 0 : index
      %20 = vector.load %arg9[%c0_16, %c0_17] : memref<16x128xf32, #tpu.memory_space<vmem>>, vector<16x128xf32>
      tpu.vector_store %arg9[%c0_16, %c0_17], %19 {strides = array<i32>} : memref<16x128xf32, #tpu.memory_space<vmem>>, vector<16x128xf32>,
    } else {
    }
    return
  }
  func.func @transform_0(%arg0: i32, %arg1: i32, %arg2: i32) -> (i32, i32) {
    %c0_i32 = arith.constant 0 : i32
    %c0_i32_0 = arith.constant 0 : i32
    return %arg0, %c0_i32 : i32, i32
  }
  func.func @transform_1(%arg0: i32, %arg1: i32, %arg2: i32) -> (i32, i32) {
    %c0_i32 = arith.constant 0 : i32
    %c0_i32_0 = arith.constant 0 : i32
    return %c0_i32, %arg2 : i32, i32
  }
  func.func @transform_2(%arg0: i32, %arg1: i32, %arg2: i32) -> (i32, i32) {
    %c0_i32 = arith.constant 0 : i32
    %c0_i32_0 = arith.constant 0 : i32
    return %c0_i32, %arg2 : i32, i32
  }
  func.func @transform_3(%arg0: i32, %arg1: i32, %arg2: i32) -> (i32, i32) {
    %c0_i32 = arith.constant 0 : i32
    %c0_i32_0 = arith.constant 0 : i32
    return %c0_i32, %arg1 : i32, i32
  }
  func.func @transform_4(%arg0: i32, %arg1: i32, %arg2: i32) -> (i32, i32) {
    %c0_i32 = arith.constant 0 : i32
    return %arg2, %arg1 : i32, i32
  }
  func.func @transform_5(%arg0: i32, %arg1: i32, %arg2: i32) -> (i32, i32) {
    %c0_i32 = arith.constant 0 : i32
    %c0_i32_0 = arith.constant 0 : i32
    return %c0_i32, %arg1 : i32, i32
  }
  func.func @transform_6(%arg0: i32, %arg1: i32, %arg2: i32) -> (i32, i32) {
    %c0_i32 = arith.constant 0 : i32
    return %arg0, %arg1 : i32, i32
  }
}

module attributes {stable_mosaic.version = 11 : i64} {
  func.func @_mask_kernel(%arg0: i32, %arg1: i32, %arg2: memref<16x128xf32, #tpu.memory_space<vmem>>, %arg3: memref<128x512xbf16, #tpu.memory_space<vmem>>, %arg4: memref<1x512xf32, #tpu.memory_space<vmem>>, %arg5: memref<16x512xf32, #tpu.memory_space<vmem>>) attributes {dimension_semantics = [#tpu.dimension_semantics<parallel>, #tpu.dimension_semantics<parallel>], iteration_bounds = array<i64: 2, 1>, scalar_prefetch = 0 : i64, scratch_operands = 0 : i64, tpu.core_type = #tpu.core_type<tc>, window_params = [{transform_indices = @transform_0, window_bounds = array<i64: 16, 128>}, {transform_indices = @transform_1, window_bounds = array<i64: 128, 512>}, {transform_indices = @transform_2, window_bounds = array<i64: 1, 512>}, {transform_indices = @transform_3, window_bounds = array<i64: 16, 512>}]} {
    %c0 = arith.constant 0 : index
    %c0_0 = arith.constant 0 : index
    %0 = vector.load %arg2[%c0, %c0_0] : memref<16x128xf32, #tpu.memory_space<vmem>>, vector<16x128xf32>
    %1 = arith.truncf %0 : vector<16x128xf32> to vector<16x128xbf16>
    %c0_1 = arith.constant 0 : index
    %c0_2 = arith.constant 0 : index
    %2 = vector.load %arg3[%c0_1, %c0_2] : memref<128x512xbf16, #tpu.memory_space<vmem>>, vector<128x512xbf16>
    %cst = arith.constant dense<0.000000e+00> : vector<16x512xf32>
    %3 = tpu.matmul %1, %2, %cst {dimension_numbers = #tpu.dot_dimension_numbers<[1], [0], [0], [1], [0, 0, 1, 1], [], []>} : vector<16x128xbf16>, vector<128x512xbf16>, vector<16x512xf32> -> vector<16x512xf32>
    %c0_3 = arith.constant 0 : index
    %c0_4 = arith.constant 0 : index
    %4 = vector.load %arg4[%c0_3, %c0_4] : memref<1x512xf32, #tpu.memory_space<vmem>>, vector<1x512xf32>
    %5 = vector.broadcast %4 : vector<1x512xf32> to vector<16x512xf32>
    %6 = arith.addf %3, %5 : vector<16x512xf32>
    %c0_5 = arith.constant 0 : index
    %c0_6 = arith.constant 0 : index
    %7 = vector.load %arg5[%c0_5, %c0_6] : memref<16x512xf32, #tpu.memory_space<vmem>>, vector<16x512xf32>
    tpu.vector_store %arg5[%c0_5, %c0_6], %6 {strides = array<i32>} : memref<16x512xf32, #tpu.memory_space<vmem>>, vector<16x512xf32>,
    return
  }
  func.func @transform_0(%arg0: i32, %arg1: i32) -> (i32, i32) {
    %c0_i32 = arith.constant 0 : i32
    %c0_i32_0 = arith.constant 0 : i32
    return %arg0, %c0_i32 : i32, i32
  }
  func.func @transform_1(%arg0: i32, %arg1: i32) -> (i32, i32) {
    %c0_i32 = arith.constant 0 : i32
    %c0_i32_0 = arith.constant 0 : i32
    return %c0_i32, %arg1 : i32, i32
  }
  func.func @transform_2(%arg0: i32, %arg1: i32) -> (i32, i32) {
    %c0_i32 = arith.constant 0 : i32
    %c0_i32_0 = arith.constant 0 : i32
    return %c0_i32, %arg1 : i32, i32
  }
  func.func @transform_3(%arg0: i32, %arg1: i32) -> (i32, i32) {
    %c0_i32 = arith.constant 0 : i32
    return %arg0, %arg1 : i32, i32
  }
}

</mosaic_0001>

<llo_original>
// kernel: autoencoder_forward.5
$region0: #{autoencoder_forward.5}
  #allocation0 [shape = 'u32[]', space=smem, size = 0x4, offset = 0x4, fixed_abs, tag = 'smem constant byte address 0x4 - core index']
  #allocation1 [shape = 'u32[144,128]{1,0:T(1,128)}', space=vmem, size = 0x12000, scoped, tag = 'internal scratch']
  #allocation2 [shape = 'f32[16,128]{1,0:T(8,128)}', space=vmem, size = 0x2000, scoped, tag = 'scratch operand']
  %s0 = inlined_call_operand.vmem [shape: f32[32,128], index: 0, kind: input, shape index: {}]
  %s1 = inlined_call_operand.vmem [shape: bf16[128,512], index: 1, kind: input, shape index: {}]
  %s2 = inlined_call_operand.vmem [shape: f32[1,512], index: 2, kind: input, shape index: {}]
  %s3 = inlined_call_operand.vmem [shape: bf16[128,512], index: 3, kind: input, shape index: {}]
  %s4 = inlined_call_operand.vmem [shape: bf16[512,512], index: 4, kind: input, shape index: {}]
  %s5 = inlined_call_operand.vmem [shape: f32[1,512], index: 5, kind: input, shape index: {}]
  %s6 = inlined_call_operand.vmem [shape: f32[32,512], index: 6, kind: output, shape index: {}]
  %s7 = sld [smem:[#allocation0]]
  $region222: #{autoencoder_forward.5} parent=0
    _
  %s9 = ssub.s32 1, %s7
  %s10 = scalar_select 0, %s9, %s7
  $region1: #{autoencoder_forward.5} parent=0
    #allocation3 [shape = 'u8[65536]{0}', space=vmem, size = 0x10000, scoped, tag = 'input window, operand 1']
    #allocation4 [shape = 'u8[65536]{0}', space=vmem, size = 0x10000, scoped, tag = 'input window, operand 3']
    #allocation5 [shape = 'u8[65536]{0}', space=vmem, size = 0x10000, scoped, tag = 'input window, operand 4']
    #allocation6 [shape = 'u8[16384]{0}', space=vmem, size = 0x4000, scoped, tag = 'output window, operand 0']
    loop: start=0, step=1, limit=34
    $region2: #{autoencoder_forward.5} parent=1 // loop_pre_header
      _
    $region3: #{autoencoder_forward.5} parent=1 // loop_header
      %s12 = sphi 0, %s16
      %p13 = scmp.ge.s32.totalorder %s12, 34
      %s19 = sphi 0, %s38
      %s20 = sphi 0, %s34
      %s21 = sphi 0, %s30
      %s22 = sphi 0, %s19
      %s23 = sphi 0, %s20
      %s24 = sphi 0, %s21
      %s25 = sphi 0, %s22
      %s26 = sphi 0, %s23
      %s27 = sphi 0, %s24
      %s41 = sphi 0, %s43
      %s44 = sphi 0, %s41
      %s45 = sphi 0, %s44
      %s61 = sphi 0, %s45
      %s67 = sphi 0, %s69
      %s70 = sphi 0, %s67
      %s71 = sphi 0, %s70
      %s87 = sphi 0, %s71
      %s93 = sphi 0, %s95
      %s96 = sphi 0, %s93
      %s97 = sphi 0, %s96
      %s113 = sphi 0, %s97
      %s119 = sphi 0, %s121
      %s122 = sphi 0, %s119
      %s123 = sphi 0, %s122
      %s139 = sphi 0, %s123
      %s147 = sphi 0, %s149
      %s150 = sphi 0, %s147
      %s151 = sphi 0, %s150
      %s167 = sphi 0, %s151
      %s173 = sphi 0, %s175
      %s176 = sphi 0, %s173
      %s177 = sphi 0, %s176
      %s193 = sphi 0, %s177
      %s201 = sphi 0, %s203
      %s204 = sphi 0, %s201
      %s205 = sphi 0, %s204
      %s221 = sphi 0, %s205
    $region4: #{autoencoder_forward.5} parent=1 // loop_header_branch
      %15 = sbr.rel (%p13) target = $region8
    $region5: #{autoencoder_forward.5} parent=1 // loop_body
      %s17 = ssub.s32 %s12, 1
      %s18 = ssub.s32 %s12, 2
      %s28 = sadd.s32 1, %s21
      %p29 = scmp.ge.s32.totalorder %s28, 4
      %s30 = scalar_select %p29, 0, %s28
      %s31 = sadd.s32 1, %s20
      %s32 = scalar_select %p29, %s31, %s20
      %p33 = scmp.ge.s32.totalorder %s32, 4
      %s34 = scalar_select %p33, 0, %s32
      %s35 = sadd.s32 1, %s19
      %s36 = scalar_select %p33, %s35, %s19
      %p37 = scmp.ge.s32.totalorder %s36, 2
      %s38 = scalar_select %p37, 0, %s36
      %s39 = ssub.s32 %s19, %s38
      %p40 = scmp.eq.s32.totalorder %s39, 0
      %s42 = sadd.s32 %s41, 1
      %s43 = scalar_select %p40, %s41, %s42
      %p46 = pneg %p40
      %p47 = scmp.eq.s32.totalorder %s12, 31
      %p48 = por %p46, %p47
      %p49 = scmp.ne.s32.totalorder %s41, %s44
      %p50 = scmp.eq.s32.totalorder %s12, 0
      %p51 = por %p49, %p50
      %p52 = scmp.ne.s32.totalorder %s41, %s44
      %p53 = scmp.eq.s32.totalorder %s17, 31
      %p54 = por %p52, %p53
      %p55 = scmp.ne.s32.totalorder %s44, %s45
      %p56 = scmp.eq.s32.totalorder %s17, 0
      %p57 = por %p55, %p56
      %p58 = scmp.ne.s32.totalorder %s44, %s45
      %p59 = scmp.eq.s32.totalorder %s18, 31
      %p60 = por %p58, %p59
      %p62 = scmp.ne.s32.totalorder %s45, %s61
      %p63 = scmp.eq.s32.totalorder %s18, 0
      %p64 = por %p62, %p63
      %s65 = ssub.s32 %s21, %s30
      %p66 = scmp.eq.s32.totalorder %s65, 0
      %s68 = sadd.s32 %s67, 1
      %s69 = scalar_select %p66, %s67, %s68
      %p72 = pneg %p66
      %p73 = scmp.eq.s32.totalorder %s12, 31
      %p74 = por %p72, %p73
      %p75 = scmp.ne.s32.totalorder %s67, %s70
      %p76 = scmp.eq.s32.totalorder %s12, 0
      %p77 = por %p75, %p76
      %p78 = scmp.ne.s32.totalorder %s67, %s70
      %p79 = scmp.eq.s32.totalorder %s17, 31
      %p80 = por %p78, %p79
      %p81 = scmp.ne.s32.totalorder %s70, %s71
      %p82 = scmp.eq.s32.totalorder %s17, 0
      %p83 = por %p81, %p82
      %p84 = scmp.ne.s32.totalorder %s70, %s71
      %p85 = scmp.eq.s32.totalorder %s18, 31
      %p86 = por %p84, %p85
      %p88 = scmp.ne.s32.totalorder %s71, %s87
      %p89 = scmp.eq.s32.totalorder %s18, 0
      %p90 = por %p88, %p89
      %s91 = ssub.s32 %s21, %s30
      %p92 = scmp.eq.s32.totalorder %s91, 0
      %s94 = sadd.s32 %s93, 1
      %s95 = scalar_select %p92, %s93, %s94
      %p98 = pneg %p92
      %p99 = scmp.eq.s32.totalorder %s12, 31
      %p100 = por %p98, %p99
      %p101 = scmp.ne.s32.totalorder %s93, %s96
      %p102 = scmp.eq.s32.totalorder %s12, 0
      %p103 = por %p101, %p102
      %p104 = scmp.ne.s32.totalorder %s93, %s96
      %p105 = scmp.eq.s32.totalorder %s17, 31
      %p106 = por %p104, %p105
      %p107 = scmp.ne.s32.totalorder %s96, %s97
      %p108 = scmp.eq.s32.totalorder %s17, 0
      %p109 = por %p107, %p108
      %p110 = scmp.ne.s32.totalorder %s96, %s97
      %p111 = scmp.eq.s32.totalorder %s18, 31
      %p112 = por %p110, %p111
      %p114 = scmp.ne.s32.totalorder %s97, %s113
      %p115 = scmp.eq.s32.totalorder %s18, 0
      %p116 = por %p114, %p115
      %s117 = ssub.s32 %s20, %s34
      %p118 = scmp.eq.s32.totalorder %s117, 0
      %s120 = sadd.s32 %s119, 1
      %s121 = scalar_select %p118, %s119, %s120
      %p124 = pneg %p118
      %p125 = scmp.eq.s32.totalorder %s12, 31
      %p126 = por %p124, %p125
      %p127 = scmp.ne.s32.totalorder %s119, %s122
      %p128 = scmp.eq.s32.totalorder %s12, 0
      %p129 = por %p127, %p128
      %p130 = scmp.ne.s32.totalorder %s119, %s122
      %p131 = scmp.eq.s32.totalorder %s17, 31
      %p132 = por %p130, %p131
      %p133 = scmp.ne.s32.totalorder %s122, %s123
      %p134 = scmp.eq.s32.totalorder %s17, 0
      %p135 = por %p133, %p134
      %p136 = scmp.ne.s32.totalorder %s122, %s123
      %p137 = scmp.eq.s32.totalorder %s18, 31
      %p138 = por %p136, %p137
      %p140 = scmp.ne.s32.totalorder %s123, %s139
      %p141 = scmp.eq.s32.totalorder %s18, 0
      %p142 = por %p140, %p141
      %s143 = ssub.s32 %s21, %s30
      %s144 = ssub.s32 %s20, %s34
      %s145 = sor.u32 %s143, %s144
      %p146 = scmp.eq.s32.totalorder %s145, 0
      %s148 = sadd.s32 %s147, 1
      %s149 = scalar_select %p146, %s147, %s148
      %p152 = pneg %p146
      %p153 = scmp.eq.s32.totalorder %s12, 31
      %p154 = por %p152, %p153
      %p155 = scmp.ne.s32.totalorder %s147, %s150
      %p156 = scmp.eq.s32.totalorder %s12, 0
      %p157 = por %p155, %p156
      %p158 = scmp.ne.s32.totalorder %s147, %s150
      %p159 = scmp.eq.s32.totalorder %s17, 31
      %p160 = por %p158, %p159
      %p161 = scmp.ne.s32.totalorder %s150, %s151
      %p162 = scmp.eq.s32.totalorder %s17, 0
      %p163 = por %p161, %p162
      %p164 = scmp.ne.s32.totalorder %s150, %s151
      %p165 = scmp.eq.s32.totalorder %s18, 31
      %p166 = por %p164, %p165
      %p168 = scmp.ne.s32.totalorder %s151, %s167
      %p169 = scmp.eq.s32.totalorder %s18, 0
      %p170 = por %p168, %p169
      %s171 = ssub.s32 %s20, %s34
      %p172 = scmp.eq.s32.totalorder %s171, 0
      %s174 = sadd.s32 %s173, 1
      %s175 = scalar_select %p172, %s173, %s174
      %p178 = pneg %p172
      %p179 = scmp.eq.s32.totalorder %s12, 31
      %p180 = por %p178, %p179
      %p181 = scmp.ne.s32.totalorder %s173, %s176
      %p182 = scmp.eq.s32.totalorder %s12, 0
      %p183 = por %p181, %p182
      %p184 = scmp.ne.s32.totalorder %s173, %s176
      %p185 = scmp.eq.s32.totalorder %s17, 31
      %p186 = por %p184, %p185
      %p187 = scmp.ne.s32.totalorder %s176, %s177
      %p188 = scmp.eq.s32.totalorder %s17, 0
      %p189 = por %p187, %p188
      %p190 = scmp.ne.s32.totalorder %s176, %s177
      %p191 = scmp.eq.s32.totalorder %s18, 31
      %p192 = por %p190, %p191
      %p194 = scmp.ne.s32.totalorder %s177, %s193
      %p195 = scmp.eq.s32.totalorder %s18, 0
      %p196 = por %p194, %p195
      %s197 = ssub.s32 %s19, %s38
      %s198 = ssub.s32 %s20, %s34
      %s199 = sor.u32 %s197, %s198
      %p200 = scmp.eq.s32.totalorder %s199, 0
      %s202 = sadd.s32 %s201, 1
      %s203 = scalar_select %p200, %s201, %s202
      %p206 = pneg %p200
      %p207 = scmp.eq.s32.totalorder %s12, 31
      %p208 = por %p206, %p207
      %p209 = scmp.ne.s32.totalorder %s201, %s204
      %p210 = scmp.eq.s32.totalorder %s12, 0
      %p211 = por %p209, %p210
      %p212 = scmp.ne.s32.totalorder %s201, %s204
      %p213 = scmp.eq.s32.totalorder %s17, 31
      %p214 = por %p212, %p213
      %p215 = scmp.ne.s32.totalorder %s204, %s205
      %p216 = scmp.eq.s32.totalorder %s17, 0
      %p217 = por %p215, %p216
      %p218 = scmp.ne.s32.totalorder %s204, %s205
      %p219 = scmp.eq.s32.totalorder %s18, 31
      %p220 = por %p218, %p219
      %p222 = scmp.ne.s32.totalorder %s205, %s221
      %p223 = scmp.eq.s32.totalorder %s18, 0
      %p224 = por %p222, %p223
      %p225 = scmp.le.s32.totalorder 1, %s12
      %p226 = scmp.lt.s32.totalorder %s12, 33
      %p227 = pnand %p225, %p226
      %p228 = pneg %p227
      // Predicated region
      $region9: #{autoencoder_forward.5} parent=5 // pred_check
        _
      $region10: #{autoencoder_forward.5} parent=5 // pred_check_branch
        %230 = sbr.rel (%p227) target = $region12
      $region11: #{autoencoder_forward.5} parent=5 // pred_region
        %s231 = ssub.s32 %s12, 1
      $region12: #{autoencoder_forward.5} parent=5 // pred_fallthru
        _
      %p232 = scmp.lt.s32.totalorder %s12, 32
      // Predicated region
      $region13: #{autoencoder_forward.5} parent=5 // pred_check
        %p233 = pneg %p232
      $region14: #{autoencoder_forward.5} parent=5 // pred_check_branch
        %235 = sbr.rel (%p233) target = $region16
      $region15: #{autoencoder_forward.5} parent=5 // pred_region
        // Predicated region
        $region17: #{autoencoder_forward.5} parent=15 // pred_check
          %p236 = pneg %p51
        $region18: #{autoencoder_forward.5} parent=15 // pred_check_branch
          %238 = sbr.rel (%p236) target = $region20
        $region19: #{autoencoder_forward.5} parent=15 // pred_region
          %s239 = smul.u32 2, %s19
          %p240 = scmp.lt.s32.totalorder %s239, 3
          %s241 = scalar_select %p240, %s239, 3
          %s242 = smul.addr %s241, 8
          %s243 = scalar_lea.vmem %s0, %s242
          %s244 = smul.u32 2, %s19
        $region20: #{autoencoder_forward.5} parent=15 // pred_fallthru
          _
        // Predicated region
        $region21: #{autoencoder_forward.5} parent=15 // pred_check
          %p245 = pneg %p77
        $region22: #{autoencoder_forward.5} parent=15 // pred_check_branch
          %247 = sbr.rel (%p245) target = $region24
        $region23: #{autoencoder_forward.5} parent=15 // pred_region
          %s248 = sand.u32 %s67, 1
          %s249 = sand.u32 %s67, 1
          %s250 = smul.addr %s249, 64
          %s251 = scalar_lea.vmem [#allocation3], %s250
          %s252 = smul.addr %s21, 4
          %s253 = scalar_lea.vmem %s1, %s252
          // Predicated region
          $region25: #{autoencoder_forward.5} parent=23 // pred_check
            _
          $region26: #{autoencoder_forward.5} parent=23 // pred_check_branch
            %255 = sbr.rel (0) target = $region28
          $region27: #{autoencoder_forward.5} parent=23 // pred_region
            // Predicated region
            $region29: #{autoencoder_forward.5} parent=27 // pred_check
              _
            $region30: #{autoencoder_forward.5} parent=27 // pred_check_branch
              %257 = sbr.rel target = $region32
            $region31: #{autoencoder_forward.5} parent=27 // pred_region
              // Predicated region
              $region44: #{autoencoder_forward.5} parent=31 // pred_check
                _
              $region45: #{autoencoder_forward.5} parent=31 // pred_check_branch
                %302 = sbr.rel (0) target = $region47
              $region46: #{autoencoder_forward.5} parent=31 // pred_region
                loop: start=0, step=1, limit=1
                $region48: #{autoencoder_forward.5} parent=46 // loop_pre_header
                  _
                $region49: #{autoencoder_forward.5} parent=46 // loop_header
                  %s304 = sphi 0, %s308
                  %p305 = scmp.ge.s32.totalorder %s304, 1
                  %s309 = sphi %s253, %s253
                  %s310 = sphi %s251, %s251
                $region50: #{autoencoder_forward.5} parent=46 // loop_header_branch
                  %307 = sbr.rel (%p305) target = $region54
                $region51: #{autoencoder_forward.5} parent=46 // loop_body
                  _
                $region52: #{autoencoder_forward.5} parent=46 // loop_footer
                  %s308 = sadd.s32 1, %s304
                $region53: #{autoencoder_forward.5} parent=46 // loop_footer_branch
                  %303 = sbr.rel target = $region49
                $region54: #{autoencoder_forward.5} parent=46 // loop_exit
                  _
                loop: start=0, step=1, limit=1
                $region55: #{autoencoder_forward.5} parent=46 // loop_pre_header
                  _
                $region56: #{autoencoder_forward.5} parent=46 // loop_header
                  %s313 = sphi 0, %s317
                  %p314 = scmp.ge.s32.totalorder %s313, 1
                  %s318 = sphi %s253, %s253
                  %s319 = sphi %s251, %s251
                $region57: #{autoencoder_forward.5} parent=46 // loop_header_branch
                  %316 = sbr.rel (%p314) target = $region61
                $region58: #{autoencoder_forward.5} parent=46 // loop_body
                  %v320 = vld [vmem:[%s318] sm:$0xf]
                  %321 = vst [vmem:[%s319] sm:$0xf] %v320
                  %v322 = vld [vmem:[%s318 + $0x10] sm:$0xf]
                  %323 = vst [vmem:[%s319 + $0x4] sm:$0xf] %v322
                  %v324 = vld [vmem:[%s318 + $0x20] sm:$0xf]
                  %325 = vst [vmem:[%s319 + $0x8] sm:$0xf] %v324
                  %v326 = vld [vmem:[%s318 + $0x30] sm:$0xf]
                  %327 = vst [vmem:[%s319 + $0xc] sm:$0xf] %v326
                  %v328 = vld [vmem:[%s318 + $0x40] sm:$0xf]
                  %329 = vst [vmem:[%s319 + $0x10] sm:$0xf] %v328
                  %v330 = vld [vmem:[%s318 + $0x50] sm:$0xf]
                  %331 = vst [vmem:[%s319 + $0x14] sm:$0xf] %v330
                  %v332 = vld [vmem:[%s318 + $0x60] sm:$0xf]
                  %333 = vst [vmem:[%s319 + $0x18] sm:$0xf] %v332
                  %v334 = vld [vmem:[%s318 + $0x70] sm:$0xf]
                  %335 = vst [vmem:[%s319 + $0x1c] sm:$0xf] %v334
                  %v336 = vld [vmem:[%s318 + $0x80] sm:$0xf]
                  %337 = vst [vmem:[%s319 + $0x20] sm:$0xf] %v336
                  %v338 = vld [vmem:[%s318 + $0x90] sm:$0xf]
                  %339 = vst [vmem:[%s319 + $0x24] sm:$0xf] %v338
                  %v340 = vld [vmem:[%s318 + $0xa0] sm:$0xf]
                  %341 = vst [vmem:[%s319 + $0x28] sm:$0xf] %v340
                  %v342 = vld [vmem:[%s318 + $0xb0] sm:$0xf]
                  %343 = vst [vmem:[%s319 + $0x2c] sm:$0xf] %v342
                  %v344 = vld [vmem:[%s318 + $0xc0] sm:$0xf]
                  %345 = vst [vmem:[%s319 + $0x30] sm:$0xf] %v344
                  %v346 = vld [vmem:[%s318 + $0xd0] sm:$0xf]
                  %347 = vst [vmem:[%s319 + $0x34] sm:$0xf] %v346
                  %v348 = vld [vmem:[%s318 + $0xe0] sm:$0xf]
                  %349 = vst [vmem:[%s319 + $0x38] sm:$0xf] %v348
                  %v350 = vld [vmem:[%s318 + $0xf0] sm:$0xf]
                  %351 = vst [vmem:[%s319 + $0x3c] sm:$0xf] %v350
                $region59: #{autoencoder_forward.5} parent=46 // loop_footer
                  %s317 = sadd.s32 1, %s313
                $region60: #{autoencoder_forward.5} parent=46 // loop_footer_branch
                  %312 = sbr.rel target = $region56
                $region61: #{autoencoder_forward.5} parent=46 // loop_exit
                  _
              $region47: #{autoencoder_forward.5} parent=31 // pred_fallthru
                _
            $region32: #{autoencoder_forward.5} parent=27 // pred_fallthru
              _
            // Predicated region
            $region33: #{autoencoder_forward.5} parent=27 // pred_check
              _
            $region34: #{autoencoder_forward.5} parent=27 // pred_check_branch
              %259 = sbr.rel (0) target = $region36
            $region35: #{autoencoder_forward.5} parent=27 // pred_region
              loop: start=0, step=1, limit=1
              $region37: #{autoencoder_forward.5} parent=35 // loop_pre_header
                _
              $region38: #{autoencoder_forward.5} parent=35 // loop_header
                %s262 = sphi 0, %s266
                %p263 = scmp.ge.s32.totalorder %s262, 1
                %s267 = sphi %s253, %s253
                %s268 = sphi %s251, %s251
              $region39: #{autoencoder_forward.5} parent=35 // loop_header_branch
                %265 = sbr.rel (%p263) target = $region43
              $region40: #{autoencoder_forward.5} parent=35 // loop_body
                %v269 = vld [vmem:[%s267] sm:$0xf]
                %270 = vst [vmem:[%s268] sm:$0xf] %v269
                %v271 = vld [vmem:[%s267 + $0x10] sm:$0xf]
                %272 = vst [vmem:[%s268 + $0x4] sm:$0xf] %v271
                %v273 = vld [vmem:[%s267 + $0x20] sm:$0xf]
                %274 = vst [vmem:[%s268 + $0x8] sm:$0xf] %v273
                %v275 = vld [vmem:[%s267 + $0x30] sm:$0xf]
                %276 = vst [vmem:[%s268 + $0xc] sm:$0xf] %v275
                %v277 = vld [vmem:[%s267 + $0x40] sm:$0xf]
                %278 = vst [vmem:[%s268 + $0x10] sm:$0xf] %v277
                %v279 = vld [vmem:[%s267 + $0x50] sm:$0xf]
                %280 = vst [vmem:[%s268 + $0x14] sm:$0xf] %v279
                %v281 = vld [vmem:[%s267 + $0x60] sm:$0xf]
                %282 = vst [vmem:[%s268 + $0x18] sm:$0xf] %v281
                %v283 = vld [vmem:[%s267 + $0x70] sm:$0xf]
                %284 = vst [vmem:[%s268 + $0x1c] sm:$0xf] %v283
                %v285 = vld [vmem:[%s267 + $0x80] sm:$0xf]
                %286 = vst [vmem:[%s268 + $0x20] sm:$0xf] %v285
                %v287 = vld [vmem:[%s267 + $0x90] sm:$0xf]
                %288 = vst [vmem:[%s268 + $0x24] sm:$0xf] %v287
                %v289 = vld [vmem:[%s267 + $0xa0] sm:$0xf]
                %290 = vst [vmem:[%s268 + $0x28] sm:$0xf] %v289
                %v291 = vld [vmem:[%s267 + $0xb0] sm:$0xf]
                %292 = vst [vmem:[%s268 + $0x2c] sm:$0xf] %v291
                %v293 = vld [vmem:[%s267 + $0xc0] sm:$0xf]
                %294 = vst [vmem:[%s268 + $0x30] sm:$0xf] %v293
                %v295 = vld [vmem:[%s267 + $0xd0] sm:$0xf]
                %296 = vst [vmem:[%s268 + $0x34] sm:$0xf] %v295
                %v297 = vld [vmem:[%s267 + $0xe0] sm:$0xf]
                %298 = vst [vmem:[%s268 + $0x38] sm:$0xf] %v297
                %v299 = vld [vmem:[%s267 + $0xf0] sm:$0xf]
                %300 = vst [vmem:[%s268 + $0x3c] sm:$0xf] %v299
              $region41: #{autoencoder_forward.5} parent=35 // loop_footer
                %s266 = sadd.s32 1, %s262
              $region42: #{autoencoder_forward.5} parent=35 // loop_footer_branch
                %261 = sbr.rel target = $region38
              $region43: #{autoencoder_forward.5} parent=35 // loop_exit
                _
            $region36: #{autoencoder_forward.5} parent=27 // pred_fallthru
              _
          $region28: #{autoencoder_forward.5} parent=23 // pred_fallthru
            _
          %352 = vnop
        $region24: #{autoencoder_forward.5} parent=15 // pred_fallthru
          _
        // Predicated region
        $region62: #{autoencoder_forward.5} parent=15 // pred_check
          %p353 = pneg %p103
        $region63: #{autoencoder_forward.5} parent=15 // pred_check_branch
          %355 = sbr.rel (%p353) target = $region65
        $region64: #{autoencoder_forward.5} parent=15 // pred_region
          %p356 = scmp.lt.s32.totalorder %s21, 3
          %s357 = scalar_select %p356, %s21, 3
          %s358 = scalar_lea.vmem %s2, %s357
        $region65: #{autoencoder_forward.5} parent=15 // pred_fallthru
          _
        // Predicated region
        $region66: #{autoencoder_forward.5} parent=15 // pred_check
          %p359 = pneg %p129
        $region67: #{autoencoder_forward.5} parent=15 // pred_check_branch
          %361 = sbr.rel (%p359) target = $region69
        $region68: #{autoencoder_forward.5} parent=15 // pred_region
          %s362 = sand.u32 %s119, 1
          %s363 = sand.u32 %s119, 1
          %s364 = smul.addr %s363, 64
          %s365 = scalar_lea.vmem [#allocation4], %s364
          %s366 = smul.addr %s20, 4
          %s367 = scalar_lea.vmem %s3, %s366
          // Predicated region
          $region70: #{autoencoder_forward.5} parent=68 // pred_check
            _
          $region71: #{autoencoder_forward.5} parent=68 // pred_check_branch
            %369 = sbr.rel (0) target = $region73
          $region72: #{autoencoder_forward.5} parent=68 // pred_region
            // Predicated region
            $region74: #{autoencoder_forward.5} parent=72 // pred_check
              _
            $region75: #{autoencoder_forward.5} parent=72 // pred_check_branch
              %371 = sbr.rel target = $region77
            $region76: #{autoencoder_forward.5} parent=72 // pred_region
              // Predicated region
              $region89: #{autoencoder_forward.5} parent=76 // pred_check
                _
              $region90: #{autoencoder_forward.5} parent=76 // pred_check_branch
                %416 = sbr.rel (0) target = $region92
              $region91: #{autoencoder_forward.5} parent=76 // pred_region
                loop: start=0, step=1, limit=1
                $region93: #{autoencoder_forward.5} parent=91 // loop_pre_header
                  _
                $region94: #{autoencoder_forward.5} parent=91 // loop_header
                  %s418 = sphi 0, %s422
                  %p419 = scmp.ge.s32.totalorder %s418, 1
                  %s423 = sphi %s367, %s367
                  %s424 = sphi %s365, %s365
                $region95: #{autoencoder_forward.5} parent=91 // loop_header_branch
                  %421 = sbr.rel (%p419) target = $region99
                $region96: #{autoencoder_forward.5} parent=91 // loop_body
                  _
                $region97: #{autoencoder_forward.5} parent=91 // loop_footer
                  %s422 = sadd.s32 1, %s418
                $region98: #{autoencoder_forward.5} parent=91 // loop_footer_branch
                  %417 = sbr.rel target = $region94
                $region99: #{autoencoder_forward.5} parent=91 // loop_exit
                  _
                loop: start=0, step=1, limit=1
                $region100: #{autoencoder_forward.5} parent=91 // loop_pre_header
                  _
                $region101: #{autoencoder_forward.5} parent=91 // loop_header
                  %s427 = sphi 0, %s431
                  %p428 = scmp.ge.s32.totalorder %s427, 1
                  %s432 = sphi %s367, %s367
                  %s433 = sphi %s365, %s365
                $region102: #{autoencoder_forward.5} parent=91 // loop_header_branch
                  %430 = sbr.rel (%p428) target = $region106
                $region103: #{autoencoder_forward.5} parent=91 // loop_body
                  %v434 = vld [vmem:[%s432] sm:$0xf]
                  %435 = vst [vmem:[%s433] sm:$0xf] %v434
                  %v436 = vld [vmem:[%s432 + $0x10] sm:$0xf]
                  %437 = vst [vmem:[%s433 + $0x4] sm:$0xf] %v436
                  %v438 = vld [vmem:[%s432 + $0x20] sm:$0xf]
                  %439 = vst [vmem:[%s433 + $0x8] sm:$0xf] %v438
                  %v440 = vld [vmem:[%s432 + $0x30] sm:$0xf]
                  %441 = vst [vmem:[%s433 + $0xc] sm:$0xf] %v440
                  %v442 = vld [vmem:[%s432 + $0x40] sm:$0xf]
                  %443 = vst [vmem:[%s433 + $0x10] sm:$0xf] %v442
                  %v444 = vld [vmem:[%s432 + $0x50] sm:$0xf]
                  %445 = vst [vmem:[%s433 + $0x14] sm:$0xf] %v444
                  %v446 = vld [vmem:[%s432 + $0x60] sm:$0xf]
                  %447 = vst [vmem:[%s433 + $0x18] sm:$0xf] %v446
                  %v448 = vld [vmem:[%s432 + $0x70] sm:$0xf]
                  %449 = vst [vmem:[%s433 + $0x1c] sm:$0xf] %v448
                  %v450 = vld [vmem:[%s432 + $0x80] sm:$0xf]
                  %451 = vst [vmem:[%s433 + $0x20] sm:$0xf] %v450
                  %v452 = vld [vmem:[%s432 + $0x90] sm:$0xf]
                  %453 = vst [vmem:[%s433 + $0x24] sm:$0xf] %v452
                  %v454 = vld [vmem:[%s432 + $0xa0] sm:$0xf]
                  %455 = vst [vmem:[%s433 + $0x28] sm:$0xf] %v454
                  %v456 = vld [vmem:[%s432 + $0xb0] sm:$0xf]
                  %457 = vst [vmem:[%s433 + $0x2c] sm:$0xf] %v456
                  %v458 = vld [vmem:[%s432 + $0xc0] sm:$0xf]
                  %459 = vst [vmem:[%s433 + $0x30] sm:$0xf] %v458
                  %v460 = vld [vmem:[%s432 + $0xd0] sm:$0xf]
                  %461 = vst [vmem:[%s433 + $0x34] sm:$0xf] %v460
                  %v462 = vld [vmem:[%s432 + $0xe0] sm:$0xf]
                  %463 = vst [vmem:[%s433 + $0x38] sm:$0xf] %v462
                  %v464 = vld [vmem:[%s432 + $0xf0] sm:$0xf]
                  %465 = vst [vmem:[%s433 + $0x3c] sm:$0xf] %v464
                $region104: #{autoencoder_forward.5} parent=91 // loop_footer
                  %s431 = sadd.s32 1, %s427
                $region105: #{autoencoder_forward.5} parent=91 // loop_footer_branch
                  %426 = sbr.rel target = $region101
                $region106: #{autoencoder_forward.5} parent=91 // loop_exit
                  _
              $region92: #{autoencoder_forward.5} parent=76 // pred_fallthru
                _
            $region77: #{autoencoder_forward.5} parent=72 // pred_fallthru
              _
            // Predicated region
            $region78: #{autoencoder_forward.5} parent=72 // pred_check
              _
            $region79: #{autoencoder_forward.5} parent=72 // pred_check_branch
              %373 = sbr.rel (0) target = $region81
            $region80: #{autoencoder_forward.5} parent=72 // pred_region
              loop: start=0, step=1, limit=1
              $region82: #{autoencoder_forward.5} parent=80 // loop_pre_header
                _
              $region83: #{autoencoder_forward.5} parent=80 // loop_header
                %s376 = sphi 0, %s380
                %p377 = scmp.ge.s32.totalorder %s376, 1
                %s381 = sphi %s367, %s367
                %s382 = sphi %s365, %s365
              $region84: #{autoencoder_forward.5} parent=80 // loop_header_branch
                %379 = sbr.rel (%p377) target = $region88
              $region85: #{autoencoder_forward.5} parent=80 // loop_body
                %v383 = vld [vmem:[%s381] sm:$0xf]
                %384 = vst [vmem:[%s382] sm:$0xf] %v383
                %v385 = vld [vmem:[%s381 + $0x10] sm:$0xf]
                %386 = vst [vmem:[%s382 + $0x4] sm:$0xf] %v385
                %v387 = vld [vmem:[%s381 + $0x20] sm:$0xf]
                %388 = vst [vmem:[%s382 + $0x8] sm:$0xf] %v387
                %v389 = vld [vmem:[%s381 + $0x30] sm:$0xf]
                %390 = vst [vmem:[%s382 + $0xc] sm:$0xf] %v389
                %v391 = vld [vmem:[%s381 + $0x40] sm:$0xf]
                %392 = vst [vmem:[%s382 + $0x10] sm:$0xf] %v391
                %v393 = vld [vmem:[%s381 + $0x50] sm:$0xf]
                %394 = vst [vmem:[%s382 + $0x14] sm:$0xf] %v393
                %v395 = vld [vmem:[%s381 + $0x60] sm:$0xf]
                %396 = vst [vmem:[%s382 + $0x18] sm:$0xf] %v395
                %v397 = vld [vmem:[%s381 + $0x70] sm:$0xf]
                %398 = vst [vmem:[%s382 + $0x1c] sm:$0xf] %v397
                %v399 = vld [vmem:[%s381 + $0x80] sm:$0xf]
                %400 = vst [vmem:[%s382 + $0x20] sm:$0xf] %v399
                %v401 = vld [vmem:[%s381 + $0x90] sm:$0xf]
                %402 = vst [vmem:[%s382 + $0x24] sm:$0xf] %v401
                %v403 = vld [vmem:[%s381 + $0xa0] sm:$0xf]
                %404 = vst [vmem:[%s382 + $0x28] sm:$0xf] %v403
                %v405 = vld [vmem:[%s381 + $0xb0] sm:$0xf]
                %406 = vst [vmem:[%s382 + $0x2c] sm:$0xf] %v405
                %v407 = vld [vmem:[%s381 + $0xc0] sm:$0xf]
                %408 = vst [vmem:[%s382 + $0x30] sm:$0xf] %v407
                %v409 = vld [vmem:[%s381 + $0xd0] sm:$0xf]
                %410 = vst [vmem:[%s382 + $0x34] sm:$0xf] %v409
                %v411 = vld [vmem:[%s381 + $0xe0] sm:$0xf]
                %412 = vst [vmem:[%s382 + $0x38] sm:$0xf] %v411
                %v413 = vld [vmem:[%s381 + $0xf0] sm:$0xf]
                %414 = vst [vmem:[%s382 + $0x3c] sm:$0xf] %v413
              $region86: #{autoencoder_forward.5} parent=80 // loop_footer
                %s380 = sadd.s32 1, %s376
              $region87: #{autoencoder_forward.5} parent=80 // loop_footer_branch
                %375 = sbr.rel target = $region83
              $region88: #{autoencoder_forward.5} parent=80 // loop_exit
                _
            $region81: #{autoencoder_forward.5} parent=72 // pred_fallthru
              _
          $region73: #{autoencoder_forward.5} parent=68 // pred_fallthru
            _
          %466 = vnop
        $region69: #{autoencoder_forward.5} parent=15 // pred_fallthru
          _
        // Predicated region
        $region107: #{autoencoder_forward.5} parent=15 // pred_check
          %p467 = pneg %p157
        $region108: #{autoencoder_forward.5} parent=15 // pred_check_branch
          %469 = sbr.rel (%p467) target = $region110
        $region109: #{autoencoder_forward.5} parent=15 // pred_region
          %s470 = sand.u32 %s147, 1
          %s471 = sand.u32 %s147, 1
          %s472 = smul.addr %s471, 64
          %s473 = scalar_lea.vmem [#allocation5], %s472
          %s474 = smul.u32 16, %s21
          %s475 = smul.addr %s474, 4
          %s476 = sadd.s32 %s20, %s475
          %s477 = smul.addr %s476, 4
          %s478 = scalar_lea.vmem %s4, %s477
          // Predicated region
          $region111: #{autoencoder_forward.5} parent=109 // pred_check
            _
          $region112: #{autoencoder_forward.5} parent=109 // pred_check_branch
            %480 = sbr.rel (0) target = $region114
          $region113: #{autoencoder_forward.5} parent=109 // pred_region
            // Predicated region
            $region115: #{autoencoder_forward.5} parent=113 // pred_check
              _
            $region116: #{autoencoder_forward.5} parent=113 // pred_check_branch
              %482 = sbr.rel target = $region118
            $region117: #{autoencoder_forward.5} parent=113 // pred_region
              // Predicated region
              $region130: #{autoencoder_forward.5} parent=117 // pred_check
                _
              $region131: #{autoencoder_forward.5} parent=117 // pred_check_branch
                %527 = sbr.rel (0) target = $region133
              $region132: #{autoencoder_forward.5} parent=117 // pred_region
                loop: start=0, step=1, limit=1
                $region134: #{autoencoder_forward.5} parent=132 // loop_pre_header
                  _
                $region135: #{autoencoder_forward.5} parent=132 // loop_header
                  %s529 = sphi 0, %s533
                  %p530 = scmp.ge.s32.totalorder %s529, 1
                  %s534 = sphi %s478, %s478
                  %s535 = sphi %s473, %s473
                $region136: #{autoencoder_forward.5} parent=132 // loop_header_branch
                  %532 = sbr.rel (%p530) target = $region140
                $region137: #{autoencoder_forward.5} parent=132 // loop_body
                  _
                $region138: #{autoencoder_forward.5} parent=132 // loop_footer
                  %s533 = sadd.s32 1, %s529
                $region139: #{autoencoder_forward.5} parent=132 // loop_footer_branch
                  %528 = sbr.rel target = $region135
                $region140: #{autoencoder_forward.5} parent=132 // loop_exit
                  _
                loop: start=0, step=1, limit=1
                $region141: #{autoencoder_forward.5} parent=132 // loop_pre_header
                  _
                $region142: #{autoencoder_forward.5} parent=132 // loop_header
                  %s538 = sphi 0, %s542
                  %p539 = scmp.ge.s32.totalorder %s538, 1
                  %s543 = sphi %s478, %s478
                  %s544 = sphi %s473, %s473
                $region143: #{autoencoder_forward.5} parent=132 // loop_header_branch
                  %541 = sbr.rel (%p539) target = $region147
                $region144: #{autoencoder_forward.5} parent=132 // loop_body
                  %v545 = vld [vmem:[%s543] sm:$0xf]
                  %546 = vst [vmem:[%s544] sm:$0xf] %v545
                  %v547 = vld [vmem:[%s543 + $0x10] sm:$0xf]
                  %548 = vst [vmem:[%s544 + $0x4] sm:$0xf] %v547
                  %v549 = vld [vmem:[%s543 + $0x20] sm:$0xf]
                  %550 = vst [vmem:[%s544 + $0x8] sm:$0xf] %v549
                  %v551 = vld [vmem:[%s543 + $0x30] sm:$0xf]
                  %552 = vst [vmem:[%s544 + $0xc] sm:$0xf] %v551
                  %v553 = vld [vmem:[%s543 + $0x40] sm:$0xf]
                  %554 = vst [vmem:[%s544 + $0x10] sm:$0xf] %v553
                  %v555 = vld [vmem:[%s543 + $0x50] sm:$0xf]
                  %556 = vst [vmem:[%s544 + $0x14] sm:$0xf] %v555
                  %v557 = vld [vmem:[%s543 + $0x60] sm:$0xf]
                  %558 = vst [vmem:[%s544 + $0x18] sm:$0xf] %v557
                  %v559 = vld [vmem:[%s543 + $0x70] sm:$0xf]
                  %560 = vst [vmem:[%s544 + $0x1c] sm:$0xf] %v559
                  %v561 = vld [vmem:[%s543 + $0x80] sm:$0xf]
                  %562 = vst [vmem:[%s544 + $0x20] sm:$0xf] %v561
                  %v563 = vld [vmem:[%s543 + $0x90] sm:$0xf]
                  %564 = vst [vmem:[%s544 + $0x24] sm:$0xf] %v563
                  %v565 = vld [vmem:[%s543 + $0xa0] sm:$0xf]
                  %566 = vst [vmem:[%s544 + $0x28] sm:$0xf] %v565
                  %v567 = vld [vmem:[%s543 + $0xb0] sm:$0xf]
                  %568 = vst [vmem:[%s544 + $0x2c] sm:$0xf] %v567
                  %v569 = vld [vmem:[%s543 + $0xc0] sm:$0xf]
                  %570 = vst [vmem:[%s544 + $0x30] sm:$0xf] %v569
                  %v571 = vld [vmem:[%s543 + $0xd0] sm:$0xf]
                  %572 = vst [vmem:[%s544 + $0x34] sm:$0xf] %v571
                  %v573 = vld [vmem:[%s543 + $0xe0] sm:$0xf]
                  %574 = vst [vmem:[%s544 + $0x38] sm:$0xf] %v573
                  %v575 = vld [vmem:[%s543 + $0xf0] sm:$0xf]
                  %576 = vst [vmem:[%s544 + $0x3c] sm:$0xf] %v575
                $region145: #{autoencoder_forward.5} parent=132 // loop_footer
                  %s542 = sadd.s32 1, %s538
                $region146: #{autoencoder_forward.5} parent=132 // loop_footer_branch
                  %537 = sbr.rel target = $region142
                $region147: #{autoencoder_forward.5} parent=132 // loop_exit
                  _
              $region133: #{autoencoder_forward.5} parent=117 // pred_fallthru
                _
            $region118: #{autoencoder_forward.5} parent=113 // pred_fallthru
              _
            // Predicated region
            $region119: #{autoencoder_forward.5} parent=113 // pred_check
              _
            $region120: #{autoencoder_forward.5} parent=113 // pred_check_branch
              %484 = sbr.rel (0) target = $region122
            $region121: #{autoencoder_forward.5} parent=113 // pred_region
              loop: start=0, step=1, limit=1
              $region123: #{autoencoder_forward.5} parent=121 // loop_pre_header
                _
              $region124: #{autoencoder_forward.5} parent=121 // loop_header
                %s487 = sphi 0, %s491
                %p488 = scmp.ge.s32.totalorder %s487, 1
                %s492 = sphi %s478, %s478
                %s493 = sphi %s473, %s473
              $region125: #{autoencoder_forward.5} parent=121 // loop_header_branch
                %490 = sbr.rel (%p488) target = $region129
              $region126: #{autoencoder_forward.5} parent=121 // loop_body
                %v494 = vld [vmem:[%s492] sm:$0xf]
                %495 = vst [vmem:[%s493] sm:$0xf] %v494
                %v496 = vld [vmem:[%s492 + $0x10] sm:$0xf]
                %497 = vst [vmem:[%s493 + $0x4] sm:$0xf] %v496
                %v498 = vld [vmem:[%s492 + $0x20] sm:$0xf]
                %499 = vst [vmem:[%s493 + $0x8] sm:$0xf] %v498
                %v500 = vld [vmem:[%s492 + $0x30] sm:$0xf]
                %501 = vst [vmem:[%s493 + $0xc] sm:$0xf] %v500
                %v502 = vld [vmem:[%s492 + $0x40] sm:$0xf]
                %503 = vst [vmem:[%s493 + $0x10] sm:$0xf] %v502
                %v504 = vld [vmem:[%s492 + $0x50] sm:$0xf]
                %505 = vst [vmem:[%s493 + $0x14] sm:$0xf] %v504
                %v506 = vld [vmem:[%s492 + $0x60] sm:$0xf]
                %507 = vst [vmem:[%s493 + $0x18] sm:$0xf] %v506
                %v508 = vld [vmem:[%s492 + $0x70] sm:$0xf]
                %509 = vst [vmem:[%s493 + $0x1c] sm:$0xf] %v508
                %v510 = vld [vmem:[%s492 + $0x80] sm:$0xf]
                %511 = vst [vmem:[%s493 + $0x20] sm:$0xf] %v510
                %v512 = vld [vmem:[%s492 + $0x90] sm:$0xf]
                %513 = vst [vmem:[%s493 + $0x24] sm:$0xf] %v512
                %v514 = vld [vmem:[%s492 + $0xa0] sm:$0xf]
                %515 = vst [vmem:[%s493 + $0x28] sm:$0xf] %v514
                %v516 = vld [vmem:[%s492 + $0xb0] sm:$0xf]
                %517 = vst [vmem:[%s493 + $0x2c] sm:$0xf] %v516
                %v518 = vld [vmem:[%s492 + $0xc0] sm:$0xf]
                %519 = vst [vmem:[%s493 + $0x30] sm:$0xf] %v518
                %v520 = vld [vmem:[%s492 + $0xd0] sm:$0xf]
                %521 = vst [vmem:[%s493 + $0x34] sm:$0xf] %v520
                %v522 = vld [vmem:[%s492 + $0xe0] sm:$0xf]
                %523 = vst [vmem:[%s493 + $0x38] sm:$0xf] %v522
                %v524 = vld [vmem:[%s492 + $0xf0] sm:$0xf]
                %525 = vst [vmem:[%s493 + $0x3c] sm:$0xf] %v524
              $region127: #{autoencoder_forward.5} parent=121 // loop_footer
                %s491 = sadd.s32 1, %s487
              $region128: #{autoencoder_forward.5} parent=121 // loop_footer_branch
                %486 = sbr.rel target = $region124
              $region129: #{autoencoder_forward.5} parent=121 // loop_exit
                _
            $region122: #{autoencoder_forward.5} parent=113 // pred_fallthru
              _
          $region114: #{autoencoder_forward.5} parent=109 // pred_fallthru
            _
          %577 = vnop
        $region110: #{autoencoder_forward.5} parent=15 // pred_fallthru
          _
        // Predicated region
        $region148: #{autoencoder_forward.5} parent=15 // pred_check
          %p578 = pneg %p183
        $region149: #{autoencoder_forward.5} parent=15 // pred_check_branch
          %580 = sbr.rel (%p578) target = $region151
        $region150: #{autoencoder_forward.5} parent=15 // pred_region
          %p581 = scmp.lt.s32.totalorder %s20, 3
          %s582 = scalar_select %p581, %s20, 3
          %s583 = scalar_lea.vmem %s5, %s582
        $region151: #{autoencoder_forward.5} parent=15 // pred_fallthru
          _
      $region16: #{autoencoder_forward.5} parent=5 // pred_fallthru
        _
      %p584 = scmp.le.s32.totalorder 1, %s12
      %p585 = scmp.lt.s32.totalorder %s12, 33
      %p586 = pnand %p584, %p585
      %p587 = pneg %p586
      // Predicated region
      $region152: #{autoencoder_forward.5} parent=5 // pred_check
        _
      $region153: #{autoencoder_forward.5} parent=5 // pred_check_branch
        %589 = sbr.rel (%p586) target = $region155
      $region154: #{autoencoder_forward.5} parent=5 // pred_region
        %s590 = ssub.s32 %s12, 1
        %s591 = sand.u32 %s70, 1
        %s592 = sand.u32 %s70, 1
        %s593 = smul.addr %s592, 64
        %s594 = scalar_lea.vmem [#allocation3], %s593
        // Predicated region
        $region156: #{autoencoder_forward.5} parent=154 // pred_check
          %p595 = pneg %p83
        $region157: #{autoencoder_forward.5} parent=154 // pred_check_branch
          %597 = sbr.rel (%p595) target = $region159
        $region158: #{autoencoder_forward.5} parent=154 // pred_region
          _
        $region159: #{autoencoder_forward.5} parent=154 // pred_fallthru
          _
        %s598 = sand.u32 %s122, 1
        %s599 = sand.u32 %s122, 1
        %s600 = smul.addr %s599, 64
        %s601 = scalar_lea.vmem [#allocation4], %s600
        // Predicated region
        $region160: #{autoencoder_forward.5} parent=154 // pred_check
          %p602 = pneg %p135
        $region161: #{autoencoder_forward.5} parent=154 // pred_check_branch
          %604 = sbr.rel (%p602) target = $region163
        $region162: #{autoencoder_forward.5} parent=154 // pred_region
          _
        $region163: #{autoencoder_forward.5} parent=154 // pred_fallthru
          _
        %s605 = sand.u32 %s150, 1
        %s606 = sand.u32 %s150, 1
        %s607 = smul.addr %s606, 64
        %s608 = scalar_lea.vmem [#allocation5], %s607
        // Predicated region
        $region164: #{autoencoder_forward.5} parent=154 // pred_check
          %p609 = pneg %p163
        $region165: #{autoencoder_forward.5} parent=154 // pred_check_branch
          %611 = sbr.rel (%p609) target = $region167
        $region166: #{autoencoder_forward.5} parent=154 // pred_region
          _
        $region167: #{autoencoder_forward.5} parent=154 // pred_fallthru
          _
        %s612 = smul.u32 2, %s22
        %p613 = scmp.lt.s32.totalorder %s612, 3
        %s614 = scalar_select %p613, %s612, 3
        %s615 = smul.addr %s614, 8
        %s616 = scalar_lea.vmem %s0, %s615
        %p617 = pneg %p57
        %p618 = pneg %p54
        %s619 = sand.u32 %s70, 1
        %s620 = sand.u32 %s70, 1
        %s621 = smul.addr %s620, 64
        %s622 = scalar_lea.vmem [#allocation3], %s621
        %p623 = pneg %p83
        %p624 = pneg %p80
        %p625 = scmp.lt.s32.totalorder %s24, 3
        %s626 = scalar_select %p625, %s24, 3
        %s627 = scalar_lea.vmem %s2, %s626
        %p628 = pneg %p109
        %p629 = pneg %p106
        %s630 = sand.u32 %s122, 1
        %s631 = sand.u32 %s122, 1
        %s632 = smul.addr %s631, 64
        %s633 = scalar_lea.vmem [#allocation4], %s632
        %p634 = pneg %p135
        %p635 = pneg %p132
        %s636 = sand.u32 %s150, 1
        %s637 = sand.u32 %s150, 1
        %s638 = smul.addr %s637, 64
        %s639 = scalar_lea.vmem [#allocation5], %s638
        %p640 = pneg %p163
        %p641 = pneg %p160
        %p642 = scmp.lt.s32.totalorder %s23, 3
        %s643 = scalar_select %p642, %s23, 3
        %s644 = scalar_lea.vmem %s5, %s643
        %p645 = pneg %p189
        %p646 = pneg %p186
        %p647 = pneg %p217
        %p648 = pneg %p214
        %s649 = sand.u32 %s204, 1
        %s650 = sand.u32 %s204, 1
        %s651 = smul.addr %s650, 16
        %s652 = scalar_lea.vmem [#allocation6], %s651
        %s653 = smul.u32 2, %s22
        %p654 = scmp.lt.s32.totalorder %s653, 3
        %s655 = scalar_select %p654, %s653, 3
        %s656 = smul.addr %s655, 8
        %s657 = scalar_lea.vmem %s0, %s656
        %s658 = smul.u32 2, %s22
        %p659 = scmp.lt.s32.totalorder %s24, 3
        %s660 = scalar_select %p659, %s24, 3
        %s661 = scalar_lea.vmem %s2, %s660
        %s662 = smul.u32 16, %s24
        %p663 = scmp.lt.s32.totalorder %s23, 3
        %s664 = scalar_select %p663, %s23, 3
        %s665 = scalar_lea.vmem %s5, %s664
        %s666 = smul.u32 2, %s22
        %v668 = vld [vmem:[%s657] sm:$0xff]
        %v669 = vld [vmem:[%s657 + $0x8] sm:$0xff]
        %v670 = vpack.c.bf16 %v669, %v668
        %p671 = scmp.eq.s32.totalorder %s24, 0
        // Predicated region
        $region168: #{autoencoder_forward.5} parent=154 // pred_check
          %p672 = pneg %p671
        $region169: #{autoencoder_forward.5} parent=154 // pred_check_branch
          %674 = sbr.rel (%p672) target = $region171
        $region170: #{autoencoder_forward.5} parent=154 // pred_region
          %v675 = vld [vmem:[%s601] sm:$0xf]
          %v676 = vld [vmem:[%s601 + $0x4] sm:$0xf]
          %v677 = vld [vmem:[%s601 + $0x8] sm:$0xf]
          %v678 = vld [vmem:[%s601 + $0xc] sm:$0xf]
          %v679 = vld [vmem:[%s601 + $0x10] sm:$0xf]
          %v680 = vld [vmem:[%s601 + $0x14] sm:$0xf]
          %v681 = vld [vmem:[%s601 + $0x18] sm:$0xf]
          %v682 = vld [vmem:[%s601 + $0x1c] sm:$0xf]
          %v683 = vld [vmem:[%s601 + $0x20] sm:$0xf]
          %v684 = vld [vmem:[%s601 + $0x24] sm:$0xf]
          %v685 = vld [vmem:[%s601 + $0x28] sm:$0xf]
          %v686 = vld [vmem:[%s601 + $0x2c] sm:$0xf]
          %v687 = vld [vmem:[%s601 + $0x30] sm:$0xf]
          %v688 = vld [vmem:[%s601 + $0x34] sm:$0xf]
          %v689 = vld [vmem:[%s601 + $0x38] sm:$0xf]
          %v690 = vld [vmem:[%s601 + $0x3c] sm:$0xf]
          %v691 = vld [vmem:[%s665] sm:$0x1]
          %v693 = vlaneseq
          %v694 = vshrl.u32 %v693, 7
          %v695 = vsub.s32 0, %v694
          %v696 = vrot.slane %v691, %v695
          %v714 = vunpack.c.l.b16 %v675
          %v715 = vunpack.c.l.b16 %v676
          %v716 = vunpack.c.l.b16 %v677
          %v717 = vunpack.c.l.b16 %v678
          %v718 = vunpack.c.l.b16 %v679
          %v719 = vunpack.c.l.b16 %v680
          %v720 = vunpack.c.l.b16 %v681
          %v721 = vunpack.c.l.b16 %v682
          %v722 = vunpack.c.l.b16 %v683
          %v723 = vunpack.c.l.b16 %v684
          %v724 = vunpack.c.l.b16 %v685
          %v725 = vunpack.c.l.b16 %v686
          %v726 = vunpack.c.l.b16 %v687
          %v727 = vunpack.c.l.b16 %v688
          %v728 = vunpack.c.l.b16 %v689
          %v729 = vunpack.c.l.b16 %v690
          %v730 = vpack.c.b16 %v715, %v714
          %v731 = vpack.c.b16 %v717, %v716
          %v732 = vpack.c.b16 %v719, %v718
          %v733 = vpack.c.b16 %v721, %v720
          %v734 = vpack.c.b16 %v723, %v722
          %v735 = vpack.c.b16 %v725, %v724
          %v736 = vpack.c.b16 %v727, %v726
          %v737 = vpack.c.b16 %v729, %v728
          %746 = vmatprep.subr.bf16.mxu0 0
          %747 = vmatpush1.bf16.msra.mxu0 %v730
          %748 = vmatprep.subr.bf16.mxu0 0
          %749 = vmatpush1.bf16.msra.mxu0 %v731
          %750 = vmatprep.subr.bf16.mxu0 0
          %751 = vmatpush1.bf16.msra.mxu0 %v732
          %752 = vmatprep.subr.bf16.mxu0 0
          %753 = vmatpush1.bf16.msra.mxu0 %v733
          %754 = vmatprep.subr.bf16.mxu0 0
          %755 = vmatpush1.bf16.msra.mxu0 %v734
          %756 = vmatprep.subr.bf16.mxu0 0
          %757 = vmatpush1.bf16.msra.mxu0 %v735
          %758 = vmatprep.subr.bf16.mxu0 0
          %759 = vmatpush1.bf16.msra.mxu0 %v736
          %760 = vmatprep.subr.bf16.mxu0 0
          %761 = vmatpush1.bf16.msra.mxu0 %v737
          %762 = vmatprep.subr.bf16.mxu0 0
          %763 = vmatpush1.bf16.msra.mxu0 0
          %764 = vmatprep.subr.bf16.mxu0 0
          %765 = vmatpush1.bf16.msra.mxu0 0
          %766 = vmatprep.subr.bf16.mxu0 0
          %767 = vmatpush1.bf16.msra.mxu0 0
          %768 = vmatprep.subr.bf16.mxu0 0
          %769 = vmatpush1.bf16.msra.mxu0 0
          %770 = vmatprep.subr.bf16.mxu0 0
          %771 = vmatpush1.bf16.msra.mxu0 0
          %772 = vmatprep.subr.bf16.mxu0 0
          %773 = vmatpush1.bf16.msra.mxu0 0
          %774 = vmatprep.subr.bf16.mxu0 0
          %775 = vmatpush1.bf16.msra.mxu0 0
          %776 = vmatprep.subr.bf16.mxu0 0
          %777 = vmatpush1.bf16.msra.mxu0 0
          %778 = vmatprep.mubr.bf16.mxu0 0
          %779 = vmatmul.mubr.bf16.gmra.mrb[0].mxu0 %v670
          %v780 = vpop.f32.mrb[0].mxu0
          %v781 = vadd.f32 %v696, %v780
          %v782 = vpop.f32.mrb[0].mxu0
          %v783 = vpop.f32.mrb[0].mxu0
          %v784 = vadd.f32 %v696, %v783
          %v785 = vpop.f32.mrb[0].mxu0
          %786 = vdwg.mxu0
          %787 = vst [vmem:[#allocation2] sm:$0xff] %v781
          %788 = vst [vmem:[#allocation2 + $0x8] sm:$0xff] %v784
        $region171: #{autoencoder_forward.5} parent=154 // pred_fallthru
          _
        %v789 = vld [vmem:[%s594] sm:$0xf]
        %v790 = vld [vmem:[%s594 + $0x4] sm:$0xf]
        %v791 = vld [vmem:[%s594 + $0x8] sm:$0xf]
        %v792 = vld [vmem:[%s594 + $0xc] sm:$0xf]
        %v793 = vld [vmem:[%s594 + $0x10] sm:$0xf]
        %v794 = vld [vmem:[%s594 + $0x14] sm:$0xf]
        %v795 = vld [vmem:[%s594 + $0x18] sm:$0xf]
        %v796 = vld [vmem:[%s594 + $0x1c] sm:$0xf]
        %v797 = vld [vmem:[%s594 + $0x20] sm:$0xf]
        %v798 = vld [vmem:[%s594 + $0x24] sm:$0xf]
        %v799 = vld [vmem:[%s594 + $0x28] sm:$0xf]
        %v800 = vld [vmem:[%s594 + $0x2c] sm:$0xf]
        %v801 = vld [vmem:[%s594 + $0x30] sm:$0xf]
        %v802 = vld [vmem:[%s594 + $0x34] sm:$0xf]
        %v803 = vld [vmem:[%s594 + $0x38] sm:$0xf]
        %v804 = vld [vmem:[%s594 + $0x3c] sm:$0xf]
        %v805 = vld [vmem:[%s661] sm:$0x1]
        %v807 = vlaneseq
        %v808 = vshrl.u32 %v807, 7
        %v809 = vsub.s32 0, %v808
        %v810 = vrot.slane %v805, %v809
        %v828 = vunpack.c.l.b16 %v789
        %v829 = vunpack.c.l.b16 %v790
        %v830 = vunpack.c.l.b16 %v791
        %v831 = vunpack.c.l.b16 %v792
        %v832 = vunpack.c.l.b16 %v793
        %v833 = vunpack.c.l.b16 %v794
        %v834 = vunpack.c.l.b16 %v795
        %v835 = vunpack.c.l.b16 %v796
        %v836 = vunpack.c.l.b16 %v797
        %v837 = vunpack.c.l.b16 %v798
        %v838 = vunpack.c.l.b16 %v799
        %v839 = vunpack.c.l.b16 %v800
        %v840 = vunpack.c.l.b16 %v801
        %v841 = vunpack.c.l.b16 %v802
        %v842 = vunpack.c.l.b16 %v803
        %v843 = vunpack.c.l.b16 %v804
        %v844 = vpack.c.b16 %v829, %v828
        %v845 = vpack.c.b16 %v831, %v830
        %v846 = vpack.c.b16 %v833, %v832
        %v847 = vpack.c.b16 %v835, %v834
        %v848 = vpack.c.b16 %v837, %v836
        %v849 = vpack.c.b16 %v839, %v838
        %v850 = vpack.c.b16 %v841, %v840
        %v851 = vpack.c.b16 %v843, %v842
        %860 = vmatprep.subr.bf16.mxu0 0
        %861 = vmatpush1.bf16.msra.mxu0 %v844
        %862 = vmatprep.subr.bf16.mxu0 0
        %863 = vmatpush1.bf16.msra.mxu0 %v845
        %864 = vmatprep.subr.bf16.mxu0 0
        %865 = vmatpush1.bf16.msra.mxu0 %v846
        %866 = vmatprep.subr.bf16.mxu0 0
        %867 = vmatpush1.bf16.msra.mxu0 %v847
        %868 = vmatprep.subr.bf16.mxu0 0
        %869 = vmatpush1.bf16.msra.mxu0 %v848
        %870 = vmatprep.subr.bf16.mxu0 0
        %871 = vmatpush1.bf16.msra.mxu0 %v849
        %872 = vmatprep.subr.bf16.mxu0 0
        %873 = vmatpush1.bf16.msra.mxu0 %v850
        %874 = vmatprep.subr.bf16.mxu0 0
        %875 = vmatpush1.bf16.msra.mxu0 %v851
        %876 = vmatprep.subr.bf16.mxu0 0
        %877 = vmatpush1.bf16.msra.mxu0 0
        %878 = vmatprep.subr.bf16.mxu0 0
        %879 = vmatpush1.bf16.msra.mxu0 0
        %880 = vmatprep.subr.bf16.mxu0 0
        %881 = vmatpush1.bf16.msra.mxu0 0
        %882 = vmatprep.subr.bf16.mxu0 0
        %883 = vmatpush1.bf16.msra.mxu0 0
        %884 = vmatprep.subr.bf16.mxu0 0
        %885 = vmatpush1.bf16.msra.mxu0 0
        %886 = vmatprep.subr.bf16.mxu0 0
        %887 = vmatpush1.bf16.msra.mxu0 0
        %888 = vmatprep.subr.bf16.mxu0 0
        %889 = vmatpush1.bf16.msra.mxu0 0
        %890 = vmatprep.subr.bf16.mxu0 0
        %891 = vmatpush1.bf16.msra.mxu0 0
        %892 = vmatprep.mubr.bf16.mxu0 0
        %893 = vmatmul.mubr.bf16.gmra.mrb[0].mxu0 %v670
        %v894 = vpop.f32.mrb[0].mxu0
        %v895 = vadd.f32 %v810, %v894
        %v896 = vpop.f32.mrb[0].mxu0
        %v897 = vpop.f32.mrb[0].mxu0
        %v898 = vadd.f32 %v810, %v897
        %v899 = vpop.f32.mrb[0].mxu0
        %900 = vdwg.mxu0
        %v901 = vld [vmem:[#allocation2] sm:$0xff]
        %v902 = vld [vmem:[#allocation2 + $0x8] sm:$0xff]
        %v903 = vpack.c.bf16 %v898, %v895
        %v904 = vld [vmem:[%s608] sm:$0xf]
        %v905 = vld [vmem:[%s608 + $0x4] sm:$0xf]
        %v906 = vld [vmem:[%s608 + $0x8] sm:$0xf]
        %v907 = vld [vmem:[%s608 + $0xc] sm:$0xf]
        %v908 = vld [vmem:[%s608 + $0x10] sm:$0xf]
        %v909 = vld [vmem:[%s608 + $0x14] sm:$0xf]
        %v910 = vld [vmem:[%s608 + $0x18] sm:$0xf]
        %v911 = vld [vmem:[%s608 + $0x1c] sm:$0xf]
        %v912 = vld [vmem:[%s608 + $0x20] sm:$0xf]
        %v913 = vld [vmem:[%s608 + $0x24] sm:$0xf]
        %v914 = vld [vmem:[%s608 + $0x28] sm:$0xf]
        %v915 = vld [vmem:[%s608 + $0x2c] sm:$0xf]
        %v916 = vld [vmem:[%s608 + $0x30] sm:$0xf]
        %v917 = vld [vmem:[%s608 + $0x34] sm:$0xf]
        %v918 = vld [vmem:[%s608 + $0x38] sm:$0xf]
        %v919 = vld [vmem:[%s608 + $0x3c] sm:$0xf]
        %v936 = vunpack.c.l.b16 %v904
        %v937 = vunpack.c.l.b16 %v905
        %v938 = vunpack.c.l.b16 %v906
        %v939 = vunpack.c.l.b16 %v907
        %v940 = vunpack.c.l.b16 %v908
        %v941 = vunpack.c.l.b16 %v909
        %v942 = vunpack.c.l.b16 %v910
        %v943 = vunpack.c.l.b16 %v911
        %v944 = vunpack.c.l.b16 %v912
        %v945 = vunpack.c.l.b16 %v913
        %v946 = vunpack.c.l.b16 %v914
        %v947 = vunpack.c.l.b16 %v915
        %v948 = vunpack.c.l.b16 %v916
        %v949 = vunpack.c.l.b16 %v917
        %v950 = vunpack.c.l.b16 %v918
        %v951 = vunpack.c.l.b16 %v919
        %v952 = vpack.c.b16 %v937, %v936
        %v953 = vpack.c.b16 %v939, %v938
        %v954 = vpack.c.b16 %v941, %v940
        %v955 = vpack.c.b16 %v943, %v942
        %v956 = vpack.c.b16 %v945, %v944
        %v957 = vpack.c.b16 %v947, %v946
        %v958 = vpack.c.b16 %v949, %v948
        %v959 = vpack.c.b16 %v951, %v950
        %968 = vmatprep.subr.bf16.mxu0 0
        %969 = vmatpush1.bf16.msra.mxu0 %v952
        %970 = vmatprep.subr.bf16.mxu0 0
        %971 = vmatpush1.bf16.msra.mxu0 %v953
        %972 = vmatprep.subr.bf16.mxu0 0
        %973 = vmatpush1.bf16.msra.mxu0 %v954
        %974 = vmatprep.subr.bf16.mxu0 0
        %975 = vmatpush1.bf16.msra.mxu0 %v955
        %976 = vmatprep.subr.bf16.mxu0 0
        %977 = vmatpush1.bf16.msra.mxu0 %v956
        %978 = vmatprep.subr.bf16.mxu0 0
        %979 = vmatpush1.bf16.msra.mxu0 %v957
        %980 = vmatprep.subr.bf16.mxu0 0
        %981 = vmatpush1.bf16.msra.mxu0 %v958
        %982 = vmatprep.subr.bf16.mxu0 0
        %983 = vmatpush1.bf16.msra.mxu0 %v959
        %984 = vmatprep.subr.bf16.mxu0 0
        %985 = vmatpush1.bf16.msra.mxu0 0
        %986 = vmatprep.subr.bf16.mxu0 0
        %987 = vmatpush1.bf16.msra.mxu0 0
        %988 = vmatprep.subr.bf16.mxu0 0
        %989 = vmatpush1.bf16.msra.mxu0 0
        %990 = vmatprep.subr.bf16.mxu0 0
        %991 = vmatpush1.bf16.msra.mxu0 0
        %992 = vmatprep.subr.bf16.mxu0 0
        %993 = vmatpush1.bf16.msra.mxu0 0
        %994 = vmatprep.subr.bf16.mxu0 0
        %995 = vmatpush1.bf16.msra.mxu0 0
        %996 = vmatprep.subr.bf16.mxu0 0
        %997 = vmatpush1.bf16.msra.mxu0 0
        %998 = vmatprep.subr.bf16.mxu0 0
        %999 = vmatpush1.bf16.msra.mxu0 0
        %1000 = vmatprep.mubr.bf16.mxu0 0
        %1001 = vmatmul.mubr.bf16.gmra.mrb[0].mxu0 %v903
        %v1002 = vpop.f32.mrb[0].mxu0
        %v1003 = vadd.f32 0.0, %v1002
        %v1004 = vpop.f32.mrb[0].mxu0
        %v1005 = vpop.f32.mrb[0].mxu0
        %v1006 = vadd.f32 0.0, %v1005
        %v1007 = vpop.f32.mrb[0].mxu0
        %1008 = vdwg.mxu0
        %v1009 = vadd.f32 %v901, %v1003
        %v1010 = vadd.f32 %v902, %v1006
        %1011 = vst [vmem:[#allocation2] sm:$0xff] %v1009
        %1012 = vst [vmem:[#allocation2 + $0x8] sm:$0xff] %v1010
        %p1013 = scmp.eq.s32.totalorder %s24, 3
        // Predicated region
        $region172: #{autoencoder_forward.5} parent=154 // pred_check
          %p1014 = pneg %p1013
        $region173: #{autoencoder_forward.5} parent=154 // pred_check_branch
          %1016 = sbr.rel (%p1014) target = $region175
        $region174: #{autoencoder_forward.5} parent=154 // pred_region
          %v1017 = vld [vmem:[#allocation2] sm:$0xff]
          %v1018 = vld [vmem:[#allocation2 + $0x8] sm:$0xff]
          %1019 = vst [vmem:[%s652] sm:$0xff] %v1017
          %1020 = vst [vmem:[%s652 + $0x8] sm:$0xff] %v1018
        $region175: #{autoencoder_forward.5} parent=154 // pred_fallthru
          _
        %s1021 = sand.u32 %s204, 1
        %s1022 = sand.u32 %s204, 1
        %s1023 = smul.addr %s1022, 16
        %s1024 = scalar_lea.vmem [#allocation6], %s1023
        // Predicated region
        $region176: #{autoencoder_forward.5} parent=154 // pred_check
          %p1025 = pneg %p214
        $region177: #{autoencoder_forward.5} parent=154 // pred_check_branch
          %1027 = sbr.rel (%p1025) target = $region179
        $region178: #{autoencoder_forward.5} parent=154 // pred_region
          %s1028 = smul.u32 2, %s22
          %s1029 = smul.addr %s1028, 4
          %s1030 = sadd.s32 %s23, %s1029
          %s1031 = smul.addr %s1030, 8
          %s1032 = scalar_lea.vmem %s6, %s1031
          // Predicated region
          $region180: #{autoencoder_forward.5} parent=178 // pred_check
            _
          $region181: #{autoencoder_forward.5} parent=178 // pred_check_branch
            %1034 = sbr.rel (0) target = $region183
          $region182: #{autoencoder_forward.5} parent=178 // pred_region
            // Predicated region
            $region184: #{autoencoder_forward.5} parent=182 // pred_check
              _
            $region185: #{autoencoder_forward.5} parent=182 // pred_check_branch
              %1036 = sbr.rel (0) target = $region187
            $region186: #{autoencoder_forward.5} parent=182 // pred_region
              // Predicated region
              $region199: #{autoencoder_forward.5} parent=186 // pred_check
                _
              $region200: #{autoencoder_forward.5} parent=186 // pred_check_branch
                %1053 = sbr.rel (0) target = $region202
              $region201: #{autoencoder_forward.5} parent=186 // pred_region
                loop: start=0, step=1, limit=1
                $region203: #{autoencoder_forward.5} parent=201 // loop_pre_header
                  _
                $region204: #{autoencoder_forward.5} parent=201 // loop_header
                  %s1055 = sphi 0, %s1059
                  %p1056 = scmp.ge.s32.totalorder %s1055, 1
                  %s1060 = sphi %s1024, %s1024
                  %s1061 = sphi %s1032, %s1032
                $region205: #{autoencoder_forward.5} parent=201 // loop_header_branch
                  %1058 = sbr.rel (%p1056) target = $region209
                $region206: #{autoencoder_forward.5} parent=201 // loop_body
                  %v1062 = vld [vmem:[%s1060] sm:$0xff]
                  %1063 = vst [vmem:[%s1061] sm:$0xff] %v1062
                  %v1064 = vld [vmem:[%s1060 + $0x8] sm:$0xff]
                  %1065 = vst [vmem:[%s1061 + $0x20] sm:$0xff] %v1064
                $region207: #{autoencoder_forward.5} parent=201 // loop_footer
                  %s1059 = sadd.s32 1, %s1055
                $region208: #{autoencoder_forward.5} parent=201 // loop_footer_branch
                  %1054 = sbr.rel target = $region204
                $region209: #{autoencoder_forward.5} parent=201 // loop_exit
                  _
              $region202: #{autoencoder_forward.5} parent=186 // pred_fallthru
                _
              // Predicated region
              $region210: #{autoencoder_forward.5} parent=186 // pred_check
                _
              $region211: #{autoencoder_forward.5} parent=186 // pred_check_branch
                %1067 = sbr.rel target = $region213
              $region212: #{autoencoder_forward.5} parent=186 // pred_region
                _
              $region213: #{autoencoder_forward.5} parent=186 // pred_fallthru
                _
            $region187: #{autoencoder_forward.5} parent=182 // pred_fallthru
              _
            // Predicated region
            $region188: #{autoencoder_forward.5} parent=182 // pred_check
              _
            $region189: #{autoencoder_forward.5} parent=182 // pred_check_branch
              %1038 = sbr.rel target = $region191
            $region190: #{autoencoder_forward.5} parent=182 // pred_region
              loop: start=0, step=1, limit=1
              $region192: #{autoencoder_forward.5} parent=190 // loop_pre_header
                _
              $region193: #{autoencoder_forward.5} parent=190 // loop_header
                %s1041 = sphi 0, %s1045
                %p1042 = scmp.ge.s32.totalorder %s1041, 1
                %s1046 = sphi %s1024, %s1024
                %s1047 = sphi %s1032, %s1032
              $region194: #{autoencoder_forward.5} parent=190 // loop_header_branch
                %1044 = sbr.rel (%p1042) target = $region198
              $region195: #{autoencoder_forward.5} parent=190 // loop_body
                %v1048 = vld [vmem:[%s1046] sm:$0xff]
                %1049 = vst [vmem:[%s1047] sm:$0xff] %v1048
                %v1050 = vld [vmem:[%s1046 + $0x8] sm:$0xff]
                %1051 = vst [vmem:[%s1047 + $0x20] sm:$0xff] %v1050
              $region196: #{autoencoder_forward.5} parent=190 // loop_footer
                %s1045 = sadd.s32 1, %s1041
              $region197: #{autoencoder_forward.5} parent=190 // loop_footer_branch
                %1040 = sbr.rel target = $region193
              $region198: #{autoencoder_forward.5} parent=190 // loop_exit
                _
            $region191: #{autoencoder_forward.5} parent=182 // pred_fallthru
              _
          $region183: #{autoencoder_forward.5} parent=178 // pred_fallthru
            _
          %1068 = vnop
        $region179: #{autoencoder_forward.5} parent=154 // pred_fallthru
          _
      $region155: #{autoencoder_forward.5} parent=5 // pred_fallthru
        _
      %p1069 = scmp.le.s32.totalorder 2, %s12
      // Predicated region
      $region214: #{autoencoder_forward.5} parent=5 // pred_check
        %p1070 = pneg %p1069
      $region215: #{autoencoder_forward.5} parent=5 // pred_check_branch
        %1072 = sbr.rel (%p1070) target = $region217
      $region216: #{autoencoder_forward.5} parent=5 // pred_region
        %s1073 = ssub.s32 %s12, 2
        // Predicated region
        $region218: #{autoencoder_forward.5} parent=216 // pred_check
          %p1074 = pneg %p220
        $region219: #{autoencoder_forward.5} parent=216 // pred_check_branch
          %1076 = sbr.rel (%p1074) target = $region221
        $region220: #{autoencoder_forward.5} parent=216 // pred_region
          %s1077 = sand.u32 %s205, 1
          %s1078 = sand.u32 %s205, 1
          %s1079 = smul.addr %s1078, 16
          %s1080 = scalar_lea.vmem [#allocation6], %s1079
        $region221: #{autoencoder_forward.5} parent=216 // pred_fallthru
          _
      $region217: #{autoencoder_forward.5} parent=5 // pred_fallthru
        _
    $region6: #{autoencoder_forward.5} parent=1 // loop_footer
      %s16 = sadd.s32 1, %s12
    $region7: #{autoencoder_forward.5} parent=1 // loop_footer_branch
      %11 = sbr.rel target = $region3
    $region8: #{autoencoder_forward.5} parent=1 // loop_exit
      _

// kernel: autoencoder_forward.3
$region0: #{autoencoder_forward.3}
  #allocation0 [shape = 'u32[]', space=smem, size = 0x4, offset = 0x4, fixed_abs, tag = 'smem constant byte address 0x4 - core index']
  #allocation1 [shape = 'u32[144,128]{1,0:T(1,128)}', space=vmem, size = 0x12000, scoped, tag = 'internal scratch']
  #allocation2 [shape = 'f32[16,256]{1,0:T(8,128)}', space=vmem, size = 0x4000, scoped, tag = 'scratch operand']
  %s0 = inlined_call_operand.vmem [shape: bf16[32,512], index: 0, kind: input, shape index: {}]
  %s1 = inlined_call_operand.vmem [shape: bf16[512,256], index: 1, kind: input, shape index: {}]
  %s2 = inlined_call_operand.vmem [shape: f32[1,256], index: 2, kind: input, shape index: {}]
  %s3 = inlined_call_operand.vmem [shape: f32[1,256], index: 3, kind: input, shape index: {}]
  %s4 = inlined_call_operand.vmem [shape: f32[1,256], index: 4, kind: input, shape index: {}]
  %s5 = inlined_call_operand.vmem [shape: bf16[256,128], index: 5, kind: input, shape index: {}]
  %s6 = inlined_call_operand.vmem [shape: f32[1,128], index: 6, kind: input, shape index: {}]
  %s7 = inlined_call_operand.vmem [shape: f32[1,128], index: 7, kind: input, shape index: {}]
  %s8 = inlined_call_operand.vmem [shape: f32[1,128], index: 8, kind: input, shape index: {}]
  %s9 = inlined_call_operand.vmem [shape: bf16[128,128], index: 9, kind: input, shape index: {}]
  %s10 = inlined_call_operand.vmem [shape: f32[1,128], index: 10, kind: input, shape index: {}]
  %s11 = inlined_call_operand.vmem [shape: f32[32,128], index: 11, kind: output, shape index: {}]
  %s12 = sld [smem:[#allocation0]]
  $region126: #{autoencoder_forward.3} parent=0
    _
  %s14 = ssub.s32 1, %s12
  %s15 = scalar_select 0, %s14, %s12
  $region1: #{autoencoder_forward.3} parent=0
    #allocation3 [shape = 'u8[8192]{0}', space=vmem, size = 0x2000, scoped, tag = 'input window, operand 0']
    loop: start=0, step=1, limit=10
    $region2: #{autoencoder_forward.3} parent=1 // loop_pre_header
      _
    $region3: #{autoencoder_forward.3} parent=1 // loop_header
      %s17 = sphi 0, %s21
      %p18 = scmp.ge.s32.totalorder %s17, 10
      %s24 = sphi 0, %s36
      %s25 = sphi 0, %s32
      %s26 = sphi 0, %s24
      %s27 = sphi 0, %s25
      %s28 = sphi 0, %s26
      %s29 = sphi 0, %s27
      %s41 = sphi 0, %s43
      %s44 = sphi 0, %s41
      %s45 = sphi 0, %s44
      %s61 = sphi 0, %s45
      %s67 = sphi 0, %s69
      %s70 = sphi 0, %s67
      %s71 = sphi 0, %s70
      %s87 = sphi 0, %s71
      %s91 = sphi 0, %s91
      %s93 = sphi 0, %s91
      %s94 = sphi 0, %s93
      %s108 = sphi 0, %s94
      %s112 = sphi 0, %s112
      %s114 = sphi 0, %s112
      %s115 = sphi 0, %s114
      %s129 = sphi 0, %s115
      %s133 = sphi 0, %s133
      %s135 = sphi 0, %s133
      %s136 = sphi 0, %s135
      %s150 = sphi 0, %s136
      %s154 = sphi 0, %s154
      %s156 = sphi 0, %s154
      %s157 = sphi 0, %s156
      %s171 = sphi 0, %s157
      %s175 = sphi 0, %s175
      %s177 = sphi 0, %s175
      %s178 = sphi 0, %s177
      %s192 = sphi 0, %s178
      %s196 = sphi 0, %s196
      %s198 = sphi 0, %s196
      %s199 = sphi 0, %s198
      %s213 = sphi 0, %s199
      %s217 = sphi 0, %s217
      %s219 = sphi 0, %s217
      %s220 = sphi 0, %s219
      %s234 = sphi 0, %s220
      %s238 = sphi 0, %s238
      %s240 = sphi 0, %s238
      %s241 = sphi 0, %s240
      %s255 = sphi 0, %s241
      %s259 = sphi 0, %s259
      %s261 = sphi 0, %s259
      %s262 = sphi 0, %s261
      %s276 = sphi 0, %s262
      %s282 = sphi 0, %s284
      %s285 = sphi 0, %s282
      %s286 = sphi 0, %s285
      %s302 = sphi 0, %s286
    $region4: #{autoencoder_forward.3} parent=1 // loop_header_branch
      %20 = sbr.rel (%p18) target = $region8
    $region5: #{autoencoder_forward.3} parent=1 // loop_body
      %s22 = ssub.s32 %s17, 1
      %s23 = ssub.s32 %s17, 2
      %s30 = sadd.s32 1, %s25
      %p31 = scmp.ge.s32.totalorder %s30, 4
      %s32 = scalar_select %p31, 0, %s30
      %s33 = sadd.s32 1, %s24
      %s34 = scalar_select %p31, %s33, %s24
      %p35 = scmp.ge.s32.totalorder %s34, 2
      %s36 = scalar_select %p35, 0, %s34
      %s37 = ssub.s32 %s24, %s36
      %s38 = ssub.s32 %s25, %s32
      %s39 = sor.u32 %s37, %s38
      %p40 = scmp.eq.s32.totalorder %s39, 0
      %s42 = sadd.s32 %s41, 1
      %s43 = scalar_select %p40, %s41, %s42
      %p46 = pneg %p40
      %p47 = scmp.eq.s32.totalorder %s17, 7
      %p48 = por %p46, %p47
      %p49 = scmp.ne.s32.totalorder %s41, %s44
      %p50 = scmp.eq.s32.totalorder %s17, 0
      %p51 = por %p49, %p50
      %p52 = scmp.ne.s32.totalorder %s41, %s44
      %p53 = scmp.eq.s32.totalorder %s22, 7
      %p54 = por %p52, %p53
      %p55 = scmp.ne.s32.totalorder %s44, %s45
      %p56 = scmp.eq.s32.totalorder %s22, 0
      %p57 = por %p55, %p56
      %p58 = scmp.ne.s32.totalorder %s44, %s45
      %p59 = scmp.eq.s32.totalorder %s23, 7
      %p60 = por %p58, %p59
      %p62 = scmp.ne.s32.totalorder %s45, %s61
      %p63 = scmp.eq.s32.totalorder %s23, 0
      %p64 = por %p62, %p63
      %s65 = ssub.s32 %s25, %s32
      %p66 = scmp.eq.s32.totalorder %s65, 0
      %s68 = sadd.s32 %s67, 1
      %s69 = scalar_select %p66, %s67, %s68
      %p72 = pneg %p66
      %p73 = scmp.eq.s32.totalorder %s17, 7
      %p74 = por %p72, %p73
      %p75 = scmp.ne.s32.totalorder %s67, %s70
      %p76 = scmp.eq.s32.totalorder %s17, 0
      %p77 = por %p75, %p76
      %p78 = scmp.ne.s32.totalorder %s67, %s70
      %p79 = scmp.eq.s32.totalorder %s22, 7
      %p80 = por %p78, %p79
      %p81 = scmp.ne.s32.totalorder %s70, %s71
      %p82 = scmp.eq.s32.totalorder %s22, 0
      %p83 = por %p81, %p82
      %p84 = scmp.ne.s32.totalorder %s70, %s71
      %p85 = scmp.eq.s32.totalorder %s23, 7
      %p86 = por %p84, %p85
      %p88 = scmp.ne.s32.totalorder %s71, %s87
      %p89 = scmp.eq.s32.totalorder %s23, 0
      %p90 = por %p88, %p89
      %s92 = sadd.s32 %s91, 1
      %p95 = scmp.eq.s32.totalorder %s17, 7
      %p96 = scmp.ne.s32.totalorder %s91, %s93
      %p97 = scmp.eq.s32.totalorder %s17, 0
      %p98 = por %p96, %p97
      %p99 = scmp.ne.s32.totalorder %s91, %s93
      %p100 = scmp.eq.s32.totalorder %s22, 7
      %p101 = por %p99, %p100
      %p102 = scmp.ne.s32.totalorder %s93, %s94
      %p103 = scmp.eq.s32.totalorder %s22, 0
      %p104 = por %p102, %p103
      %p105 = scmp.ne.s32.totalorder %s93, %s94
      %p106 = scmp.eq.s32.totalorder %s23, 7
      %p107 = por %p105, %p106
      %p109 = scmp.ne.s32.totalorder %s94, %s108
      %p110 = scmp.eq.s32.totalorder %s23, 0
      %p111 = por %p109, %p110
      %s113 = sadd.s32 %s112, 1
      %p116 = scmp.eq.s32.totalorder %s17, 7
      %p117 = scmp.ne.s32.totalorder %s112, %s114
      %p118 = scmp.eq.s32.totalorder %s17, 0
      %p119 = por %p117, %p118
      %p120 = scmp.ne.s32.totalorder %s112, %s114
      %p121 = scmp.eq.s32.totalorder %s22, 7
      %p122 = por %p120, %p121
      %p123 = scmp.ne.s32.totalorder %s114, %s115
      %p124 = scmp.eq.s32.totalorder %s22, 0
      %p125 = por %p123, %p124
      %p126 = scmp.ne.s32.totalorder %s114, %s115
      %p127 = scmp.eq.s32.totalorder %s23, 7
      %p128 = por %p126, %p127
      %p130 = scmp.ne.s32.totalorder %s115, %s129
      %p131 = scmp.eq.s32.totalorder %s23, 0
      %p132 = por %p130, %p131
      %s134 = sadd.s32 %s133, 1
      %p137 = scmp.eq.s32.totalorder %s17, 7
      %p138 = scmp.ne.s32.totalorder %s133, %s135
      %p139 = scmp.eq.s32.totalorder %s17, 0
      %p140 = por %p138, %p139
      %p141 = scmp.ne.s32.totalorder %s133, %s135
      %p142 = scmp.eq.s32.totalorder %s22, 7
      %p143 = por %p141, %p142
      %p144 = scmp.ne.s32.totalorder %s135, %s136
      %p145 = scmp.eq.s32.totalorder %s22, 0
      %p146 = por %p144, %p145
      %p147 = scmp.ne.s32.totalorder %s135, %s136
      %p148 = scmp.eq.s32.totalorder %s23, 7
      %p149 = por %p147, %p148
      %p151 = scmp.ne.s32.totalorder %s136, %s150
      %p152 = scmp.eq.s32.totalorder %s23, 0
      %p153 = por %p151, %p152
      %s155 = sadd.s32 %s154, 1
      %p158 = scmp.eq.s32.totalorder %s17, 7
      %p159 = scmp.ne.s32.totalorder %s154, %s156
      %p160 = scmp.eq.s32.totalorder %s17, 0
      %p161 = por %p159, %p160
      %p162 = scmp.ne.s32.totalorder %s154, %s156
      %p163 = scmp.eq.s32.totalorder %s22, 7
      %p164 = por %p162, %p163
      %p165 = scmp.ne.s32.totalorder %s156, %s157
      %p166 = scmp.eq.s32.totalorder %s22, 0
      %p167 = por %p165, %p166
      %p168 = scmp.ne.s32.totalorder %s156, %s157
      %p169 = scmp.eq.s32.totalorder %s23, 7
      %p170 = por %p168, %p169
      %p172 = scmp.ne.s32.totalorder %s157, %s171
      %p173 = scmp.eq.s32.totalorder %s23, 0
      %p174 = por %p172, %p173
      %s176 = sadd.s32 %s175, 1
      %p179 = scmp.eq.s32.totalorder %s17, 7
      %p180 = scmp.ne.s32.totalorder %s175, %s177
      %p181 = scmp.eq.s32.totalorder %s17, 0
      %p182 = por %p180, %p181
      %p183 = scmp.ne.s32.totalorder %s175, %s177
      %p184 = scmp.eq.s32.totalorder %s22, 7
      %p185 = por %p183, %p184
      %p186 = scmp.ne.s32.totalorder %s177, %s178
      %p187 = scmp.eq.s32.totalorder %s22, 0
      %p188 = por %p186, %p187
      %p189 = scmp.ne.s32.totalorder %s177, %s178
      %p190 = scmp.eq.s32.totalorder %s23, 7
      %p191 = por %p189, %p190
      %p193 = scmp.ne.s32.totalorder %s178, %s192
      %p194 = scmp.eq.s32.totalorder %s23, 0
      %p195 = por %p193, %p194
      %s197 = sadd.s32 %s196, 1
      %p200 = scmp.eq.s32.totalorder %s17, 7
      %p201 = scmp.ne.s32.totalorder %s196, %s198
      %p202 = scmp.eq.s32.totalorder %s17, 0
      %p203 = por %p201, %p202
      %p204 = scmp.ne.s32.totalorder %s196, %s198
      %p205 = scmp.eq.s32.totalorder %s22, 7
      %p206 = por %p204, %p205
      %p207 = scmp.ne.s32.totalorder %s198, %s199
      %p208 = scmp.eq.s32.totalorder %s22, 0
      %p209 = por %p207, %p208
      %p210 = scmp.ne.s32.totalorder %s198, %s199
      %p211 = scmp.eq.s32.totalorder %s23, 7
      %p212 = por %p210, %p211
      %p214 = scmp.ne.s32.totalorder %s199, %s213
      %p215 = scmp.eq.s32.totalorder %s23, 0
      %p216 = por %p214, %p215
      %s218 = sadd.s32 %s217, 1
      %p221 = scmp.eq.s32.totalorder %s17, 7
      %p222 = scmp.ne.s32.totalorder %s217, %s219
      %p223 = scmp.eq.s32.totalorder %s17, 0
      %p224 = por %p222, %p223
      %p225 = scmp.ne.s32.totalorder %s217, %s219
      %p226 = scmp.eq.s32.totalorder %s22, 7
      %p227 = por %p225, %p226
      %p228 = scmp.ne.s32.totalorder %s219, %s220
      %p229 = scmp.eq.s32.totalorder %s22, 0
      %p230 = por %p228, %p229
      %p231 = scmp.ne.s32.totalorder %s219, %s220
      %p232 = scmp.eq.s32.totalorder %s23, 7
      %p233 = por %p231, %p232
      %p235 = scmp.ne.s32.totalorder %s220, %s234
      %p236 = scmp.eq.s32.totalorder %s23, 0
      %p237 = por %p235, %p236
      %s239 = sadd.s32 %s238, 1
      %p242 = scmp.eq.s32.totalorder %s17, 7
      %p243 = scmp.ne.s32.totalorder %s238, %s240
      %p244 = scmp.eq.s32.totalorder %s17, 0
      %p245 = por %p243, %p244
      %p246 = scmp.ne.s32.totalorder %s238, %s240
      %p247 = scmp.eq.s32.totalorder %s22, 7
      %p248 = por %p246, %p247
      %p249 = scmp.ne.s32.totalorder %s240, %s241
      %p250 = scmp.eq.s32.totalorder %s22, 0
      %p251 = por %p249, %p250
      %p252 = scmp.ne.s32.totalorder %s240, %s241
      %p253 = scmp.eq.s32.totalorder %s23, 7
      %p254 = por %p252, %p253
      %p256 = scmp.ne.s32.totalorder %s241, %s255
      %p257 = scmp.eq.s32.totalorder %s23, 0
      %p258 = por %p256, %p257
      %s260 = sadd.s32 %s259, 1
      %p263 = scmp.eq.s32.totalorder %s17, 7
      %p264 = scmp.ne.s32.totalorder %s259, %s261
      %p265 = scmp.eq.s32.totalorder %s17, 0
      %p266 = por %p264, %p265
      %p267 = scmp.ne.s32.totalorder %s259, %s261
      %p268 = scmp.eq.s32.totalorder %s22, 7
      %p269 = por %p267, %p268
      %p270 = scmp.ne.s32.totalorder %s261, %s262
      %p271 = scmp.eq.s32.totalorder %s22, 0
      %p272 = por %p270, %p271
      %p273 = scmp.ne.s32.totalorder %s261, %s262
      %p274 = scmp.eq.s32.totalorder %s23, 7
      %p275 = por %p273, %p274
      %p277 = scmp.ne.s32.totalorder %s262, %s276
      %p278 = scmp.eq.s32.totalorder %s23, 0
      %p279 = por %p277, %p278
      %s280 = ssub.s32 %s24, %s36
      %p281 = scmp.eq.s32.totalorder %s280, 0
      %s283 = sadd.s32 %s282, 1
      %s284 = scalar_select %p281, %s282, %s283
      %p287 = pneg %p281
      %p288 = scmp.eq.s32.totalorder %s17, 7
      %p289 = por %p287, %p288
      %p290 = scmp.ne.s32.totalorder %s282, %s285
      %p291 = scmp.eq.s32.totalorder %s17, 0
      %p292 = por %p290, %p291
      %p293 = scmp.ne.s32.totalorder %s282, %s285
      %p294 = scmp.eq.s32.totalorder %s22, 7
      %p295 = por %p293, %p294
      %p296 = scmp.ne.s32.totalorder %s285, %s286
      %p297 = scmp.eq.s32.totalorder %s22, 0
      %p298 = por %p296, %p297
      %p299 = scmp.ne.s32.totalorder %s285, %s286
      %p300 = scmp.eq.s32.totalorder %s23, 7
      %p301 = por %p299, %p300
      %p303 = scmp.ne.s32.totalorder %s286, %s302
      %p304 = scmp.eq.s32.totalorder %s23, 0
      %p305 = por %p303, %p304
      %p306 = scmp.le.s32.totalorder 1, %s17
      %p307 = scmp.lt.s32.totalorder %s17, 9
      %p308 = pnand %p306, %p307
      %p309 = pneg %p308
      // Predicated region
      $region9: #{autoencoder_forward.3} parent=5 // pred_check
        _
      $region10: #{autoencoder_forward.3} parent=5 // pred_check_branch
        %311 = sbr.rel (%p308) target = $region12
      $region11: #{autoencoder_forward.3} parent=5 // pred_region
        %s312 = ssub.s32 %s17, 1
        // Predicated region
        $region13: #{autoencoder_forward.3} parent=11 // pred_check
          %p313 = pneg %p104
        $region14: #{autoencoder_forward.3} parent=11 // pred_check_branch
          %315 = sbr.rel (%p313) target = $region16
        $region15: #{autoencoder_forward.3} parent=11 // pred_region
          _
        $region16: #{autoencoder_forward.3} parent=11 // pred_fallthru
          _
        // Predicated region
        $region17: #{autoencoder_forward.3} parent=11 // pred_check
          %p316 = pneg %p125
        $region18: #{autoencoder_forward.3} parent=11 // pred_check_branch
          %318 = sbr.rel (%p316) target = $region20
        $region19: #{autoencoder_forward.3} parent=11 // pred_region
          _
        $region20: #{autoencoder_forward.3} parent=11 // pred_fallthru
          _
        // Predicated region
        $region21: #{autoencoder_forward.3} parent=11 // pred_check
          %p319 = pneg %p146
        $region22: #{autoencoder_forward.3} parent=11 // pred_check_branch
          %321 = sbr.rel (%p319) target = $region24
        $region23: #{autoencoder_forward.3} parent=11 // pred_region
          _
        $region24: #{autoencoder_forward.3} parent=11 // pred_fallthru
          _
        // Predicated region
        $region25: #{autoencoder_forward.3} parent=11 // pred_check
          %p322 = pneg %p167
        $region26: #{autoencoder_forward.3} parent=11 // pred_check_branch
          %324 = sbr.rel (%p322) target = $region28
        $region27: #{autoencoder_forward.3} parent=11 // pred_region
          _
        $region28: #{autoencoder_forward.3} parent=11 // pred_fallthru
          _
        // Predicated region
        $region29: #{autoencoder_forward.3} parent=11 // pred_check
          %p325 = pneg %p188
        $region30: #{autoencoder_forward.3} parent=11 // pred_check_branch
          %327 = sbr.rel (%p325) target = $region32
        $region31: #{autoencoder_forward.3} parent=11 // pred_region
          _
        $region32: #{autoencoder_forward.3} parent=11 // pred_fallthru
          _
        // Predicated region
        $region33: #{autoencoder_forward.3} parent=11 // pred_check
          %p328 = pneg %p209
        $region34: #{autoencoder_forward.3} parent=11 // pred_check_branch
          %330 = sbr.rel (%p328) target = $region36
        $region35: #{autoencoder_forward.3} parent=11 // pred_region
          _
        $region36: #{autoencoder_forward.3} parent=11 // pred_fallthru
          _
        // Predicated region
        $region37: #{autoencoder_forward.3} parent=11 // pred_check
          %p331 = pneg %p230
        $region38: #{autoencoder_forward.3} parent=11 // pred_check_branch
          %333 = sbr.rel (%p331) target = $region40
        $region39: #{autoencoder_forward.3} parent=11 // pred_region
          _
        $region40: #{autoencoder_forward.3} parent=11 // pred_fallthru
          _
        // Predicated region
        $region41: #{autoencoder_forward.3} parent=11 // pred_check
          %p334 = pneg %p251
        $region42: #{autoencoder_forward.3} parent=11 // pred_check_branch
          %336 = sbr.rel (%p334) target = $region44
        $region43: #{autoencoder_forward.3} parent=11 // pred_region
          _
        $region44: #{autoencoder_forward.3} parent=11 // pred_fallthru
          _
        // Predicated region
        $region45: #{autoencoder_forward.3} parent=11 // pred_check
          %p337 = pneg %p272
        $region46: #{autoencoder_forward.3} parent=11 // pred_check_branch
          %339 = sbr.rel (%p337) target = $region48
        $region47: #{autoencoder_forward.3} parent=11 // pred_region
          _
        $region48: #{autoencoder_forward.3} parent=11 // pred_fallthru
          _
      $region12: #{autoencoder_forward.3} parent=5 // pred_fallthru
        _
      %p340 = scmp.lt.s32.totalorder %s17, 8
      // Predicated region
      $region49: #{autoencoder_forward.3} parent=5 // pred_check
        %p341 = pneg %p340
      $region50: #{autoencoder_forward.3} parent=5 // pred_check_branch
        %343 = sbr.rel (%p341) target = $region52
      $region51: #{autoencoder_forward.3} parent=5 // pred_region
        // Predicated region
        $region53: #{autoencoder_forward.3} parent=51 // pred_check
          %p344 = pneg %p51
        $region54: #{autoencoder_forward.3} parent=51 // pred_check_branch
          %346 = sbr.rel (%p344) target = $region56
        $region55: #{autoencoder_forward.3} parent=51 // pred_region
          %s347 = sand.u32 %s41, 1
          %s348 = sand.u32 %s41, 1
          %s349 = smul.addr %s348, 8
          %s350 = scalar_lea.vmem [#allocation3], %s349
          %s351 = smul.u32 2, %s24
          %s352 = smul.addr %s351, 4
          %s353 = sadd.s32 %s25, %s352
          %s354 = smul.addr %s353, 4
          %s355 = scalar_lea.vmem %s0, %s354
          // Predicated region
          $region57: #{autoencoder_forward.3} parent=55 // pred_check
            _
          $region58: #{autoencoder_forward.3} parent=55 // pred_check_branch
            %357 = sbr.rel (0) target = $region60
          $region59: #{autoencoder_forward.3} parent=55 // pred_region
            // Predicated region
            $region61: #{autoencoder_forward.3} parent=59 // pred_check
              _
            $region62: #{autoencoder_forward.3} parent=59 // pred_check_branch
              %359 = sbr.rel target = $region64
            $region63: #{autoencoder_forward.3} parent=59 // pred_region
              // Predicated region
              $region76: #{autoencoder_forward.3} parent=63 // pred_check
                _
              $region77: #{autoencoder_forward.3} parent=63 // pred_check_branch
                %376 = sbr.rel (0) target = $region79
              $region78: #{autoencoder_forward.3} parent=63 // pred_region
                loop: start=0, step=1, limit=1
                $region80: #{autoencoder_forward.3} parent=78 // loop_pre_header
                  _
                $region81: #{autoencoder_forward.3} parent=78 // loop_header
                  %s378 = sphi 0, %s382
                  %p379 = scmp.ge.s32.totalorder %s378, 1
                  %s383 = sphi %s355, %s355
                  %s384 = sphi %s350, %s350
                $region82: #{autoencoder_forward.3} parent=78 // loop_header_branch
                  %381 = sbr.rel (%p379) target = $region86
                $region83: #{autoencoder_forward.3} parent=78 // loop_body
                  _
                $region84: #{autoencoder_forward.3} parent=78 // loop_footer
                  %s382 = sadd.s32 1, %s378
                $region85: #{autoencoder_forward.3} parent=78 // loop_footer_branch
                  %377 = sbr.rel target = $region81
                $region86: #{autoencoder_forward.3} parent=78 // loop_exit
                  _
                loop: start=0, step=1, limit=1
                $region87: #{autoencoder_forward.3} parent=78 // loop_pre_header
                  _
                $region88: #{autoencoder_forward.3} parent=78 // loop_header
                  %s387 = sphi 0, %s391
                  %p388 = scmp.ge.s32.totalorder %s387, 1
                  %s392 = sphi %s355, %s355
                  %s393 = sphi %s350, %s350
                $region89: #{autoencoder_forward.3} parent=78 // loop_header_branch
                  %390 = sbr.rel (%p388) target = $region93
                $region90: #{autoencoder_forward.3} parent=78 // loop_body
                  %v394 = vld [vmem:[%s392] sm:$0xf]
                  %395 = vst [vmem:[%s393] sm:$0xf] %v394
                  %v396 = vld [vmem:[%s392 + $0x10] sm:$0xf]
                  %397 = vst [vmem:[%s393 + $0x4] sm:$0xf] %v396
                $region91: #{autoencoder_forward.3} parent=78 // loop_footer
                  %s391 = sadd.s32 1, %s387
                $region92: #{autoencoder_forward.3} parent=78 // loop_footer_branch
                  %386 = sbr.rel target = $region88
                $region93: #{autoencoder_forward.3} parent=78 // loop_exit
                  _
              $region79: #{autoencoder_forward.3} parent=63 // pred_fallthru
                _
            $region64: #{autoencoder_forward.3} parent=59 // pred_fallthru
              _
            // Predicated region
            $region65: #{autoencoder_forward.3} parent=59 // pred_check
              _
            $region66: #{autoencoder_forward.3} parent=59 // pred_check_branch
              %361 = sbr.rel (0) target = $region68
            $region67: #{autoencoder_forward.3} parent=59 // pred_region
              loop: start=0, step=1, limit=1
              $region69: #{autoencoder_forward.3} parent=67 // loop_pre_header
                _
              $region70: #{autoencoder_forward.3} parent=67 // loop_header
                %s364 = sphi 0, %s368
                %p365 = scmp.ge.s32.totalorder %s364, 1
                %s369 = sphi %s355, %s355
                %s370 = sphi %s350, %s350
              $region71: #{autoencoder_forward.3} parent=67 // loop_header_branch
                %367 = sbr.rel (%p365) target = $region75
              $region72: #{autoencoder_forward.3} parent=67 // loop_body
                %v371 = vld [vmem:[%s369] sm:$0xf]
                %372 = vst [vmem:[%s370] sm:$0xf] %v371
                %v373 = vld [vmem:[%s369 + $0x10] sm:$0xf]
                %374 = vst [vmem:[%s370 + $0x4] sm:$0xf] %v373
              $region73: #{autoencoder_forward.3} parent=67 // loop_footer
                %s368 = sadd.s32 1, %s364
              $region74: #{autoencoder_forward.3} parent=67 // loop_footer_branch
                %363 = sbr.rel target = $region70
              $region75: #{autoencoder_forward.3} parent=67 // loop_exit
                _
            $region68: #{autoencoder_forward.3} parent=59 // pred_fallthru
              _
          $region60: #{autoencoder_forward.3} parent=55 // pred_fallthru
            _
          %398 = vnop
        $region56: #{autoencoder_forward.3} parent=51 // pred_fallthru
          _
        // Predicated region
        $region94: #{autoencoder_forward.3} parent=51 // pred_check
          %p399 = pneg %p77
        $region95: #{autoencoder_forward.3} parent=51 // pred_check_branch
          %401 = sbr.rel (%p399) target = $region97
        $region96: #{autoencoder_forward.3} parent=51 // pred_region
          %s402 = smul.u32 16, %s25
          %p403 = scmp.lt.s32.totalorder %s402, 63
          %s404 = scalar_select %p403, %s402, 63
          %s405 = smul.addr %s404, 2
          %s406 = smul.addr %s405, 4
          %s407 = scalar_lea.vmem %s1, %s406
          %s408 = smul.u32 16, %s25
        $region97: #{autoencoder_forward.3} parent=51 // pred_fallthru
          _
      $region52: #{autoencoder_forward.3} parent=5 // pred_fallthru
        _
      %p409 = scmp.le.s32.totalorder 1, %s17
      %p410 = scmp.lt.s32.totalorder %s17, 9
      %p411 = pnand %p409, %p410
      %p412 = pneg %p411
      // Predicated region
      $region98: #{autoencoder_forward.3} parent=5 // pred_check
        _
      $region99: #{autoencoder_forward.3} parent=5 // pred_check_branch
        %414 = sbr.rel (%p411) target = $region101
      $region100: #{autoencoder_forward.3} parent=5 // pred_region
        %s415 = ssub.s32 %s17, 1
        %s416 = sand.u32 %s44, 1
        %s417 = sand.u32 %s44, 1
        %s418 = smul.addr %s417, 8
        %s419 = scalar_lea.vmem [#allocation3], %s418
        // Predicated region
        $region102: #{autoencoder_forward.3} parent=100 // pred_check
          %p420 = pneg %p57
        $region103: #{autoencoder_forward.3} parent=100 // pred_check_branch
          %422 = sbr.rel (%p420) target = $region105
        $region104: #{autoencoder_forward.3} parent=100 // pred_region
          _
        $region105: #{autoencoder_forward.3} parent=100 // pred_fallthru
          _
        %s423 = sand.u32 %s44, 1
        %s424 = sand.u32 %s44, 1
        %s425 = smul.addr %s424, 8
        %s426 = scalar_lea.vmem [#allocation3], %s425
        %p427 = pneg %p57
        %p428 = pneg %p54
        %s429 = smul.u32 16, %s27
        %p430 = scmp.lt.s32.totalorder %s429, 63
        %s431 = scalar_select %p430, %s429, 63
        %s432 = smul.addr %s431, 2
        %s433 = smul.addr %s432, 4
        %s434 = scalar_lea.vmem %s1, %s433
        %p435 = pneg %p83
        %p436 = pneg %p80
        %p437 = pneg %p104
        %p438 = pneg %p101
        %p439 = pneg %p125
        %p440 = pneg %p122
        %p441 = pneg %p146
        %p442 = pneg %p143
        %p443 = pneg %p167
        %p444 = pneg %p164
        %p445 = pneg %p188
        %p446 = pneg %p185
        %p447 = pneg %p209
        %p448 = pneg %p206
        %p449 = pneg %p230
        %p450 = pneg %p227
        %p451 = pneg %p251
        %p452 = pneg %p248
        %p453 = pneg %p272
        %p454 = pneg %p269
        %p455 = pneg %p298
        %p456 = pneg %p295
        %s457 = smul.u32 2, %s26
        %p458 = scmp.lt.s32.totalorder %s457, 3
        %s459 = scalar_select %p458, %s457, 3
        %s460 = smul.addr %s459, 8
        %s461 = scalar_lea.vmem %s11, %s460
        %s462 = smul.u32 2, %s26
        %s463 = smul.u32 16, %s27
        %p464 = scmp.lt.s32.totalorder %s463, 63
        %s465 = scalar_select %p464, %s463, 63
        %s466 = smul.addr %s465, 2
        %s467 = smul.addr %s466, 4
        %s468 = scalar_lea.vmem %s1, %s467
        %s469 = smul.u32 16, %s27
        %s470 = smul.u32 2, %s26
        %p471 = scmp.lt.s32.totalorder %s470, 3
        %s472 = scalar_select %p471, %s470, 3
        %s473 = smul.addr %s472, 8
        %s474 = scalar_lea.vmem %s11, %s473
        %s475 = smul.u32 2, %s26
        %p477 = scmp.eq.s32.totalorder %s27, 0
        // Predicated region
        $region106: #{autoencoder_forward.3} parent=100 // pred_check
          %p478 = pneg %p477
        $region107: #{autoencoder_forward.3} parent=100 // pred_check_branch
          %480 = sbr.rel (%p478) target = $region109
        $region108: #{autoencoder_forward.3} parent=100 // pred_region
          %481 = vst [vmem:[#allocation2] sm:$0xff] 0.0
          %482 = vst [vmem:[#allocation2 + $0x8] sm:$0xff] 0.0
          %483 = vst [vmem:[#allocation2 + $0x10] sm:$0xff] 0.0
          %484 = vst [vmem:[#allocation2 + $0x18] sm:$0xff] 0.0
        $region109: #{autoencoder_forward.3} parent=100 // pred_fallthru
          _
        %v485 = vld [vmem:[#allocation2] sm:$0xff]
        %v486 = vld [vmem:[#allocation2 + $0x8] sm:$0xff]
        %v487 = vld [vmem:[#allocation2 + $0x10] sm:$0xff]
        %v488 = vld [vmem:[#allocation2 + $0x18] sm:$0xff]
        %v489 = vld [vmem:[%s419] sm:$0xf]
        %v490 = vld [vmem:[%s419 + $0x4] sm:$0xf]
        %v491 = vld [vmem:[%s468] sm:$0xff]
        %v492 = vld [vmem:[%s468 + $0x8] sm:$0xff]
        %v493 = vld [vmem:[%s468 + $0x10] sm:$0xff]
        %v494 = vld [vmem:[%s468 + $0x18] sm:$0xff]
        %v495 = vld [vmem:[%s468 + $0x20] sm:$0xff]
        %v496 = vld [vmem:[%s468 + $0x28] sm:$0xff]
        %v497 = vld [vmem:[%s468 + $0x30] sm:$0xff]
        %v498 = vld [vmem:[%s468 + $0x38] sm:$0xff]
        %v499 = vld [vmem:[%s468 + $0x40] sm:$0xff]
        %v500 = vld [vmem:[%s468 + $0x48] sm:$0xff]
        %v501 = vld [vmem:[%s468 + $0x50] sm:$0xff]
        %v502 = vld [vmem:[%s468 + $0x58] sm:$0xff]
        %v503 = vld [vmem:[%s468 + $0x60] sm:$0xff]
        %v504 = vld [vmem:[%s468 + $0x68] sm:$0xff]
        %v505 = vld [vmem:[%s468 + $0x70] sm:$0xff]
        %v506 = vld [vmem:[%s468 + $0x78] sm:$0xff]
        %v509 = vunpack.c.l.b16 %v489
        %v510 = vunpack.c.l.b16 %v490
        %v511 = vpack.c.b16 %v510, %v509
        %v529 = vunpack.c.l.b16 %v491
        %v530 = vunpack.c.h.b16 %v491
        %v531 = vunpack.c.l.b16 %v492
        %v532 = vunpack.c.h.b16 %v492
        %v533 = vunpack.c.l.b16 %v493
        %v534 = vunpack.c.h.b16 %v493
        %v535 = vunpack.c.l.b16 %v494
        %v536 = vunpack.c.h.b16 %v494
        %v537 = vunpack.c.l.b16 %v495
        %v538 = vunpack.c.h.b16 %v495
        %v539 = vunpack.c.l.b16 %v496
        %v540 = vunpack.c.h.b16 %v496
        %v541 = vunpack.c.l.b16 %v497
        %v542 = vunpack.c.h.b16 %v497
        %v543 = vunpack.c.l.b16 %v498
        %v544 = vunpack.c.h.b16 %v498
        %v545 = vunpack.c.l.b16 %v499
        %v546 = vunpack.c.h.b16 %v499
        %v547 = vunpack.c.l.b16 %v500
        %v548 = vunpack.c.h.b16 %v500
        %v549 = vunpack.c.l.b16 %v501
        %v550 = vunpack.c.h.b16 %v501
        %v551 = vunpack.c.l.b16 %v502
        %v552 = vunpack.c.h.b16 %v502
        %v553 = vunpack.c.l.b16 %v503
        %v554 = vunpack.c.h.b16 %v503
        %v555 = vunpack.c.l.b16 %v504
        %v556 = vunpack.c.h.b16 %v504
        %v557 = vunpack.c.l.b16 %v505
        %v558 = vunpack.c.h.b16 %v505
        %v559 = vunpack.c.l.b16 %v506
        %v560 = vunpack.c.h.b16 %v506
        %v561 = vpack.c.b16 %v531, %v529
        %v562 = vpack.c.b16 %v532, %v530
        %v563 = vpack.c.b16 %v535, %v533
        %v564 = vpack.c.b16 %v536, %v534
        %v565 = vpack.c.b16 %v539, %v537
        %v566 = vpack.c.b16 %v540, %v538
        %v567 = vpack.c.b16 %v543, %v541
        %v568 = vpack.c.b16 %v544, %v542
        %v569 = vpack.c.b16 %v547, %v545
        %v570 = vpack.c.b16 %v548, %v546
        %v571 = vpack.c.b16 %v551, %v549
        %v572 = vpack.c.b16 %v552, %v550
        %v573 = vpack.c.b16 %v555, %v553
        %v574 = vpack.c.b16 %v556, %v554
        %v575 = vpack.c.b16 %v559, %v557
        %v576 = vpack.c.b16 %v560, %v558
        %593 = vmatprep.subr.bf16.mxu0 %v562
        %594 = vmatpush1.bf16.msra.mxu0 %v561
        %595 = vmatprep.subr.bf16.mxu0 %v564
        %596 = vmatpush1.bf16.msra.mxu0 %v563
        %597 = vmatprep.subr.bf16.mxu0 %v566
        %598 = vmatpush1.bf16.msra.mxu0 %v565
        %599 = vmatprep.subr.bf16.mxu0 %v568
        %600 = vmatpush1.bf16.msra.mxu0 %v567
        %601 = vmatprep.subr.bf16.mxu0 %v570
        %602 = vmatpush1.bf16.msra.mxu0 %v569
        %603 = vmatprep.subr.bf16.mxu0 %v572
        %604 = vmatpush1.bf16.msra.mxu0 %v571
        %605 = vmatprep.subr.bf16.mxu0 %v574
        %606 = vmatpush1.bf16.msra.mxu0 %v573
        %607 = vmatprep.subr.bf16.mxu0 %v576
        %608 = vmatpush1.bf16.msra.mxu0 %v575
        %609 = vmatprep.subr.bf16.mxu0 0
        %610 = vmatpush1.bf16.msra.mxu0 0
        %611 = vmatprep.subr.bf16.mxu0 0
        %612 = vmatpush1.bf16.msra.mxu0 0
        %613 = vmatprep.subr.bf16.mxu0 0
        %614 = vmatpush1.bf16.msra.mxu0 0
        %615 = vmatprep.subr.bf16.mxu0 0
        %616 = vmatpush1.bf16.msra.mxu0 0
        %617 = vmatprep.subr.bf16.mxu0 0
        %618 = vmatpush1.bf16.msra.mxu0 0
        %619 = vmatprep.subr.bf16.mxu0 0
        %620 = vmatpush1.bf16.msra.mxu0 0
        %621 = vmatprep.subr.bf16.mxu0 0
        %622 = vmatpush1.bf16.msra.mxu0 0
        %623 = vmatprep.subr.bf16.mxu0 0
        %624 = vmatpush1.bf16.msra.mxu0 0
        %625 = vmatprep.mubr.bf16.mxu0 0
        %626 = vmatmul.mubr.bf16.gmra.mrb[0].mxu0 %v511
        %v627 = vpop.f32.mrb[0].mxu0
        %v628 = vadd.f32 0.0, %v627
        %v629 = vpop.f32.mrb[0].mxu0
        %v630 = vadd.f32 0.0, %v629
        %v631 = vpop.f32.mrb[0].mxu0
        %v632 = vadd.f32 0.0, %v631
        %v633 = vpop.f32.mrb[0].mxu0
        %v634 = vadd.f32 0.0, %v633
        %635 = vdwg.mxu0
        %v636 = vadd.f32 %v485, %v628
        %v637 = vadd.f32 %v486, %v630
        %v638 = vadd.f32 %v487, %v632
        %v639 = vadd.f32 %v488, %v634
        %640 = vst [vmem:[#allocation2] sm:$0xff] %v636
        %641 = vst [vmem:[#allocation2 + $0x8] sm:$0xff] %v637
        %642 = vst [vmem:[#allocation2 + $0x10] sm:$0xff] %v638
        %643 = vst [vmem:[#allocation2 + $0x18] sm:$0xff] %v639
        %p644 = scmp.eq.s32.totalorder %s27, 3
        // Predicated region
        $region110: #{autoencoder_forward.3} parent=100 // pred_check
          %p645 = pneg %p644
        $region111: #{autoencoder_forward.3} parent=100 // pred_check_branch
          %647 = sbr.rel (%p645) target = $region113
        $region112: #{autoencoder_forward.3} parent=100 // pred_region
          %v648 = vld [vmem:[#allocation2] sm:$0xff]
          %v649 = vld [vmem:[#allocation2 + $0x8] sm:$0xff]
          %v650 = vld [vmem:[#allocation2 + $0x10] sm:$0xff]
          %v651 = vld [vmem:[#allocation2 + $0x18] sm:$0xff]
          %v652 = vld [vmem:[%s2] sm:$0x3]
          %v654 = vlaneseq
          %v655 = vshrl.u32 %v654, 7
          %v656 = vsub.s32 0, %v655
          %v657 = vrot.slane %v652, %v656
          %v658 = vlaneseq
          %v659 = vshrl.u32 %v658, 7
          %v660 = vsub.s32 1, %v659
          %v661 = vrot.slane %v652, %v660
          %v664 = vadd.f32 %v648, %v657
          %v665 = vadd.f32 %v649, %v661
          %v666 = vadd.f32 %v650, %v657
          %v667 = vadd.f32 %v651, %v661
          %v668 = vld [vmem:[%s3] sm:$0x3]
          %v669 = vld [vmem:[%s4] sm:$0x3]
          %v670 = vadd.f32 %v664, %v665
          %671 = vadd.xlane.f32.xlu0 %v670
          %v672 = vpop.xlane.xlu0 %671
          %v673 = vadd.f32 %v666, %v667
          %674 = vadd.xlane.f32.xlu0 %v673
          %v675 = vpop.xlane.xlu0 %674
          %v676 = vrcp.pop 256.0
          %v677 = vmul.f32 %v672, %v676
          %v678 = vmul.f32 %v675, %v676
          %v679 = vsub.f32 %v664, %v677
          %v680 = vsub.f32 %v665, %v677
          %v681 = vsub.f32 %v666, %v678
          %v682 = vsub.f32 %v667, %v678
          %v683 = vmul.f32 %v679, %v679
          %v684 = vmul.f32 %v680, %v680
          %v685 = vmul.f32 %v681, %v681
          %v686 = vmul.f32 %v682, %v682
          %v687 = vadd.f32 %v683, %v684
          %688 = vadd.xlane.f32.xlu0 %v687
          %v689 = vpop.xlane.xlu0 %688
          %v690 = vadd.f32 %v685, %v686
          %691 = vadd.xlane.f32.xlu0 %v690
          %v692 = vpop.xlane.xlu0 %691
          %v693 = vmul.f32 %v689, %v676
          %v694 = vmul.f32 %v692, %v676
          %v695 = vadd.f32 %v693, 1e-05
          %v696 = vadd.f32 %v694, 1e-05
          %v697 = vrsqrt.pop %v695
          %v698 = vrsqrt.pop %v696
          %v699 = vmul.f32 %v679, %v697
          %v700 = vmul.f32 %v680, %v697
          %v701 = vmul.f32 %v681, %v698
          %v702 = vmul.f32 %v682, %v698
          %v704 = vlaneseq
          %v705 = vshrl.u32 %v704, 7
          %v706 = vsub.s32 0, %v705
          %v707 = vrot.slane %v668, %v706
          %v708 = vlaneseq
          %v709 = vshrl.u32 %v708, 7
          %v710 = vsub.s32 1, %v709
          %v711 = vrot.slane %v668, %v710
          %v714 = vmul.f32 %v699, %v707
          %v715 = vmul.f32 %v700, %v711
          %v716 = vmul.f32 %v701, %v707
          %v717 = vmul.f32 %v702, %v711
          %v719 = vlaneseq
          %v720 = vshrl.u32 %v719, 7
          %v721 = vsub.s32 0, %v720
          %v722 = vrot.slane %v669, %v721
          %v723 = vlaneseq
          %v724 = vshrl.u32 %v723, 7
          %v725 = vsub.s32 1, %v724
          %v726 = vrot.slane %v669, %v725
          %v729 = vadd.f32 %v714, %v722
          %v730 = vadd.f32 %v715, %v726
          %v731 = vadd.f32 %v716, %v722
          %v732 = vadd.f32 %v717, %v726
          %v733 = vmin.f32 %v729, 20.0
          %v734 = vmin.f32 %v730, 20.0
          %v735 = vmin.f32 %v731, 20.0
          %v736 = vmin.f32 %v732, 20.0
          %v737 = vmul.f32 %v733, 1.442695
          %v738 = vpow.pop %v737
          %v739 = vmul.f32 %v734, 1.442695
          %v740 = vpow.pop %v739
          %v741 = vmul.f32 %v735, 1.442695
          %v742 = vpow.pop %v741
          %v743 = vmul.f32 %v736, 1.442695
          %v744 = vpow.pop %v743
          %v745 = vadd.f32 %v738, 1.0
          %v746 = vadd.f32 %v740, 1.0
          %v747 = vadd.f32 %v742, 1.0
          %v748 = vadd.f32 %v744, 1.0
          %v749 = vmul.f32 %v745, %v745
          %v750 = vmul.f32 %v746, %v746
          %v751 = vmul.f32 %v747, %v747
          %v752 = vmul.f32 %v748, %v748
          %v753 = vadd.f32 %v749, 1.0
          %v754 = vadd.f32 %v750, 1.0
          %v755 = vadd.f32 %v751, 1.0
          %v756 = vadd.f32 %v752, 1.0
          %v757 = vrcp.pop %v753
          %v758 = vmul.f32 2.0, %v757
          %v759 = vrcp.pop %v754
          %v760 = vmul.f32 2.0, %v759
          %v761 = vrcp.pop %v755
          %v762 = vmul.f32 2.0, %v761
          %v763 = vrcp.pop %v756
          %v764 = vmul.f32 2.0, %v763
          %v765 = vsub.f32 1.0, %v758
          %v766 = vsub.f32 1.0, %v760
          %v767 = vsub.f32 1.0, %v762
          %v768 = vsub.f32 1.0, %v764
          %v769 = vmul.f32 %v729, %v765
          %v770 = vmul.f32 %v730, %v766
          %v771 = vmul.f32 %v731, %v767
          %v772 = vmul.f32 %v732, %v768
          %v773 = vpack.c.bf16 %v771, %v769
          %v774 = vpack.c.bf16 %v772, %v770
          %v775 = vld [vmem:[%s5] sm:$0xf]
          %v776 = vld [vmem:[%s5 + $0x4] sm:$0xf]
          %v777 = vld [vmem:[%s5 + $0x8] sm:$0xf]
          %v778 = vld [vmem:[%s5 + $0xc] sm:$0xf]
          %v779 = vld [vmem:[%s5 + $0x10] sm:$0xf]
          %v780 = vld [vmem:[%s5 + $0x14] sm:$0xf]
          %v781 = vld [vmem:[%s5 + $0x18] sm:$0xf]
          %v782 = vld [vmem:[%s5 + $0x1c] sm:$0xf]
          %v783 = vld [vmem:[%s5 + $0x20] sm:$0xf]
          %v784 = vld [vmem:[%s5 + $0x24] sm:$0xf]
          %v785 = vld [vmem:[%s5 + $0x28] sm:$0xf]
          %v786 = vld [vmem:[%s5 + $0x2c] sm:$0xf]
          %v787 = vld [vmem:[%s5 + $0x30] sm:$0xf]
          %v788 = vld [vmem:[%s5 + $0x34] sm:$0xf]
          %v789 = vld [vmem:[%s5 + $0x38] sm:$0xf]
          %v790 = vld [vmem:[%s5 + $0x3c] sm:$0xf]
          %v791 = vld [vmem:[%s5 + $0x40] sm:$0xf]
          %v792 = vld [vmem:[%s5 + $0x44] sm:$0xf]
          %v793 = vld [vmem:[%s5 + $0x48] sm:$0xf]
          %v794 = vld [vmem:[%s5 + $0x4c] sm:$0xf]
          %v795 = vld [vmem:[%s5 + $0x50] sm:$0xf]
          %v796 = vld [vmem:[%s5 + $0x54] sm:$0xf]
          %v797 = vld [vmem:[%s5 + $0x58] sm:$0xf]
          %v798 = vld [vmem:[%s5 + $0x5c] sm:$0xf]
          %v799 = vld [vmem:[%s5 + $0x60] sm:$0xf]
          %v800 = vld [vmem:[%s5 + $0x64] sm:$0xf]
          %v801 = vld [vmem:[%s5 + $0x68] sm:$0xf]
          %v802 = vld [vmem:[%s5 + $0x6c] sm:$0xf]
          %v803 = vld [vmem:[%s5 + $0x70] sm:$0xf]
          %v804 = vld [vmem:[%s5 + $0x74] sm:$0xf]
          %v805 = vld [vmem:[%s5 + $0x78] sm:$0xf]
          %v806 = vld [vmem:[%s5 + $0x7c] sm:$0xf]
          %v807 = vld [vmem:[%s6] sm:$0x1]
          %v809 = vlaneseq
          %v810 = vshrl.u32 %v809, 7
          %v811 = vsub.s32 0, %v810
          %v812 = vrot.slane %v807, %v811
          %v846 = vunpack.c.l.b16 %v775
          %v847 = vunpack.c.l.b16 %v776
          %v848 = vunpack.c.l.b16 %v777
          %v849 = vunpack.c.l.b16 %v778
          %v850 = vunpack.c.l.b16 %v779
          %v851 = vunpack.c.l.b16 %v780
          %v852 = vunpack.c.l.b16 %v781
          %v853 = vunpack.c.l.b16 %v782
          %v854 = vunpack.c.l.b16 %v783
          %v855 = vunpack.c.l.b16 %v784
          %v856 = vunpack.c.l.b16 %v785
          %v857 = vunpack.c.l.b16 %v786
          %v858 = vunpack.c.l.b16 %v787
          %v859 = vunpack.c.l.b16 %v788
          %v860 = vunpack.c.l.b16 %v789
          %v861 = vunpack.c.l.b16 %v790
          %v862 = vunpack.c.l.b16 %v791
          %v863 = vunpack.c.l.b16 %v792
          %v864 = vunpack.c.l.b16 %v793
          %v865 = vunpack.c.l.b16 %v794
          %v866 = vunpack.c.l.b16 %v795
          %v867 = vunpack.c.l.b16 %v796
          %v868 = vunpack.c.l.b16 %v797
          %v869 = vunpack.c.l.b16 %v798
          %v870 = vunpack.c.l.b16 %v799
          %v871 = vunpack.c.l.b16 %v800
          %v872 = vunpack.c.l.b16 %v801
          %v873 = vunpack.c.l.b16 %v802
          %v874 = vunpack.c.l.b16 %v803
          %v875 = vunpack.c.l.b16 %v804
          %v876 = vunpack.c.l.b16 %v805
          %v877 = vunpack.c.l.b16 %v806
          %v878 = vpack.c.b16 %v847, %v846
          %v879 = vpack.c.b16 %v849, %v848
          %v880 = vpack.c.b16 %v851, %v850
          %v881 = vpack.c.b16 %v853, %v852
          %v882 = vpack.c.b16 %v855, %v854
          %v883 = vpack.c.b16 %v857, %v856
          %v884 = vpack.c.b16 %v859, %v858
          %v885 = vpack.c.b16 %v861, %v860
          %v886 = vpack.c.b16 %v863, %v862
          %v887 = vpack.c.b16 %v865, %v864
          %v888 = vpack.c.b16 %v867, %v866
          %v889 = vpack.c.b16 %v869, %v868
          %v890 = vpack.c.b16 %v871, %v870
          %v891 = vpack.c.b16 %v873, %v872
          %v892 = vpack.c.b16 %v875, %v874
          %v893 = vpack.c.b16 %v877, %v876
          %910 = vmatprep.subr.bf16.mxu0 0
          %911 = vmatpush1.bf16.msra.mxu0 %v878
          %912 = vmatprep.subr.bf16.mxu0 0
          %913 = vmatpush1.bf16.msra.mxu0 %v879
          %914 = vmatprep.subr.bf16.mxu0 0
          %915 = vmatpush1.bf16.msra.mxu0 %v880
          %916 = vmatprep.subr.bf16.mxu0 0
          %917 = vmatpush1.bf16.msra.mxu0 %v881
          %918 = vmatprep.subr.bf16.mxu0 0
          %919 = vmatpush1.bf16.msra.mxu0 %v882
          %920 = vmatprep.subr.bf16.mxu0 0
          %921 = vmatpush1.bf16.msra.mxu0 %v883
          %922 = vmatprep.subr.bf16.mxu0 0
          %923 = vmatpush1.bf16.msra.mxu0 %v884
          %924 = vmatprep.subr.bf16.mxu0 0
          %925 = vmatpush1.bf16.msra.mxu0 %v885
          %926 = vmatprep.subr.bf16.mxu0 0
          %927 = vmatpush1.bf16.msra.mxu0 %v886
          %928 = vmatprep.subr.bf16.mxu0 0
          %929 = vmatpush1.bf16.msra.mxu0 %v887
          %930 = vmatprep.subr.bf16.mxu0 0
          %931 = vmatpush1.bf16.msra.mxu0 %v888
          %932 = vmatprep.subr.bf16.mxu0 0
          %933 = vmatpush1.bf16.msra.mxu0 %v889
          %934 = vmatprep.subr.bf16.mxu0 0
          %935 = vmatpush1.bf16.msra.mxu0 %v890
          %936 = vmatprep.subr.bf16.mxu0 0
          %937 = vmatpush1.bf16.msra.mxu0 %v891
          %938 = vmatprep.subr.bf16.mxu0 0
          %939 = vmatpush1.bf16.msra.mxu0 %v892
          %940 = vmatprep.subr.bf16.mxu0 0
          %941 = vmatpush1.bf16.msra.mxu0 %v893
          %942 = vmatprep.mubr.bf16.mxu0 %v774
          %943 = vmatmul.mubr.bf16.gmra.mrb[0].mxu0 %v773
          %v944 = vpop.f32.mrb[0].mxu0
          %v945 = vadd.f32 %v812, %v944
          %v946 = vpop.f32.mrb[0].mxu0
          %v947 = vpop.f32.mrb[0].mxu0
          %v948 = vadd.f32 %v812, %v947
          %v949 = vpop.f32.mrb[0].mxu0
          %950 = vdwg.mxu0
          %v951 = vld [vmem:[%s7] sm:$0x1]
          %v952 = vld [vmem:[%s8] sm:$0x1]
          %953 = vadd.xlane.f32.xlu0 %v945
          %v954 = vpop.xlane.xlu0 %953
          %955 = vadd.xlane.f32.xlu0 %v948
          %v956 = vpop.xlane.xlu0 %955
          %v957 = vrcp.pop 128.0
          %v958 = vmul.f32 %v954, %v957
          %v959 = vmul.f32 %v956, %v957
          %v960 = vsub.f32 %v945, %v958
          %v961 = vsub.f32 %v948, %v959
          %v962 = vmul.f32 %v960, %v960
          %v963 = vmul.f32 %v961, %v961
          %964 = vadd.xlane.f32.xlu0 %v962
          %v965 = vpop.xlane.xlu0 %964
          %966 = vadd.xlane.f32.xlu0 %v963
          %v967 = vpop.xlane.xlu0 %966
          %v968 = vmul.f32 %v965, %v957
          %v969 = vmul.f32 %v967, %v957
          %v970 = vadd.f32 %v968, 1e-05
          %v971 = vadd.f32 %v969, 1e-05
          %v972 = vrsqrt.pop %v970
          %v973 = vrsqrt.pop %v971
          %v974 = vmul.f32 %v960, %v972
          %v975 = vmul.f32 %v961, %v973
          %v977 = vlaneseq
          %v978 = vshrl.u32 %v977, 7
          %v979 = vsub.s32 0, %v978
          %v980 = vrot.slane %v951, %v979
          %v982 = vmul.f32 %v974, %v980
          %v983 = vmul.f32 %v975, %v980
          %v985 = vlaneseq
          %v986 = vshrl.u32 %v985, 7
          %v987 = vsub.s32 0, %v986
          %v988 = vrot.slane %v952, %v987
          %v990 = vadd.f32 %v982, %v988
          %v991 = vadd.f32 %v983, %v988
          %v992 = vmin.f32 %v990, 20.0
          %v993 = vmin.f32 %v991, 20.0
          %v994 = vmul.f32 %v992, 1.442695
          %v995 = vpow.pop %v994
          %v996 = vmul.f32 %v993, 1.442695
          %v997 = vpow.pop %v996
          %v998 = vadd.f32 %v995, 1.0
          %v999 = vadd.f32 %v997, 1.0
          %v1000 = vmul.f32 %v998, %v998
          %v1001 = vmul.f32 %v999, %v999
          %v1002 = vadd.f32 %v1000, 1.0
          %v1003 = vadd.f32 %v1001, 1.0
          %v1004 = vrcp.pop %v1002
          %v1005 = vmul.f32 2.0, %v1004
          %v1006 = vrcp.pop %v1003
          %v1007 = vmul.f32 2.0, %v1006
          %v1008 = vsub.f32 1.0, %v1005
          %v1009 = vsub.f32 1.0, %v1007
          %v1010 = vmul.f32 %v990, %v1008
          %v1011 = vmul.f32 %v991, %v1009
          %v1012 = vpack.c.bf16 %v1011, %v1010
          %v1013 = vld [vmem:[%s9] sm:$0xf]
          %v1014 = vld [vmem:[%s9 + $0x4] sm:$0xf]
          %v1015 = vld [vmem:[%s9 + $0x8] sm:$0xf]
          %v1016 = vld [vmem:[%s9 + $0xc] sm:$0xf]
          %v1017 = vld [vmem:[%s9 + $0x10] sm:$0xf]
          %v1018 = vld [vmem:[%s9 + $0x14] sm:$0xf]
          %v1019 = vld [vmem:[%s9 + $0x18] sm:$0xf]
          %v1020 = vld [vmem:[%s9 + $0x1c] sm:$0xf]
          %v1021 = vld [vmem:[%s9 + $0x20] sm:$0xf]
          %v1022 = vld [vmem:[%s9 + $0x24] sm:$0xf]
          %v1023 = vld [vmem:[%s9 + $0x28] sm:$0xf]
          %v1024 = vld [vmem:[%s9 + $0x2c] sm:$0xf]
          %v1025 = vld [vmem:[%s9 + $0x30] sm:$0xf]
          %v1026 = vld [vmem:[%s9 + $0x34] sm:$0xf]
          %v1027 = vld [vmem:[%s9 + $0x38] sm:$0xf]
          %v1028 = vld [vmem:[%s9 + $0x3c] sm:$0xf]
          %v1029 = vld [vmem:[%s10] sm:$0x1]
          %v1031 = vlaneseq
          %v1032 = vshrl.u32 %v1031, 7
          %v1033 = vsub.s32 0, %v1032
          %v1034 = vrot.slane %v1029, %v1033
          %v1052 = vunpack.c.l.b16 %v1013
          %v1053 = vunpack.c.l.b16 %v1014
          %v1054 = vunpack.c.l.b16 %v1015
          %v1055 = vunpack.c.l.b16 %v1016
          %v1056 = vunpack.c.l.b16 %v1017
          %v1057 = vunpack.c.l.b16 %v1018
          %v1058 = vunpack.c.l.b16 %v1019
          %v1059 = vunpack.c.l.b16 %v1020
          %v1060 = vunpack.c.l.b16 %v1021
          %v1061 = vunpack.c.l.b16 %v1022
          %v1062 = vunpack.c.l.b16 %v1023
          %v1063 = vunpack.c.l.b16 %v1024
          %v1064 = vunpack.c.l.b16 %v1025
          %v1065 = vunpack.c.l.b16 %v1026
          %v1066 = vunpack.c.l.b16 %v1027
          %v1067 = vunpack.c.l.b16 %v1028
          %v1068 = vpack.c.b16 %v1053, %v1052
          %v1069 = vpack.c.b16 %v1055, %v1054
          %v1070 = vpack.c.b16 %v1057, %v1056
          %v1071 = vpack.c.b16 %v1059, %v1058
          %v1072 = vpack.c.b16 %v1061, %v1060
          %v1073 = vpack.c.b16 %v1063, %v1062
          %v1074 = vpack.c.b16 %v1065, %v1064
          %v1075 = vpack.c.b16 %v1067, %v1066
          %1084 = vmatprep.subr.bf16.mxu0 0
          %1085 = vmatpush1.bf16.msra.mxu0 %v1068
          %1086 = vmatprep.subr.bf16.mxu0 0
          %1087 = vmatpush1.bf16.msra.mxu0 %v1069
          %1088 = vmatprep.subr.bf16.mxu0 0
          %1089 = vmatpush1.bf16.msra.mxu0 %v1070
          %1090 = vmatprep.subr.bf16.mxu0 0
          %1091 = vmatpush1.bf16.msra.mxu0 %v1071
          %1092 = vmatprep.subr.bf16.mxu0 0
          %1093 = vmatpush1.bf16.msra.mxu0 %v1072
          %1094 = vmatprep.subr.bf16.mxu0 0
          %1095 = vmatpush1.bf16.msra.mxu0 %v1073
          %1096 = vmatprep.subr.bf16.mxu0 0
          %1097 = vmatpush1.bf16.msra.mxu0 %v1074
          %1098 = vmatprep.subr.bf16.mxu0 0
          %1099 = vmatpush1.bf16.msra.mxu0 %v1075
          %1100 = vmatprep.subr.bf16.mxu0 0
          %1101 = vmatpush1.bf16.msra.mxu0 0
          %1102 = vmatprep.subr.bf16.mxu0 0
          %1103 = vmatpush1.bf16.msra.mxu0 0
          %1104 = vmatprep.subr.bf16.mxu0 0
          %1105 = vmatpush1.bf16.msra.mxu0 0
          %1106 = vmatprep.subr.bf16.mxu0 0
          %1107 = vmatpush1.bf16.msra.mxu0 0
          %1108 = vmatprep.subr.bf16.mxu0 0
          %1109 = vmatpush1.bf16.msra.mxu0 0
          %1110 = vmatprep.subr.bf16.mxu0 0
          %1111 = vmatpush1.bf16.msra.mxu0 0
          %1112 = vmatprep.subr.bf16.mxu0 0
          %1113 = vmatpush1.bf16.msra.mxu0 0
          %1114 = vmatprep.subr.bf16.mxu0 0
          %1115 = vmatpush1.bf16.msra.mxu0 0
          %1116 = vmatprep.mubr.bf16.mxu0 0
          %1117 = vmatmul.mubr.bf16.gmra.mrb[0].mxu0 %v1012
          %v1118 = vpop.f32.mrb[0].mxu0
          %v1119 = vadd.f32 %v1034, %v1118
          %v1120 = vpop.f32.mrb[0].mxu0
          %v1121 = vpop.f32.mrb[0].mxu0
          %v1122 = vadd.f32 %v1034, %v1121
          %v1123 = vpop.f32.mrb[0].mxu0
          %1124 = vdwg.mxu0
          %1125 = vst [vmem:[%s474] sm:$0xff] %v1119
          %1126 = vst [vmem:[%s474 + $0x8] sm:$0xff] %v1122
        $region113: #{autoencoder_forward.3} parent=100 // pred_fallthru
          _
        %s1127 = smul.u32 2, %s26
        %p1128 = scmp.lt.s32.totalorder %s1127, 3
        %s1129 = scalar_select %p1128, %s1127, 3
        %s1130 = smul.addr %s1129, 8
        %s1131 = scalar_lea.vmem %s11, %s1130
        // Predicated region
        $region114: #{autoencoder_forward.3} parent=100 // pred_check
          %p1132 = pneg %p295
        $region115: #{autoencoder_forward.3} parent=100 // pred_check_branch
          %1134 = sbr.rel (%p1132) target = $region117
        $region116: #{autoencoder_forward.3} parent=100 // pred_region
          %s1135 = smul.u32 2, %s26
        $region117: #{autoencoder_forward.3} parent=100 // pred_fallthru
          _
      $region101: #{autoencoder_forward.3} parent=5 // pred_fallthru
        _
      %p1136 = scmp.le.s32.totalorder 2, %s17
      // Predicated region
      $region118: #{autoencoder_forward.3} parent=5 // pred_check
        %p1137 = pneg %p1136
      $region119: #{autoencoder_forward.3} parent=5 // pred_check_branch
        %1139 = sbr.rel (%p1137) target = $region121
      $region120: #{autoencoder_forward.3} parent=5 // pred_region
        %s1140 = ssub.s32 %s17, 2
        // Predicated region
        $region122: #{autoencoder_forward.3} parent=120 // pred_check
          %p1141 = pneg %p301
        $region123: #{autoencoder_forward.3} parent=120 // pred_check_branch
          %1143 = sbr.rel (%p1141) target = $region125
        $region124: #{autoencoder_forward.3} parent=120 // pred_region
          %s1144 = smul.u32 2, %s28
          %p1145 = scmp.lt.s32.totalorder %s1144, 3
          %s1146 = scalar_select %p1145, %s1144, 3
          %s1147 = smul.addr %s1146, 8
          %s1148 = scalar_lea.vmem %s11, %s1147
        $region125: #{autoencoder_forward.3} parent=120 // pred_fallthru
          _
      $region121: #{autoencoder_forward.3} parent=5 // pred_fallthru
        _
    $region6: #{autoencoder_forward.3} parent=1 // loop_footer
      %s21 = sadd.s32 1, %s17
    $region7: #{autoencoder_forward.3} parent=1 // loop_footer_branch
      %16 = sbr.rel target = $region3
    $region8: #{autoencoder_forward.3} parent=1 // loop_exit
      _

// kernel: autoencoder_forward.4
$region0: #{autoencoder_forward.4}
  #allocation0 [shape = 'u32[]', space=smem, size = 0x4, offset = 0x4, fixed_abs, tag = 'smem constant byte address 0x4 - core index']
  #allocation1 [shape = 'u32[144,128]{1,0:T(1,128)}', space=vmem, size = 0x12000, scoped, tag = 'internal scratch']
  %s0 = inlined_call_operand.vmem [shape: f32[32,128], index: 0, kind: input, shape index: {}]
  %s1 = inlined_call_operand.vmem [shape: bf16[128,512], index: 1, kind: input, shape index: {}]
  %s2 = inlined_call_operand.vmem [shape: f32[1,512], index: 2, kind: input, shape index: {}]
  %s3 = inlined_call_operand.vmem [shape: f32[32,512], index: 3, kind: output, shape index: {}]
  %s4 = sld [smem:[#allocation0]]
  $region45: #{autoencoder_forward.4} parent=0
    _
  %s6 = ssub.s32 1, %s4
  %s7 = scalar_select 0, %s6, %s4
  loop: start=0, step=1, limit=4
  $region2: #{autoencoder_forward.4} parent=0 // loop_pre_header
    _
  $region3: #{autoencoder_forward.4} parent=0 // loop_header
    %s9 = sphi 0, %s13
    %p10 = scmp.ge.s32.totalorder %s9, 4
    %s16 = sphi 0, %s28
    %s17 = sphi 0, %s24
    %s18 = sphi 0, %s16
    %s19 = sphi 0, %s17
    %s20 = sphi 0, %s18
    %s21 = sphi 0, %s19
    %s31 = sphi 0, %s33
    %s34 = sphi 0, %s31
    %s35 = sphi 0, %s34
    %s51 = sphi 0, %s35
    %s57 = sphi 0, %s59
    %s60 = sphi 0, %s57
    %s61 = sphi 0, %s60
    %s77 = sphi 0, %s61
    %s83 = sphi 0, %s85
    %s86 = sphi 0, %s83
    %s87 = sphi 0, %s86
    %s103 = sphi 0, %s87
    %s111 = sphi 0, %s113
    %s114 = sphi 0, %s111
    %s115 = sphi 0, %s114
    %s131 = sphi 0, %s115
  $region4: #{autoencoder_forward.4} parent=0 // loop_header_branch
    %12 = sbr.rel (%p10) target = $region8
  $region5: #{autoencoder_forward.4} parent=0 // loop_body
    %s14 = ssub.s32 %s9, 1
    %s15 = ssub.s32 %s9, 2
    %s22 = sadd.s32 1, %s17
    %p23 = scmp.ge.s32.totalorder %s22, 1
    %s24 = scalar_select %p23, 0, %s22
    %s25 = sadd.s32 1, %s16
    %s26 = scalar_select %p23, %s25, %s16
    %p27 = scmp.ge.s32.totalorder %s26, 2
    %s28 = scalar_select %p27, 0, %s26
    %s29 = ssub.s32 %s16, %s28
    %p30 = scmp.eq.s32.totalorder %s29, 0
    %s32 = sadd.s32 %s31, 1
    %s33 = scalar_select %p30, %s31, %s32
    %p36 = pneg %p30
    %p37 = scmp.eq.s32.totalorder %s9, 1
    %p38 = por %p36, %p37
    %p39 = scmp.ne.s32.totalorder %s31, %s34
    %p40 = scmp.eq.s32.totalorder %s9, 0
    %p41 = por %p39, %p40
    %p42 = scmp.ne.s32.totalorder %s31, %s34
    %p43 = scmp.eq.s32.totalorder %s14, 1
    %p44 = por %p42, %p43
    %p45 = scmp.ne.s32.totalorder %s34, %s35
    %p46 = scmp.eq.s32.totalorder %s14, 0
    %p47 = por %p45, %p46
    %p48 = scmp.ne.s32.totalorder %s34, %s35
    %p49 = scmp.eq.s32.totalorder %s15, 1
    %p50 = por %p48, %p49
    %p52 = scmp.ne.s32.totalorder %s35, %s51
    %p53 = scmp.eq.s32.totalorder %s15, 0
    %p54 = por %p52, %p53
    %s55 = ssub.s32 %s17, %s24
    %p56 = scmp.eq.s32.totalorder %s55, 0
    %s58 = sadd.s32 %s57, 1
    %s59 = scalar_select %p56, %s57, %s58
    %p62 = pneg %p56
    %p63 = scmp.eq.s32.totalorder %s9, 1
    %p64 = por %p62, %p63
    %p65 = scmp.ne.s32.totalorder %s57, %s60
    %p66 = scmp.eq.s32.totalorder %s9, 0
    %p67 = por %p65, %p66
    %p68 = scmp.ne.s32.totalorder %s57, %s60
    %p69 = scmp.eq.s32.totalorder %s14, 1
    %p70 = por %p68, %p69
    %p71 = scmp.ne.s32.totalorder %s60, %s61
    %p72 = scmp.eq.s32.totalorder %s14, 0
    %p73 = por %p71, %p72
    %p74 = scmp.ne.s32.totalorder %s60, %s61
    %p75 = scmp.eq.s32.totalorder %s15, 1
    %p76 = por %p74, %p75
    %p78 = scmp.ne.s32.totalorder %s61, %s77
    %p79 = scmp.eq.s32.totalorder %s15, 0
    %p80 = por %p78, %p79
    %s81 = ssub.s32 %s17, %s24
    %p82 = scmp.eq.s32.totalorder %s81, 0
    %s84 = sadd.s32 %s83, 1
    %s85 = scalar_select %p82, %s83, %s84
    %p88 = pneg %p82
    %p89 = scmp.eq.s32.totalorder %s9, 1
    %p90 = por %p88, %p89
    %p91 = scmp.ne.s32.totalorder %s83, %s86
    %p92 = scmp.eq.s32.totalorder %s9, 0
    %p93 = por %p91, %p92
    %p94 = scmp.ne.s32.totalorder %s83, %s86
    %p95 = scmp.eq.s32.totalorder %s14, 1
    %p96 = por %p94, %p95
    %p97 = scmp.ne.s32.totalorder %s86, %s87
    %p98 = scmp.eq.s32.totalorder %s14, 0
    %p99 = por %p97, %p98
    %p100 = scmp.ne.s32.totalorder %s86, %s87
    %p101 = scmp.eq.s32.totalorder %s15, 1
    %p102 = por %p100, %p101
    %p104 = scmp.ne.s32.totalorder %s87, %s103
    %p105 = scmp.eq.s32.totalorder %s15, 0
    %p106 = por %p104, %p105
    %s107 = ssub.s32 %s16, %s28
    %s108 = ssub.s32 %s17, %s24
    %s109 = sor.u32 %s107, %s108
    %p110 = scmp.eq.s32.totalorder %s109, 0
    %s112 = sadd.s32 %s111, 1
    %s113 = scalar_select %p110, %s111, %s112
    %p116 = pneg %p110
    %p117 = scmp.eq.s32.totalorder %s9, 1
    %p118 = por %p116, %p117
    %p119 = scmp.ne.s32.totalorder %s111, %s114
    %p120 = scmp.eq.s32.totalorder %s9, 0
    %p121 = por %p119, %p120
    %p122 = scmp.ne.s32.totalorder %s111, %s114
    %p123 = scmp.eq.s32.totalorder %s14, 1
    %p124 = por %p122, %p123
    %p125 = scmp.ne.s32.totalorder %s114, %s115
    %p126 = scmp.eq.s32.totalorder %s14, 0
    %p127 = por %p125, %p126
    %p128 = scmp.ne.s32.totalorder %s114, %s115
    %p129 = scmp.eq.s32.totalorder %s15, 1
    %p130 = por %p128, %p129
    %p132 = scmp.ne.s32.totalorder %s115, %s131
    %p133 = scmp.eq.s32.totalorder %s15, 0
    %p134 = por %p132, %p133
    %p135 = scmp.le.s32.totalorder 1, %s9
    %p136 = scmp.lt.s32.totalorder %s9, 3
    %p137 = pnand %p135, %p136
    %p138 = pneg %p137
    // Predicated region
    $region9: #{autoencoder_forward.4} parent=5 // pred_check
      _
    $region10: #{autoencoder_forward.4} parent=5 // pred_check_branch
      %140 = sbr.rel (%p137) target = $region12
    $region11: #{autoencoder_forward.4} parent=5 // pred_region
      %s141 = ssub.s32 %s9, 1
      // Predicated region
      $region13: #{autoencoder_forward.4} parent=11 // pred_check
        %p142 = pneg %p73
      $region14: #{autoencoder_forward.4} parent=11 // pred_check_branch
        %144 = sbr.rel (%p142) target = $region16
      $region15: #{autoencoder_forward.4} parent=11 // pred_region
        %s145 = smul.u32 4, %s19
        %p146 = scmp.lt.s32.totalorder %s145, 3
        %s147 = scalar_select %p146, %s145, 3
        %s148 = smul.addr %s147, 4
        %s149 = scalar_lea.vmem %s1, %s148
        %s150 = smul.u32 4, %s19
      $region16: #{autoencoder_forward.4} parent=11 // pred_fallthru
        _
      // Predicated region
      $region17: #{autoencoder_forward.4} parent=11 // pred_check
        %p151 = pneg %p99
      $region18: #{autoencoder_forward.4} parent=11 // pred_check_branch
        %153 = sbr.rel (%p151) target = $region20
      $region19: #{autoencoder_forward.4} parent=11 // pred_region
        %s154 = smul.u32 4, %s19
        %p155 = scmp.lt.s32.totalorder %s154, 3
        %s156 = scalar_select %p155, %s154, 3
        %s157 = scalar_lea.vmem %s2, %s156
        %s158 = smul.u32 4, %s19
      $region20: #{autoencoder_forward.4} parent=11 // pred_fallthru
        _
    $region12: #{autoencoder_forward.4} parent=5 // pred_fallthru
      _
    %p159 = scmp.lt.s32.totalorder %s9, 2
    // Predicated region
    $region21: #{autoencoder_forward.4} parent=5 // pred_check
      %p160 = pneg %p159
    $region22: #{autoencoder_forward.4} parent=5 // pred_check_branch
      %162 = sbr.rel (%p160) target = $region24
    $region23: #{autoencoder_forward.4} parent=5 // pred_region
      // Predicated region
      $region25: #{autoencoder_forward.4} parent=23 // pred_check
        %p163 = pneg %p41
      $region26: #{autoencoder_forward.4} parent=23 // pred_check_branch
        %165 = sbr.rel (%p163) target = $region28
      $region27: #{autoencoder_forward.4} parent=23 // pred_region
        %s166 = smul.u32 2, %s16
        %p167 = scmp.lt.s32.totalorder %s166, 3
        %s168 = scalar_select %p167, %s166, 3
        %s169 = smul.addr %s168, 8
        %s170 = scalar_lea.vmem %s0, %s169
        %s171 = smul.u32 2, %s16
      $region28: #{autoencoder_forward.4} parent=23 // pred_fallthru
        _
    $region24: #{autoencoder_forward.4} parent=5 // pred_fallthru
      _
    %p172 = scmp.le.s32.totalorder 1, %s9
    %p173 = scmp.lt.s32.totalorder %s9, 3
    %p174 = pnand %p172, %p173
    %p175 = pneg %p174
    // Predicated region
    $region29: #{autoencoder_forward.4} parent=5 // pred_check
      _
    $region30: #{autoencoder_forward.4} parent=5 // pred_check_branch
      %177 = sbr.rel (%p174) target = $region32
    $region31: #{autoencoder_forward.4} parent=5 // pred_region
      %s178 = ssub.s32 %s9, 1
      %s179 = smul.u32 2, %s18
      %p180 = scmp.lt.s32.totalorder %s179, 3
      %s181 = scalar_select %p180, %s179, 3
      %s182 = smul.addr %s181, 8
      %s183 = scalar_lea.vmem %s0, %s182
      %p184 = pneg %p47
      %p185 = pneg %p44
      %s186 = smul.u32 4, %s19
      %p187 = scmp.lt.s32.totalorder %s186, 3
      %s188 = scalar_select %p187, %s186, 3
      %s189 = smul.addr %s188, 4
      %s190 = scalar_lea.vmem %s1, %s189
      %p191 = pneg %p73
      %p192 = pneg %p70
      %s193 = smul.u32 4, %s19
      %p194 = scmp.lt.s32.totalorder %s193, 3
      %s195 = scalar_select %p194, %s193, 3
      %s196 = scalar_lea.vmem %s2, %s195
      %p197 = pneg %p99
      %p198 = pneg %p96
      %p199 = pneg %p127
      %p200 = pneg %p124
      %s201 = smul.u32 2, %s18
      %s202 = smul.u32 4, %s19
      %p203 = scmp.lt.s32.totalorder %s201, 3
      %s204 = scalar_select %p203, %s201, 3
      %p205 = scmp.lt.s32.totalorder %s202, 3
      %s206 = scalar_select %p205, %s202, 3
      %s207 = smul.addr %s204, 4
      %s208 = sadd.s32 %s206, %s207
      %s209 = smul.addr %s208, 8
      %s210 = scalar_lea.vmem %s3, %s209
      %s211 = smul.u32 2, %s18
      %p212 = scmp.lt.s32.totalorder %s211, 3
      %s213 = scalar_select %p212, %s211, 3
      %s214 = smul.addr %s213, 8
      %s215 = scalar_lea.vmem %s0, %s214
      %s216 = smul.u32 2, %s18
      %s217 = smul.u32 4, %s19
      %p218 = scmp.lt.s32.totalorder %s217, 3
      %s219 = scalar_select %p218, %s217, 3
      %s220 = smul.addr %s219, 4
      %s221 = scalar_lea.vmem %s1, %s220
      %s222 = smul.u32 4, %s19
      %s223 = smul.u32 4, %s19
      %p224 = scmp.lt.s32.totalorder %s223, 3
      %s225 = scalar_select %p224, %s223, 3
      %s226 = scalar_lea.vmem %s2, %s225
      %s227 = smul.u32 4, %s19
      %s228 = smul.u32 2, %s18
      %s229 = smul.u32 4, %s19
      %p230 = scmp.lt.s32.totalorder %s228, 3
      %s231 = scalar_select %p230, %s228, 3
      %p232 = scmp.lt.s32.totalorder %s229, 3
      %s233 = scalar_select %p232, %s229, 3
      %s234 = smul.addr %s231, 4
      %s235 = sadd.s32 %s233, %s234
      %s236 = smul.addr %s235, 8
      %s237 = scalar_lea.vmem %s3, %s236
      %s238 = smul.u32 2, %s18
      %s239 = smul.u32 4, %s19
      %v241 = vld [vmem:[%s215] sm:$0xff]
      %v242 = vld [vmem:[%s215 + $0x8] sm:$0xff]
      %v243 = vpack.c.bf16 %v242, %v241
      %v244 = vld [vmem:[%s221] sm:$0xff]
      %v245 = vld [vmem:[%s221 + $0x8] sm:$0xff]
      %v246 = vld [vmem:[%s221 + $0x10] sm:$0xff]
      %v247 = vld [vmem:[%s221 + $0x18] sm:$0xff]
      %v248 = vld [vmem:[%s221 + $0x20] sm:$0xff]
      %v249 = vld [vmem:[%s221 + $0x28] sm:$0xff]
      %v250 = vld [vmem:[%s221 + $0x30] sm:$0xff]
      %v251 = vld [vmem:[%s221 + $0x38] sm:$0xff]
      %v252 = vld [vmem:[%s221 + $0x40] sm:$0xff]
      %v253 = vld [vmem:[%s221 + $0x48] sm:$0xff]
      %v254 = vld [vmem:[%s221 + $0x50] sm:$0xff]
      %v255 = vld [vmem:[%s221 + $0x58] sm:$0xff]
      %v256 = vld [vmem:[%s221 + $0x60] sm:$0xff]
      %v257 = vld [vmem:[%s221 + $0x68] sm:$0xff]
      %v258 = vld [vmem:[%s221 + $0x70] sm:$0xff]
      %v259 = vld [vmem:[%s221 + $0x78] sm:$0xff]
      %v260 = vld [vmem:[%s221 + $0x80] sm:$0xff]
      %v261 = vld [vmem:[%s221 + $0x88] sm:$0xff]
      %v262 = vld [vmem:[%s221 + $0x90] sm:$0xff]
      %v263 = vld [vmem:[%s221 + $0x98] sm:$0xff]
      %v264 = vld [vmem:[%s221 + $0xa0] sm:$0xff]
      %v265 = vld [vmem:[%s221 + $0xa8] sm:$0xff]
      %v266 = vld [vmem:[%s221 + $0xb0] sm:$0xff]
      %v267 = vld [vmem:[%s221 + $0xb8] sm:$0xff]
      %v268 = vld [vmem:[%s221 + $0xc0] sm:$0xff]
      %v269 = vld [vmem:[%s221 + $0xc8] sm:$0xff]
      %v270 = vld [vmem:[%s221 + $0xd0] sm:$0xff]
      %v271 = vld [vmem:[%s221 + $0xd8] sm:$0xff]
      %v272 = vld [vmem:[%s221 + $0xe0] sm:$0xff]
      %v273 = vld [vmem:[%s221 + $0xe8] sm:$0xff]
      %v274 = vld [vmem:[%s221 + $0xf0] sm:$0xff]
      %v275 = vld [vmem:[%s221 + $0xf8] sm:$0xff]
      %v276 = vld [vmem:[%s226] sm:$0xf]
      %v278 = vlaneseq
      %v279 = vshrl.u32 %v278, 7
      %v280 = vsub.s32 0, %v279
      %v281 = vrot.slane %v276, %v280
      %v282 = vlaneseq
      %v283 = vshrl.u32 %v282, 7
      %v284 = vsub.s32 1, %v283
      %v285 = vrot.slane %v276, %v284
      %v286 = vlaneseq
      %v287 = vshrl.u32 %v286, 7
      %v288 = vsub.s32 2, %v287
      %v289 = vrot.slane %v276, %v288
      %v290 = vlaneseq
      %v291 = vshrl.u32 %v290, 7
      %v292 = vsub.s32 3, %v291
      %v293 = vrot.slane %v276, %v292
      %v330 = vunpack.c.l.b16 %v244
      %v331 = vunpack.c.h.b16 %v244
      %v332 = vunpack.c.l.b16 %v245
      %v333 = vunpack.c.h.b16 %v245
      %v334 = vunpack.c.l.b16 %v246
      %v335 = vunpack.c.h.b16 %v246
      %v336 = vunpack.c.l.b16 %v247
      %v337 = vunpack.c.h.b16 %v247
      %v338 = vunpack.c.l.b16 %v248
      %v339 = vunpack.c.h.b16 %v248
      %v340 = vunpack.c.l.b16 %v249
      %v341 = vunpack.c.h.b16 %v249
      %v342 = vunpack.c.l.b16 %v250
      %v343 = vunpack.c.h.b16 %v250
      %v344 = vunpack.c.l.b16 %v251
      %v345 = vunpack.c.h.b16 %v251
      %v346 = vunpack.c.l.b16 %v252
      %v347 = vunpack.c.h.b16 %v252
      %v348 = vunpack.c.l.b16 %v253
      %v349 = vunpack.c.h.b16 %v253
      %v350 = vunpack.c.l.b16 %v254
      %v351 = vunpack.c.h.b16 %v254
      %v352 = vunpack.c.l.b16 %v255
      %v353 = vunpack.c.h.b16 %v255
      %v354 = vunpack.c.l.b16 %v256
      %v355 = vunpack.c.h.b16 %v256
      %v356 = vunpack.c.l.b16 %v257
      %v357 = vunpack.c.h.b16 %v257
      %v358 = vunpack.c.l.b16 %v258
      %v359 = vunpack.c.h.b16 %v258
      %v360 = vunpack.c.l.b16 %v259
      %v361 = vunpack.c.h.b16 %v259
      %v362 = vunpack.c.l.b16 %v260
      %v363 = vunpack.c.h.b16 %v260
      %v364 = vunpack.c.l.b16 %v261
      %v365 = vunpack.c.h.b16 %v261
      %v366 = vunpack.c.l.b16 %v262
      %v367 = vunpack.c.h.b16 %v262
      %v368 = vunpack.c.l.b16 %v263
      %v369 = vunpack.c.h.b16 %v263
      %v370 = vunpack.c.l.b16 %v264
      %v371 = vunpack.c.h.b16 %v264
      %v372 = vunpack.c.l.b16 %v265
      %v373 = vunpack.c.h.b16 %v265
      %v374 = vunpack.c.l.b16 %v266
      %v375 = vunpack.c.h.b16 %v266
      %v376 = vunpack.c.l.b16 %v267
      %v377 = vunpack.c.h.b16 %v267
      %v378 = vunpack.c.l.b16 %v268
      %v379 = vunpack.c.h.b16 %v268
      %v380 = vunpack.c.l.b16 %v269
      %v381 = vunpack.c.h.b16 %v269
      %v382 = vunpack.c.l.b16 %v270
      %v383 = vunpack.c.h.b16 %v270
      %v384 = vunpack.c.l.b16 %v271
      %v385 = vunpack.c.h.b16 %v271
      %v386 = vunpack.c.l.b16 %v272
      %v387 = vunpack.c.h.b16 %v272
      %v388 = vunpack.c.l.b16 %v273
      %v389 = vunpack.c.h.b16 %v273
      %v390 = vunpack.c.l.b16 %v274
      %v391 = vunpack.c.h.b16 %v274
      %v392 = vunpack.c.l.b16 %v275
      %v393 = vunpack.c.h.b16 %v275
      %v394 = vpack.c.b16 %v334, %v330
      %v395 = vpack.c.b16 %v335, %v331
      %v396 = vpack.c.b16 %v336, %v332
      %v397 = vpack.c.b16 %v337, %v333
      %v398 = vpack.c.b16 %v342, %v338
      %v399 = vpack.c.b16 %v343, %v339
      %v400 = vpack.c.b16 %v344, %v340
      %v401 = vpack.c.b16 %v345, %v341
      %v402 = vpack.c.b16 %v350, %v346
      %v403 = vpack.c.b16 %v351, %v347
      %v404 = vpack.c.b16 %v352, %v348
      %v405 = vpack.c.b16 %v353, %v349
      %v406 = vpack.c.b16 %v358, %v354
      %v407 = vpack.c.b16 %v359, %v355
      %v408 = vpack.c.b16 %v360, %v356
      %v409 = vpack.c.b16 %v361, %v357
      %v410 = vpack.c.b16 %v366, %v362
      %v411 = vpack.c.b16 %v367, %v363
      %v412 = vpack.c.b16 %v368, %v364
      %v413 = vpack.c.b16 %v369, %v365
      %v414 = vpack.c.b16 %v374, %v370
      %v415 = vpack.c.b16 %v375, %v371
      %v416 = vpack.c.b16 %v376, %v372
      %v417 = vpack.c.b16 %v377, %v373
      %v418 = vpack.c.b16 %v382, %v378
      %v419 = vpack.c.b16 %v383, %v379
      %v420 = vpack.c.b16 %v384, %v380
      %v421 = vpack.c.b16 %v385, %v381
      %v422 = vpack.c.b16 %v390, %v386
      %v423 = vpack.c.b16 %v391, %v387
      %v424 = vpack.c.b16 %v392, %v388
      %v425 = vpack.c.b16 %v393, %v389
      %458 = vmatprep.subr.bf16.mxu0 %v395
      %459 = vmatpush1.bf16.msra.mxu0 %v394
      %460 = vmatprep.subr.bf16.mxu0 %v399
      %461 = vmatpush1.bf16.msra.mxu0 %v398
      %462 = vmatprep.subr.bf16.mxu0 %v403
      %463 = vmatpush1.bf16.msra.mxu0 %v402
      %464 = vmatprep.subr.bf16.mxu0 %v407
      %465 = vmatpush1.bf16.msra.mxu0 %v406
      %466 = vmatprep.subr.bf16.mxu0 %v411
      %467 = vmatpush1.bf16.msra.mxu0 %v410
      %468 = vmatprep.subr.bf16.mxu0 %v415
      %469 = vmatpush1.bf16.msra.mxu0 %v414
      %470 = vmatprep.subr.bf16.mxu0 %v419
      %471 = vmatpush1.bf16.msra.mxu0 %v418
      %472 = vmatprep.subr.bf16.mxu0 %v423
      %473 = vmatpush1.bf16.msra.mxu0 %v422
      %474 = vmatprep.subr.bf16.mxu0 0
      %475 = vmatpush1.bf16.msra.mxu0 0
      %476 = vmatprep.subr.bf16.mxu0 0
      %477 = vmatpush1.bf16.msra.mxu0 0
      %478 = vmatprep.subr.bf16.mxu0 0
      %479 = vmatpush1.bf16.msra.mxu0 0
      %480 = vmatprep.subr.bf16.mxu0 0
      %481 = vmatpush1.bf16.msra.mxu0 0
      %482 = vmatprep.subr.bf16.mxu0 0
      %483 = vmatpush1.bf16.msra.mxu0 0
      %484 = vmatprep.subr.bf16.mxu0 0
      %485 = vmatpush1.bf16.msra.mxu0 0
      %486 = vmatprep.subr.bf16.mxu0 0
      %487 = vmatpush1.bf16.msra.mxu0 0
      %488 = vmatprep.subr.bf16.mxu0 0
      %489 = vmatpush1.bf16.msra.mxu0 0
      %490 = vmatprep.mubr.bf16.mxu0 0
      %491 = vmatmul.mubr.bf16.gmra.mrb[0].mxu0 %v243
      %v492 = vpop.f32.mrb[0].mxu0
      %v493 = vadd.f32 %v281, %v492
      %v494 = vpop.f32.mrb[0].mxu0
      %v495 = vadd.f32 %v285, %v494
      %v496 = vpop.f32.mrb[0].mxu0
      %v497 = vadd.f32 %v281, %v496
      %v498 = vpop.f32.mrb[0].mxu0
      %v499 = vadd.f32 %v285, %v498
      %500 = vdwg.mxu0
      %501 = vmatprep.subr.bf16.mxu0 %v397
      %502 = vmatpush1.bf16.msra.mxu0 %v396
      %503 = vmatprep.subr.bf16.mxu0 %v401
      %504 = vmatpush1.bf16.msra.mxu0 %v400
      %505 = vmatprep.subr.bf16.mxu0 %v405
      %506 = vmatpush1.bf16.msra.mxu0 %v404
      %507 = vmatprep.subr.bf16.mxu0 %v409
      %508 = vmatpush1.bf16.msra.mxu0 %v408
      %509 = vmatprep.subr.bf16.mxu0 %v413
      %510 = vmatpush1.bf16.msra.mxu0 %v412
      %511 = vmatprep.subr.bf16.mxu0 %v417
      %512 = vmatpush1.bf16.msra.mxu0 %v416
      %513 = vmatprep.subr.bf16.mxu0 %v421
      %514 = vmatpush1.bf16.msra.mxu0 %v420
      %515 = vmatprep.subr.bf16.mxu0 %v425
      %516 = vmatpush1.bf16.msra.mxu0 %v424
      %517 = vmatprep.subr.bf16.mxu0 0
      %518 = vmatpush1.bf16.msra.mxu0 0
      %519 = vmatprep.subr.bf16.mxu0 0
      %520 = vmatpush1.bf16.msra.mxu0 0
      %521 = vmatprep.subr.bf16.mxu0 0
      %522 = vmatpush1.bf16.msra.mxu0 0
      %523 = vmatprep.subr.bf16.mxu0 0
      %524 = vmatpush1.bf16.msra.mxu0 0
      %525 = vmatprep.subr.bf16.mxu0 0
      %526 = vmatpush1.bf16.msra.mxu0 0
      %527 = vmatprep.subr.bf16.mxu0 0
      %528 = vmatpush1.bf16.msra.mxu0 0
      %529 = vmatprep.subr.bf16.mxu0 0
      %530 = vmatpush1.bf16.msra.mxu0 0
      %531 = vmatprep.subr.bf16.mxu0 0
      %532 = vmatpush1.bf16.msra.mxu0 0
      %533 = vmatprep.mubr.bf16.mxu0 0
      %534 = vmatmul.mubr.bf16.gmra.mrb[0].mxu0 %v243
      %v535 = vpop.f32.mrb[0].mxu0
      %v536 = vadd.f32 %v289, %v535
      %v537 = vpop.f32.mrb[0].mxu0
      %v538 = vadd.f32 %v293, %v537
      %v539 = vpop.f32.mrb[0].mxu0
      %v540 = vadd.f32 %v289, %v539
      %v541 = vpop.f32.mrb[0].mxu0
      %v542 = vadd.f32 %v293, %v541
      %543 = vdwg.mxu0
      %544 = vst [vmem:[%s237] sm:$0xff] %v493
      %545 = vst [vmem:[%s237 + $0x8] sm:$0xff] %v495
      %546 = vst [vmem:[%s237 + $0x10] sm:$0xff] %v536
      %547 = vst [vmem:[%s237 + $0x18] sm:$0xff] %v538
      %548 = vst [vmem:[%s237 + $0x20] sm:$0xff] %v497
      %549 = vst [vmem:[%s237 + $0x28] sm:$0xff] %v499
      %550 = vst [vmem:[%s237 + $0x30] sm:$0xff] %v540
      %551 = vst [vmem:[%s237 + $0x38] sm:$0xff] %v542
      %s552 = smul.u32 2, %s18
      %s553 = smul.u32 4, %s19
      %p554 = scmp.lt.s32.totalorder %s552, 3
      %s555 = scalar_select %p554, %s552, 3
      %p556 = scmp.lt.s32.totalorder %s553, 3
      %s557 = scalar_select %p556, %s553, 3
      %s558 = smul.addr %s555, 4
      %s559 = sadd.s32 %s557, %s558
      %s560 = smul.addr %s559, 8
      %s561 = scalar_lea.vmem %s3, %s560
      // Predicated region
      $region33: #{autoencoder_forward.4} parent=31 // pred_check
        %p562 = pneg %p124
      $region34: #{autoencoder_forward.4} parent=31 // pred_check_branch
        %564 = sbr.rel (%p562) target = $region36
      $region35: #{autoencoder_forward.4} parent=31 // pred_region
        %s565 = smul.u32 2, %s18
        %s566 = smul.u32 4, %s19
      $region36: #{autoencoder_forward.4} parent=31 // pred_fallthru
        _
    $region32: #{autoencoder_forward.4} parent=5 // pred_fallthru
      _
    %p567 = scmp.le.s32.totalorder 2, %s9
    // Predicated region
    $region37: #{autoencoder_forward.4} parent=5 // pred_check
      %p568 = pneg %p567
    $region38: #{autoencoder_forward.4} parent=5 // pred_check_branch
      %570 = sbr.rel (%p568) target = $region40
    $region39: #{autoencoder_forward.4} parent=5 // pred_region
      %s571 = ssub.s32 %s9, 2
      // Predicated region
      $region41: #{autoencoder_forward.4} parent=39 // pred_check
        %p572 = pneg %p130
      $region42: #{autoencoder_forward.4} parent=39 // pred_check_branch
        %574 = sbr.rel (%p572) target = $region44
      $region43: #{autoencoder_forward.4} parent=39 // pred_region
        %s575 = smul.u32 2, %s20
        %s576 = smul.u32 4, %s21
        %p577 = scmp.lt.s32.totalorder %s575, 3
        %s578 = scalar_select %p577, %s575, 3
        %p579 = scmp.lt.s32.totalorder %s576, 3
        %s580 = scalar_select %p579, %s576, 3
        %s581 = smul.addr %s578, 4
        %s582 = sadd.s32 %s580, %s581
        %s583 = smul.addr %s582, 8
        %s584 = scalar_lea.vmem %s3, %s583
      $region44: #{autoencoder_forward.4} parent=39 // pred_fallthru
        _
    $region40: #{autoencoder_forward.4} parent=5 // pred_fallthru
      _
  $region6: #{autoencoder_forward.4} parent=0 // loop_footer
    %s13 = sadd.s32 1, %s9
  $region7: #{autoencoder_forward.4} parent=0 // loop_footer_branch
    %8 = sbr.rel target = $region3
  $region8: #{autoencoder_forward.4} parent=0 // loop_exit
    _

</llo_original>
